<compile_context>
chip_gen: v7x
topology: tpu7x:2x2x1
jax: 0.10.0
libtpu: 0.0.40
codegen_flags: <defaults>
</compile_context>

<pallas_src>
import functools

import jax
import jax.numpy as jnp
from jax import lax
from jax.experimental import pallas as pl
from jax.experimental.pallas import tpu as pltpu


def _layernorm(v, w, b, eps=1e-5):
    mu = jnp.mean(v, axis=-1, keepdims=True)
    var = jnp.mean((v - mu) ** 2, axis=-1, keepdims=True)
    return (v - mu) * lax.rsqrt(var + eps) * w + b


def _gelu_exact(x):
    # PyTorch nn.GELU() default: exact erf-based GELU (kept for parity).
    return 0.5 * x * (1.0 + lax.erf(x * 0.7071067811865476))


def _pick_seq_tile(S, target=256):
    """Largest tile <= target that divides S and is a multiple of 8, else S."""
    if S <= target:
        return S
    for ts in range(min(target, S) - (min(target, S) % 8), 7, -8):
        if ts > 0 and S % ts == 0:
            return ts
    return S


def _encoder_block_kernel(
    # inputs
    x_ref,                                   # (S, E)  full sequence, one batch
    ln1w_ref, ln1b_ref,
    wq_ref, bq_ref, wk_ref, bk_ref, wv_ref, bv_ref,
    wo_ref, bo_ref,
    ln2w_ref, ln2b_ref,
    w1_ref, b1_ref, w2_ref, b2_ref,
    # output
    o_ref,                                   # (TS, E) query-tile output
    # scratch (persist across the sq axis -- it is marked "arbitrary")
    q_cache, k_cache, v_cache,               # (S, E)  compute-dtype caches
    ctx_ref,                                 # (TS, E) compute-dtype context slab
    *, TS, S, E, H, cdt,
):
    Dh = E // H
    sq = pl.program_id(1)
    q_start = pl.multiple_of(sq * TS, TS)

    # ---------- full-sequence LN1 + Q/K/V projection, once per batch ----------
    @pl.when(sq == 0)
    def _project():
        y = _layernorm(x_ref[...].astype(jnp.float32), ln1w_ref[...], ln1b_ref[...])
        y_c = y.astype(cdt)
        # Weights are pre-transposed (E, E); softmax scale folded into wq/bq.
        q_cache[...] = (jnp.dot(y_c, wq_ref[...], preferred_element_type=jnp.float32)
                        + bq_ref[...]).astype(cdt)
        k_cache[...] = (jnp.dot(y_c, wk_ref[...], preferred_element_type=jnp.float32)
                        + bk_ref[...]).astype(cdt)
        v_cache[...] = (jnp.dot(y_c, wv_ref[...], preferred_element_type=jnp.float32)
                        + bv_ref[...]).astype(cdt)

    # ---------- multi-head self-attention for this query tile ----------
    q = q_cache[pl.ds(q_start, TS), :]                           # (TS, E) cdt

    # Per-head attention; each head's context goes straight into the VMEM slab.
    for h in range(H):  # TODO(synk): fori_loop / head packing for large H, Dh<128
        sl = slice(h * Dh, (h + 1) * Dh)
        qh = q[:, sl]                                            # (TS, Dh) cdt
        kh = k_cache[:, sl]                                      # (S, Dh)  cdt
        vh = v_cache[:, sl]                                      # (S, Dh)  cdt
        # scores = qh @ kh^T without an explicit in-kernel transpose
        s = lax.dot_general(qh, kh, (((1,), (1,)), ((), ())),
                            preferred_element_type=jnp.float32)  # (TS, S) f32
        s = s - jnp.max(s, axis=-1, keepdims=True)
        p = jnp.exp(s)
        p = p * pl.reciprocal(jnp.sum(p, axis=-1, keepdims=True), approx=True)
        ctx_ref[:, sl] = jnp.dot(p.astype(cdt), vh,
                                 preferred_element_type=jnp.float32).astype(cdt)

    attn_out = jnp.dot(ctx_ref[...], wo_ref[...],
                       preferred_element_type=jnp.float32) + bo_ref[...]
    x_tile = x_ref[pl.ds(q_start, TS), :].astype(jnp.float32)    # (TS, E) f32
    x1 = x_tile + attn_out                                       # residual 1

    # ---------- pre-LN 2 + MLP ----------
    y2 = _layernorm(x1, ln2w_ref[...], ln2b_ref[...])            # f32
    hdn = jnp.dot(y2.astype(cdt), w1_ref[...],
                  preferred_element_type=jnp.float32) + b1_ref[...]   # (TS, 4E)
    hdn = _gelu_exact(hdn)                                       # f32 elementwise
    mlp_out = jnp.dot(hdn.astype(cdt), w2_ref[...],
                      preferred_element_type=jnp.float32) + b2_ref[...]

    o_ref[...] = (x1 + mlp_out).astype(o_ref.dtype)


def encoder_block_pallas(x, params, num_heads, *,
                         compute_dtype=jnp.bfloat16, seq_tile=256,
                         single_buffer_consts=True):
    B, S, E = x.shape
    H = num_heads
    assert E % H == 0, "embed_size must be divisible by num_heads"
    Dh = E // H
    scale = 1.0 / (Dh ** 0.5)
    cdt = compute_dtype

    TS = _pick_seq_tile(S, seq_tile)
    n_sq = S // TS

    # ---- one-time (wrapper/XLA side) weight repacking: split QKV, fold the
    # softmax scale into the Q projection, pre-transpose so the kernel does
    # y @ W_T directly (no in-kernel relayout), cast matmul weights to cdt.
    wqkv, bqkv = params["wqkv"], params["bqkv"]
    wq_t = (wqkv[0 * E:1 * E] * scale).T.astype(cdt)    # (E, E)
    wk_t = wqkv[1 * E:2 * E].T.astype(cdt)              # (E, E)
    wv_t = wqkv[2 * E:3 * E].T.astype(cdt)              # (E, E)
    bq = (bqkv[:, 0 * E:1 * E] * scale).astype(jnp.float32)
    bk = bqkv[:, 1 * E:2 * E].astype(jnp.float32)
    bv = bqkv[:, 2 * E:3 * E].astype(jnp.float32)
    wo_t = params["wo"].T.astype(cdt)                   # (E, E)
    w1_t = params["w1"].T.astype(cdt)                   # (E, 4E)
    w2_t = params["w2"].T.astype(cdt)                   # (4E, E)

    weights = [
        params["ln1_w"].astype(jnp.float32), params["ln1_b"].astype(jnp.float32),
        wq_t, bq, wk_t, bk, wv_t, bv,
        wo_t, params["bo"].astype(jnp.float32),
        params["ln2_w"].astype(jnp.float32), params["ln2_b"].astype(jnp.float32),
        w1_t, params["b1"].astype(jnp.float32),
        w2_t, params["b2"].astype(jnp.float32),
    ]

    def const_spec(arr):
        nd = arr.ndim
        idx = lambda b, sq, _nd=nd: (0,) * _nd
        if single_buffer_consts:
            # Block index never changes -> single buffer, halves resident VMEM.
            return pl.BlockSpec(arr.shape, idx, pipeline_mode=pl.Buffered(1))
        return pl.BlockSpec(arr.shape, idx)

    # x: full (S, E) slab per batch element; its block index changes only with
    # b, so Pallas re-DMAs it once per batch, and single-buffering it halves
    # its VMEM residency.
    if single_buffer_consts:
        x_spec = pl.BlockSpec((None, S, E), lambda b, sq: (b, 0, 0),
                              pipeline_mode=pl.Buffered(1))
    else:
        x_spec = pl.BlockSpec((None, S, E), lambda b, sq: (b, 0, 0))

    kern = functools.partial(_encoder_block_kernel,
                             TS=TS, S=S, E=E, H=H, cdt=cdt)

    # ---- generation-aware VMEM budget.
    cdt_size = jnp.dtype(cdt).itemsize
    x_size = x.dtype.itemsize
    weight_bytes = sum(int(w.size) * w.dtype.itemsize for w in weights)
    buf_mult = 1 if single_buffer_consts else 2
    x_bytes = S * E * x_size
    out_bytes = 2 * TS * E * x_size                         # double-buffered out
    scratch_bytes = (3 * S * E + TS * E) * cdt_size          # q/k/v caches + ctx
    transient_bytes = 4 * (4 * S * E          # y_full + q/k/v f32 at projection
                           + 2 * TS * S       # score + softmax slab (margin x2)
                           + 2 * TS * 4 * E   # MLP hidden pre/post GELU
                           + 4 * TS * E)      # attn_out / x1 / y2 / mlp_out
    est = buf_mult * (weight_bytes + x_bytes) + out_bytes + scratch_bytes + transient_bytes
    try:
        vmem_cap = int(getattr(pltpu.get_tpu_info(), "vmem_capacity_bytes",
                               128 * 1024 * 1024))
    except Exception:
        vmem_cap = 128 * 1024 * 1024          # v5e/v6e default; v7x reports 64 MiB
    vmem_limit = int(min(max(est, 16 * 1024 * 1024),
                         vmem_cap - 12 * 1024 * 1024))       # leave Mosaic headroom

    grid_spec = pltpu.PrefetchScalarGridSpec(
        num_scalar_prefetch=0,
        grid=(B, n_sq),
        in_specs=[x_spec] + [const_spec(w) for w in weights],
        out_specs=pl.BlockSpec((None, TS, E), lambda b, sq: (b, sq, 0)),
        scratch_shapes=[
            pltpu.VMEM((S, E), cdt),    # q_cache
            pltpu.VMEM((S, E), cdt),    # k_cache
            pltpu.VMEM((S, E), cdt),    # v_cache
            pltpu.VMEM((TS, E), cdt),   # ctx slab
        ],
    )

    return pl.pallas_call(
        kern,
        out_shape=jax.ShapeDtypeStruct((B, S, E), x.dtype),
        grid_spec=grid_spec,
        compiler_params=pltpu.CompilerParams(
            # batch: parallel (megacore / v7x split); sq: arbitrary so the
            # per-batch Q/K/V caches legally persist across query tiles.
            dimension_semantics=("parallel", "arbitrary"),
            vmem_limit_bytes=vmem_limit,
        ),
    )(x, *weights)


def encoder_block_reference(x, params, num_heads):
    """Pure-JAX reference mirroring PyTorch EncoderBlock.forward (eval mode)."""
    B, S, E = x.shape
    H = num_heads
    Dh = E // H
    scale = 1.0 / (Dh ** 0.5)

    def ln(v, w, b):
        mu = jnp.mean(v, axis=-1, keepdims=True)
        var = jnp.mean((v - mu) ** 2, axis=-1, keepdims=True)
        return (v - mu) / jnp.sqrt(var + 1e-5) * w + b

    y = ln(x, params["ln1_w"], params["ln1_b"])
    qkv = y @ params["wqkv"].T + params["bqkv"]                 # (B, S, 3E)
    q, k, v = jnp.split(qkv, 3, axis=-1)
    q = q.reshape(B, S, H, Dh).transpose(0, 2, 1, 3)
    k = k.reshape(B, S, H, Dh).transpose(0, 2, 1, 3)
    v = v.reshape(B, S, H, Dh).transpose(0, 2, 1, 3)
    s = jnp.einsum("bhqd,bhkd->bhqk", q, k) * scale
    p = jax.nn.softmax(s, axis=-1)
    ctx = jnp.einsum("bhqk,bhkd->bhqd", p, v).transpose(0, 2, 1, 3).reshape(B, S, E)
    attn_out = ctx @ params["wo"].T + params["bo"]
    x1 = x + attn_out

    y2 = ln(x1, params["ln2_w"], params["ln2_b"])
    h = y2 @ params["w1"].T + params["b1"]
    h = 0.5 * h * (1.0 + lax.erf(h / jnp.sqrt(2.0)))
    mlp_out = h @ params["w2"].T + params["b2"]
    return x1 + mlp_out


def make_params(key, E):
    ks = jax.random.split(key, 8)
    return {
        "ln1_w": jnp.ones((1, E), jnp.float32) + 0.01 * jax.random.normal(ks[0], (1, E)),
        "ln1_b": 0.01 * jax.random.normal(ks[1], (1, E), jnp.float32),
        "wqkv": 0.02 * jax.random.normal(ks[2], (3 * E, E), jnp.float32),
        "bqkv": jnp.zeros((1, 3 * E), jnp.float32),
        "wo": 0.02 * jax.random.normal(ks[3], (E, E), jnp.float32),
        "bo": jnp.zeros((1, E), jnp.float32),
        "ln2_w": jnp.ones((1, E), jnp.float32) + 0.01 * jax.random.normal(ks[4], (1, E)),
        "ln2_b": 0.01 * jax.random.normal(ks[5], (1, E), jnp.float32),
        "w1": 0.02 * jax.random.normal(ks[6], (4 * E, E), jnp.float32),
        "b1": jnp.zeros((1, 4 * E), jnp.float32),
        "w2": 0.02 * jax.random.normal(ks[7], (E, 4 * E), jnp.float32),
        "b2": jnp.zeros((1, E), jnp.float32),
    }


if __name__ == "__main__":
    B, S, E, H = 2, 16, 32, 4
    key = jax.random.PRNGKey(0)
    kx, kp = jax.random.split(key)
    x = jax.random.normal(kx, (B, S, E), jnp.float32)
    params = make_params(kp, E)

    ref = encoder_block_reference(x, params, num_heads=H)

    def run(cdt, **kw):
        try:
            return jax.block_until_ready(
                encoder_block_pallas(x, params, num_heads=H, compute_dtype=cdt, **kw))
        except Exception:
            # Fallback if this jax/Mosaic build rejects pipeline_mode=pl.Buffered(1):
            return jax.block_until_ready(
                encoder_block_pallas(x, params, num_heads=H, compute_dtype=cdt,
                                     single_buffer_consts=False, **kw))

    # f32 MXU operands, forced multi-tile path (TS=8 -> 2 query tiles) to
    # exercise the persistent Q/K/V cache across sq steps: tight check.
    out_f32 = run(jnp.float32, seq_tile=8)
    assert out_f32.shape == (B, S, E)
    assert jnp.allclose(out_f32, ref, atol=1e-3, rtol=1e-3), \
        f"f32 max abs err {jnp.max(jnp.abs(out_f32 - ref))}"

    # bf16 matmul operands / f32 accumulation (default fast path): loose check.
    out_bf16 = run(jnp.bfloat16)
    assert jnp.allclose(out_bf16, ref, atol=5e-2, rtol=5e-2), \
        f"bf16 max abs err {jnp.max(jnp.abs(out_bf16 - ref))}"

    print("KERNEL_OK")
</pallas_src>

<mosaic_0001>
module attributes {stable_mosaic.version = 11 : i64} {
  func.func @_encoder_block_kernel(%arg0: i32, %arg1: i32, %arg2: memref<1x16x32xf32, #tpu.memory_space<vmem>>, %arg3: memref<1x32xf32, #tpu.memory_space<vmem>>, %arg4: memref<1x32xf32, #tpu.memory_space<vmem>>, %arg5: memref<32x32xf32, #tpu.memory_space<vmem>>, %arg6: memref<1x32xf32, #tpu.memory_space<vmem>>, %arg7: memref<32x32xf32, #tpu.memory_space<vmem>>, %arg8: memref<1x32xf32, #tpu.memory_space<vmem>>, %arg9: memref<32x32xf32, #tpu.memory_space<vmem>>, %arg10: memref<1x32xf32, #tpu.memory_space<vmem>>, %arg11: memref<32x32xf32, #tpu.memory_space<vmem>>, %arg12: memref<1x32xf32, #tpu.memory_space<vmem>>, %arg13: memref<1x32xf32, #tpu.memory_space<vmem>>, %arg14: memref<1x32xf32, #tpu.memory_space<vmem>>, %arg15: memref<32x128xf32, #tpu.memory_space<vmem>>, %arg16: memref<1x128xf32, #tpu.memory_space<vmem>>, %arg17: memref<128x32xf32, #tpu.memory_space<vmem>>, %arg18: memref<1x32xf32, #tpu.memory_space<vmem>>, %arg19: memref<1x8x32xf32, #tpu.memory_space<vmem>>, %arg20: memref<16x32xf32, #tpu.memory_space<vmem>>, %arg21: memref<16x32xf32, #tpu.memory_space<vmem>>, %arg22: memref<16x32xf32, #tpu.memory_space<vmem>>, %arg23: memref<8x32xf32, #tpu.memory_space<vmem>>) attributes {dimension_semantics = [#tpu.dimension_semantics<parallel>, #tpu.dimension_semantics<arbitrary>], iteration_bounds = array<i64: 2, 2>, scalar_prefetch = 0 : i64, scratch_operands = 4 : i64, tpu.core_type = #tpu.core_type<tc>, window_params = [{pipeline_mode = #tpu.pipeline_mode<synchronous>, transform_indices = @transform_0, window_bounds = array<i64: 1, 16, 32>}, {pipeline_mode = #tpu.pipeline_mode<synchronous>, transform_indices = @transform_1, window_bounds = array<i64: 1, 32>}, {pipeline_mode = #tpu.pipeline_mode<synchronous>, transform_indices = @transform_2, window_bounds = array<i64: 1, 32>}, {pipeline_mode = #tpu.pipeline_mode<synchronous>, transform_indices = @transform_3, window_bounds = array<i64: 32, 32>}, {pipeline_mode = #tpu.pipeline_mode<synchronous>, transform_indices = @transform_4, window_bounds = array<i64: 1, 32>}, {pipeline_mode = #tpu.pipeline_mode<synchronous>, transform_indices = @transform_5, window_bounds = array<i64: 32, 32>}, {pipeline_mode = #tpu.pipeline_mode<synchronous>, transform_indices = @transform_6, window_bounds = array<i64: 1, 32>}, {pipeline_mode = #tpu.pipeline_mode<synchronous>, transform_indices = @transform_7, window_bounds = array<i64: 32, 32>}, {pipeline_mode = #tpu.pipeline_mode<synchronous>, transform_indices = @transform_8, window_bounds = array<i64: 1, 32>}, {pipeline_mode = #tpu.pipeline_mode<synchronous>, transform_indices = @transform_9, window_bounds = array<i64: 32, 32>}, {pipeline_mode = #tpu.pipeline_mode<synchronous>, transform_indices = @transform_10, window_bounds = array<i64: 1, 32>}, {pipeline_mode = #tpu.pipeline_mode<synchronous>, transform_indices = @transform_11, window_bounds = array<i64: 1, 32>}, {pipeline_mode = #tpu.pipeline_mode<synchronous>, transform_indices = @transform_12, window_bounds = array<i64: 1, 32>}, {pipeline_mode = #tpu.pipeline_mode<synchronous>, transform_indices = @transform_13, window_bounds = array<i64: 32, 128>}, {pipeline_mode = #tpu.pipeline_mode<synchronous>, transform_indices = @transform_14, window_bounds = array<i64: 1, 128>}, {pipeline_mode = #tpu.pipeline_mode<synchronous>, transform_indices = @transform_15, window_bounds = array<i64: 128, 32>}, {pipeline_mode = #tpu.pipeline_mode<synchronous>, transform_indices = @transform_16, window_bounds = array<i64: 1, 32>}, {transform_indices = @transform_17, window_bounds = array<i64: 1, 8, 32>}]} {
    %c8_i32 = arith.constant 8 : i32
    %0 = arith.muli %arg1, %c8_i32 : i32
    %1 = tpu.assume_multiple %0, 8 : i32
    %c0_i32 = arith.constant 0 : i32
    %2 = arith.cmpi eq, %arg1, %c0_i32 : i32
    %3 = arith.extui %2 : i1 to i32
    %c0_i32_0 = arith.constant 0 : i32
    %4 = arith.cmpi ne, %3, %c0_i32_0 : i32
    scf.if %4 {
      %c0_71 = arith.constant 0 : index
      %c0_72 = arith.constant 0 : index
      %c0_73 = arith.constant 0 : index
      %127 = vector.load %arg2[%c0_71, %c0_72, %c0_73] : memref<1x16x32xf32, #tpu.memory_space<vmem>>, vector<1x16x32xf32>
      %128 = vector.shape_cast %127 : vector<1x16x32xf32> to vector<16x32xf32>
      %c0_74 = arith.constant 0 : index
      %c0_75 = arith.constant 0 : index
      %129 = vector.load %arg3[%c0_74, %c0_75] : memref<1x32xf32, #tpu.memory_space<vmem>>, vector<1x32xf32>
      %c0_76 = arith.constant 0 : index
      %c0_77 = arith.constant 0 : index
      %130 = vector.load %arg4[%c0_76, %c0_77] : memref<1x32xf32, #tpu.memory_space<vmem>>, vector<1x32xf32>
      %cst_78 = arith.constant dense<0.000000e+00> : vector<16xf32>
      %131 = vector.multi_reduction <add>, %128, %cst_78 [1] : vector<16x32xf32> to vector<16xf32>
      %132 = vector.shape_cast %131 : vector<16xf32> to vector<16x1xf32>
      %cst_79 = arith.constant 3.200000e+01 : f32
      %133 = vector.broadcast %cst_79 : f32 to vector<16x1xf32>
      %134 = arith.divf %132, %133 : vector<16x1xf32>
      %135 = vector.broadcast %134 : vector<16x1xf32> to vector<16x32xf32>
      %136 = arith.subf %128, %135 : vector<16x32xf32>
      %137 = arith.mulf %136, %136 : vector<16x32xf32>
      %cst_80 = arith.constant dense<0.000000e+00> : vector<16xf32>
      %138 = vector.multi_reduction <add>, %137, %cst_80 [1] : vector<16x32xf32> to vector<16xf32>
      %139 = vector.shape_cast %138 : vector<16xf32> to vector<16x1xf32>
      %cst_81 = arith.constant 3.200000e+01 : f32
      %140 = vector.broadcast %cst_81 : f32 to vector<16x1xf32>
      %141 = arith.divf %139, %140 : vector<16x1xf32>
      %142 = vector.broadcast %134 : vector<16x1xf32> to vector<16x32xf32>
      %143 = arith.subf %128, %142 : vector<16x32xf32>
      %cst_82 = arith.constant 9.99999974E-6 : f32
      %144 = vector.broadcast %cst_82 : f32 to vector<16x1xf32>
      %145 = arith.addf %141, %144 : vector<16x1xf32>
      %146 = math.rsqrt %145 : vector<16x1xf32>
      %147 = vector.broadcast %146 : vector<16x1xf32> to vector<16x32xf32>
      %148 = arith.mulf %143, %147 : vector<16x32xf32>
      %149 = vector.broadcast %129 : vector<1x32xf32> to vector<16x32xf32>
      %150 = arith.mulf %148, %149 : vector<16x32xf32>
      %151 = vector.broadcast %130 : vector<1x32xf32> to vector<16x32xf32>
      %152 = arith.addf %150, %151 : vector<16x32xf32>
      %c0_83 = arith.constant 0 : index
      %c0_84 = arith.constant 0 : index
      %153 = vector.load %arg5[%c0_83, %c0_84] : memref<32x32xf32, #tpu.memory_space<vmem>>, vector<32x32xf32>
      %cst_85 = arith.constant dense<0.000000e+00> : vector<16x32xf32>
      %154 = tpu.matmul %152, %153, %cst_85 {dimension_numbers = #tpu.dot_dimension_numbers<[1], [0], [0], [1], [0, 0, 1, 1], [], []>} : vector<16x32xf32>, vector<32x32xf32>, vector<16x32xf32> -> vector<16x32xf32>
      %c0_86 = arith.constant 0 : index
      %c0_87 = arith.constant 0 : index
      %155 = vector.load %arg6[%c0_86, %c0_87] : memref<1x32xf32, #tpu.memory_space<vmem>>, vector<1x32xf32>
      %156 = vector.broadcast %155 : vector<1x32xf32> to vector<16x32xf32>
      %157 = arith.addf %154, %156 : vector<16x32xf32>
      %c0_88 = arith.constant 0 : index
      %c0_89 = arith.constant 0 : index
      %158 = vector.load %arg20[%c0_88, %c0_89] : memref<16x32xf32, #tpu.memory_space<vmem>>, vector<16x32xf32>
      tpu.vector_store %arg20[%c0_88, %c0_89], %157 {strides = array<i32>} : memref<16x32xf32, #tpu.memory_space<vmem>>, vector<16x32xf32>,
      %c0_90 = arith.constant 0 : index
      %c0_91 = arith.constant 0 : index
      %159 = vector.load %arg7[%c0_90, %c0_91] : memref<32x32xf32, #tpu.memory_space<vmem>>, vector<32x32xf32>
      %cst_92 = arith.constant dense<0.000000e+00> : vector<16x32xf32>
      %160 = tpu.matmul %152, %159, %cst_92 {dimension_numbers = #tpu.dot_dimension_numbers<[1], [0], [0], [1], [0, 0, 1, 1], [], []>} : vector<16x32xf32>, vector<32x32xf32>, vector<16x32xf32> -> vector<16x32xf32>
      %c0_93 = arith.constant 0 : index
      %c0_94 = arith.constant 0 : index
      %161 = vector.load %arg8[%c0_93, %c0_94] : memref<1x32xf32, #tpu.memory_space<vmem>>, vector<1x32xf32>
      %162 = vector.broadcast %161 : vector<1x32xf32> to vector<16x32xf32>
      %163 = arith.addf %160, %162 : vector<16x32xf32>
      %c0_95 = arith.constant 0 : index
      %c0_96 = arith.constant 0 : index
      %164 = vector.load %arg21[%c0_95, %c0_96] : memref<16x32xf32, #tpu.memory_space<vmem>>, vector<16x32xf32>
      tpu.vector_store %arg21[%c0_95, %c0_96], %163 {strides = array<i32>} : memref<16x32xf32, #tpu.memory_space<vmem>>, vector<16x32xf32>,
      %c0_97 = arith.constant 0 : index
      %c0_98 = arith.constant 0 : index
      %165 = vector.load %arg9[%c0_97, %c0_98] : memref<32x32xf32, #tpu.memory_space<vmem>>, vector<32x32xf32>
      %cst_99 = arith.constant dense<0.000000e+00> : vector<16x32xf32>
      %166 = tpu.matmul %152, %165, %cst_99 {dimension_numbers = #tpu.dot_dimension_numbers<[1], [0], [0], [1], [0, 0, 1, 1], [], []>} : vector<16x32xf32>, vector<32x32xf32>, vector<16x32xf32> -> vector<16x32xf32>
      %c0_100 = arith.constant 0 : index
      %c0_101 = arith.constant 0 : index
      %167 = vector.load %arg10[%c0_100, %c0_101] : memref<1x32xf32, #tpu.memory_space<vmem>>, vector<1x32xf32>
      %168 = vector.broadcast %167 : vector<1x32xf32> to vector<16x32xf32>
      %169 = arith.addf %166, %168 : vector<16x32xf32>
      %c0_102 = arith.constant 0 : index
      %c0_103 = arith.constant 0 : index
      %170 = vector.load %arg22[%c0_102, %c0_103] : memref<16x32xf32, #tpu.memory_space<vmem>>, vector<16x32xf32>
      tpu.vector_store %arg22[%c0_102, %c0_103], %169 {strides = array<i32>} : memref<16x32xf32, #tpu.memory_space<vmem>>, vector<16x32xf32>,
    } else {
    }
    %5 = arith.index_cast %1 : i32 to index
    %c0 = arith.constant 0 : index
    %6 = vector.load %arg20[%5, %c0] : memref<16x32xf32, #tpu.memory_space<vmem>>, vector<8x32xf32>
    %7 = vector.extract_strided_slice %6 {offsets = [0, 0], sizes = [8, 8], strides = [1, 1]} : vector<8x32xf32> to vector<8x8xf32>
    %c0_1 = arith.constant 0 : index
    %c0_2 = arith.constant 0 : index
    %8 = vector.load %arg21[%c0_1, %c0_2] : memref<16x32xf32, #tpu.memory_space<vmem>>, vector<16x8xf32>
    %c0_3 = arith.constant 0 : index
    %c0_4 = arith.constant 0 : index
    %9 = vector.load %arg22[%c0_3, %c0_4] : memref<16x32xf32, #tpu.memory_space<vmem>>, vector<16x8xf32>
    %cst = arith.constant dense<0.000000e+00> : vector<8x16xf32>
    %10 = tpu.matmul %7, %8, %cst {dimension_numbers = #tpu.dot_dimension_numbers<[1], [1], [0], [0], [0, 0, 1, 0], [], []>} : vector<8x8xf32>, vector<16x8xf32>, vector<8x16xf32> -> vector<8x16xf32>
    %cst_5 = arith.constant dense<0xFF800000> : vector<8xf32>
    %11 = vector.multi_reduction <maximumf>, %10, %cst_5 [1] : vector<8x16xf32> to vector<8xf32>
    %12 = vector.shape_cast %11 : vector<8xf32> to vector<8x1xf32>
    %13 = vector.broadcast %12 : vector<8x1xf32> to vector<8x16xf32>
    %14 = arith.subf %10, %13 : vector<8x16xf32>
    %15 = math.exp %14 : vector<8x16xf32>
    %cst_6 = arith.constant dense<0.000000e+00> : vector<8xf32>
    %16 = vector.multi_reduction <add>, %15, %cst_6 [1] : vector<8x16xf32> to vector<8xf32>
    %17 = vector.shape_cast %16 : vector<8xf32> to vector<8x1xf32>
    %18 = tpu.reciprocal %17 {approx = true} : vector<8x1xf32> -> vector<8x1xf32>
    %19 = vector.broadcast %18 : vector<8x1xf32> to vector<8x16xf32>
    %20 = arith.mulf %15, %19 : vector<8x16xf32>
    %cst_7 = arith.constant dense<0.000000e+00> : vector<8x8xf32>
    %21 = tpu.matmul %20, %9, %cst_7 {dimension_numbers = #tpu.dot_dimension_numbers<[1], [0], [0], [1], [0, 0, 1, 1], [], []>} : vector<8x16xf32>, vector<16x8xf32>, vector<8x8xf32> -> vector<8x8xf32>
    %c0_8 = arith.constant 0 : index
    %c0_9 = arith.constant 0 : index
    %22 = vector.load %arg23[%c0_8, %c0_9] : memref<8x32xf32, #tpu.memory_space<vmem>>, vector<8x8xf32>
    tpu.vector_store %arg23[%c0_8, %c0_9], %21 {strides = array<i32>} : memref<8x32xf32, #tpu.memory_space<vmem>>, vector<8x8xf32>,
    %23 = vector.extract_strided_slice %6 {offsets = [0, 8], sizes = [8, 8], strides = [1, 1]} : vector<8x32xf32> to vector<8x8xf32>
    %c0_10 = arith.constant 0 : index
    %c8 = arith.constant 8 : index
    %24 = vector.load %arg21[%c0_10, %c8] : memref<16x32xf32, #tpu.memory_space<vmem>>, vector<16x8xf32>
    %c0_11 = arith.constant 0 : index
    %c8_12 = arith.constant 8 : index
    %25 = vector.load %arg22[%c0_11, %c8_12] : memref<16x32xf32, #tpu.memory_space<vmem>>, vector<16x8xf32>
    %cst_13 = arith.constant dense<0.000000e+00> : vector<8x16xf32>
    %26 = tpu.matmul %23, %24, %cst_13 {dimension_numbers = #tpu.dot_dimension_numbers<[1], [1], [0], [0], [0, 0, 1, 0], [], []>} : vector<8x8xf32>, vector<16x8xf32>, vector<8x16xf32> -> vector<8x16xf32>
    %cst_14 = arith.constant dense<0xFF800000> : vector<8xf32>
    %27 = vector.multi_reduction <maximumf>, %26, %cst_14 [1] : vector<8x16xf32> to vector<8xf32>
    %28 = vector.shape_cast %27 : vector<8xf32> to vector<8x1xf32>
    %29 = vector.broadcast %28 : vector<8x1xf32> to vector<8x16xf32>
    %30 = arith.subf %26, %29 : vector<8x16xf32>
    %31 = math.exp %30 : vector<8x16xf32>
    %cst_15 = arith.constant dense<0.000000e+00> : vector<8xf32>
    %32 = vector.multi_reduction <add>, %31, %cst_15 [1] : vector<8x16xf32> to vector<8xf32>
    %33 = vector.shape_cast %32 : vector<8xf32> to vector<8x1xf32>
    %34 = tpu.reciprocal %33 {approx = true} : vector<8x1xf32> -> vector<8x1xf32>
    %35 = vector.broadcast %34 : vector<8x1xf32> to vector<8x16xf32>
    %36 = arith.mulf %31, %35 : vector<8x16xf32>
    %cst_16 = arith.constant dense<0.000000e+00> : vector<8x8xf32>
    %37 = tpu.matmul %36, %25, %cst_16 {dimension_numbers = #tpu.dot_dimension_numbers<[1], [0], [0], [1], [0, 0, 1, 1], [], []>} : vector<8x16xf32>, vector<16x8xf32>, vector<8x8xf32> -> vector<8x8xf32>
    %c0_17 = arith.constant 0 : index
    %c8_18 = arith.constant 8 : index
    %38 = vector.load %arg23[%c0_17, %c8_18] : memref<8x32xf32, #tpu.memory_space<vmem>>, vector<8x8xf32>
    tpu.vector_store %arg23[%c0_17, %c8_18], %37 {strides = array<i32>} : memref<8x32xf32, #tpu.memory_space<vmem>>, vector<8x8xf32>,
    %39 = vector.extract_strided_slice %6 {offsets = [0, 16], sizes = [8, 8], strides = [1, 1]} : vector<8x32xf32> to vector<8x8xf32>
    %c0_19 = arith.constant 0 : index
    %c16 = arith.constant 16 : index
    %40 = vector.load %arg21[%c0_19, %c16] : memref<16x32xf32, #tpu.memory_space<vmem>>, vector<16x8xf32>
    %c0_20 = arith.constant 0 : index
    %c16_21 = arith.constant 16 : index
    %41 = vector.load %arg22[%c0_20, %c16_21] : memref<16x32xf32, #tpu.memory_space<vmem>>, vector<16x8xf32>
    %cst_22 = arith.constant dense<0.000000e+00> : vector<8x16xf32>
    %42 = tpu.matmul %39, %40, %cst_22 {dimension_numbers = #tpu.dot_dimension_numbers<[1], [1], [0], [0], [0, 0, 1, 0], [], []>} : vector<8x8xf32>, vector<16x8xf32>, vector<8x16xf32> -> vector<8x16xf32>
    %cst_23 = arith.constant dense<0xFF800000> : vector<8xf32>
    %43 = vector.multi_reduction <maximumf>, %42, %cst_23 [1] : vector<8x16xf32> to vector<8xf32>
    %44 = vector.shape_cast %43 : vector<8xf32> to vector<8x1xf32>
    %45 = vector.broadcast %44 : vector<8x1xf32> to vector<8x16xf32>
    %46 = arith.subf %42, %45 : vector<8x16xf32>
    %47 = math.exp %46 : vector<8x16xf32>
    %cst_24 = arith.constant dense<0.000000e+00> : vector<8xf32>
    %48 = vector.multi_reduction <add>, %47, %cst_24 [1] : vector<8x16xf32> to vector<8xf32>
    %49 = vector.shape_cast %48 : vector<8xf32> to vector<8x1xf32>
    %50 = tpu.reciprocal %49 {approx = true} : vector<8x1xf32> -> vector<8x1xf32>
    %51 = vector.broadcast %50 : vector<8x1xf32> to vector<8x16xf32>
    %52 = arith.mulf %47, %51 : vector<8x16xf32>
    %cst_25 = arith.constant dense<0.000000e+00> : vector<8x8xf32>
    %53 = tpu.matmul %52, %41, %cst_25 {dimension_numbers = #tpu.dot_dimension_numbers<[1], [0], [0], [1], [0, 0, 1, 1], [], []>} : vector<8x16xf32>, vector<16x8xf32>, vector<8x8xf32> -> vector<8x8xf32>
    %c0_26 = arith.constant 0 : index
    %c16_27 = arith.constant 16 : index
    %54 = vector.load %arg23[%c0_26, %c16_27] : memref<8x32xf32, #tpu.memory_space<vmem>>, vector<8x8xf32>
    tpu.vector_store %arg23[%c0_26, %c16_27], %53 {strides = array<i32>} : memref<8x32xf32, #tpu.memory_space<vmem>>, vector<8x8xf32>,
    %55 = vector.extract_strided_slice %6 {offsets = [0, 24], sizes = [8, 8], strides = [1, 1]} : vector<8x32xf32> to vector<8x8xf32>
    %c0_28 = arith.constant 0 : index
    %c24 = arith.constant 24 : index
    %56 = vector.load %arg21[%c0_28, %c24] : memref<16x32xf32, #tpu.memory_space<vmem>>, vector<16x8xf32>
    %c0_29 = arith.constant 0 : index
    %c24_30 = arith.constant 24 : index
    %57 = vector.load %arg22[%c0_29, %c24_30] : memref<16x32xf32, #tpu.memory_space<vmem>>, vector<16x8xf32>
    %cst_31 = arith.constant dense<0.000000e+00> : vector<8x16xf32>
    %58 = tpu.matmul %55, %56, %cst_31 {dimension_numbers = #tpu.dot_dimension_numbers<[1], [1], [0], [0], [0, 0, 1, 0], [], []>} : vector<8x8xf32>, vector<16x8xf32>, vector<8x16xf32> -> vector<8x16xf32>
    %cst_32 = arith.constant dense<0xFF800000> : vector<8xf32>
    %59 = vector.multi_reduction <maximumf>, %58, %cst_32 [1] : vector<8x16xf32> to vector<8xf32>
    %60 = vector.shape_cast %59 : vector<8xf32> to vector<8x1xf32>
    %61 = vector.broadcast %60 : vector<8x1xf32> to vector<8x16xf32>
    %62 = arith.subf %58, %61 : vector<8x16xf32>
    %63 = math.exp %62 : vector<8x16xf32>
    %cst_33 = arith.constant dense<0.000000e+00> : vector<8xf32>
    %64 = vector.multi_reduction <add>, %63, %cst_33 [1] : vector<8x16xf32> to vector<8xf32>
    %65 = vector.shape_cast %64 : vector<8xf32> to vector<8x1xf32>
    %66 = tpu.reciprocal %65 {approx = true} : vector<8x1xf32> -> vector<8x1xf32>
    %67 = vector.broadcast %66 : vector<8x1xf32> to vector<8x16xf32>
    %68 = arith.mulf %63, %67 : vector<8x16xf32>
    %cst_34 = arith.constant dense<0.000000e+00> : vector<8x8xf32>
    %69 = tpu.matmul %68, %57, %cst_34 {dimension_numbers = #tpu.dot_dimension_numbers<[1], [0], [0], [1], [0, 0, 1, 1], [], []>} : vector<8x16xf32>, vector<16x8xf32>, vector<8x8xf32> -> vector<8x8xf32>
    %c0_35 = arith.constant 0 : index
    %c24_36 = arith.constant 24 : index
    %70 = vector.load %arg23[%c0_35, %c24_36] : memref<8x32xf32, #tpu.memory_space<vmem>>, vector<8x8xf32>
    tpu.vector_store %arg23[%c0_35, %c24_36], %69 {strides = array<i32>} : memref<8x32xf32, #tpu.memory_space<vmem>>, vector<8x8xf32>,
    %c0_37 = arith.constant 0 : index
    %c0_38 = arith.constant 0 : index
    %71 = vector.load %arg23[%c0_37, %c0_38] : memref<8x32xf32, #tpu.memory_space<vmem>>, vector<8x32xf32>
    %c0_39 = arith.constant 0 : index
    %c0_40 = arith.constant 0 : index
    %72 = vector.load %arg11[%c0_39, %c0_40] : memref<32x32xf32, #tpu.memory_space<vmem>>, vector<32x32xf32>
    %cst_41 = arith.constant dense<0.000000e+00> : vector<8x32xf32>
    %73 = tpu.matmul %71, %72, %cst_41 {dimension_numbers = #tpu.dot_dimension_numbers<[1], [0], [0], [1], [0, 0, 1, 1], [], []>} : vector<8x32xf32>, vector<32x32xf32>, vector<8x32xf32> -> vector<8x32xf32>
    %c0_42 = arith.constant 0 : index
    %c0_43 = arith.constant 0 : index
    %74 = vector.load %arg12[%c0_42, %c0_43] : memref<1x32xf32, #tpu.memory_space<vmem>>, vector<1x32xf32>
    %75 = vector.broadcast %74 : vector<1x32xf32> to vector<8x32xf32>
    %76 = arith.addf %73, %75 : vector<8x32xf32>
    %c0_44 = arith.constant 0 : index
    %77 = arith.index_cast %1 : i32 to index
    %c0_45 = arith.constant 0 : index
    %78 = vector.load %arg2[%c0_44, %77, %c0_45] : memref<1x16x32xf32, #tpu.memory_space<vmem>>, vector<1x8x32xf32>
    %79 = vector.shape_cast %78 : vector<1x8x32xf32> to vector<8x32xf32>
    %80 = arith.addf %79, %76 : vector<8x32xf32>
    %c0_46 = arith.constant 0 : index
    %c0_47 = arith.constant 0 : index
    %81 = vector.load %arg13[%c0_46, %c0_47] : memref<1x32xf32, #tpu.memory_space<vmem>>, vector<1x32xf32>
    %c0_48 = arith.constant 0 : index
    %c0_49 = arith.constant 0 : index
    %82 = vector.load %arg14[%c0_48, %c0_49] : memref<1x32xf32, #tpu.memory_space<vmem>>, vector<1x32xf32>
    %cst_50 = arith.constant dense<0.000000e+00> : vector<8xf32>
    %83 = vector.multi_reduction <add>, %80, %cst_50 [1] : vector<8x32xf32> to vector<8xf32>
    %84 = vector.shape_cast %83 : vector<8xf32> to vector<8x1xf32>
    %cst_51 = arith.constant 3.200000e+01 : f32
    %85 = vector.broadcast %cst_51 : f32 to vector<8x1xf32>
    %86 = arith.divf %84, %85 : vector<8x1xf32>
    %87 = vector.broadcast %86 : vector<8x1xf32> to vector<8x32xf32>
    %88 = arith.subf %80, %87 : vector<8x32xf32>
    %89 = arith.mulf %88, %88 : vector<8x32xf32>
    %cst_52 = arith.constant dense<0.000000e+00> : vector<8xf32>
    %90 = vector.multi_reduction <add>, %89, %cst_52 [1] : vector<8x32xf32> to vector<8xf32>
    %91 = vector.shape_cast %90 : vector<8xf32> to vector<8x1xf32>
    %cst_53 = arith.constant 3.200000e+01 : f32
    %92 = vector.broadcast %cst_53 : f32 to vector<8x1xf32>
    %93 = arith.divf %91, %92 : vector<8x1xf32>
    %94 = vector.broadcast %86 : vector<8x1xf32> to vector<8x32xf32>
    %95 = arith.subf %80, %94 : vector<8x32xf32>
    %cst_54 = arith.constant 9.99999974E-6 : f32
    %96 = vector.broadcast %cst_54 : f32 to vector<8x1xf32>
    %97 = arith.addf %93, %96 : vector<8x1xf32>
    %98 = math.rsqrt %97 : vector<8x1xf32>
    %99 = vector.broadcast %98 : vector<8x1xf32> to vector<8x32xf32>
    %100 = arith.mulf %95, %99 : vector<8x32xf32>
    %101 = vector.broadcast %81 : vector<1x32xf32> to vector<8x32xf32>
    %102 = arith.mulf %100, %101 : vector<8x32xf32>
    %103 = vector.broadcast %82 : vector<1x32xf32> to vector<8x32xf32>
    %104 = arith.addf %102, %103 : vector<8x32xf32>
    %c0_55 = arith.constant 0 : index
    %c0_56 = arith.constant 0 : index
    %105 = vector.load %arg15[%c0_55, %c0_56] : memref<32x128xf32, #tpu.memory_space<vmem>>, vector<32x128xf32>
    %cst_57 = arith.constant dense<0.000000e+00> : vector<8x128xf32>
    %106 = tpu.matmul %104, %105, %cst_57 {dimension_numbers = #tpu.dot_dimension_numbers<[1], [0], [0], [1], [0, 0, 1, 1], [], []>} : vector<8x32xf32>, vector<32x128xf32>, vector<8x128xf32> -> vector<8x128xf32>
    %c0_58 = arith.constant 0 : index
    %c0_59 = arith.constant 0 : index
    %107 = vector.load %arg16[%c0_58, %c0_59] : memref<1x128xf32, #tpu.memory_space<vmem>>, vector<1x128xf32>
    %108 = vector.broadcast %107 : vector<1x128xf32> to vector<8x128xf32>
    %109 = arith.addf %106, %108 : vector<8x128xf32>
    %cst_60 = arith.constant 5.000000e-01 : f32
    %110 = vector.broadcast %cst_60 : f32 to vector<8x128xf32>
    %111 = arith.mulf %110, %109 : vector<8x128xf32>
    %cst_61 = arith.constant 0.707106769 : f32
    %112 = vector.broadcast %cst_61 : f32 to vector<8x128xf32>
    %113 = arith.mulf %109, %112 : vector<8x128xf32>
    %114 = math.erf %113 : vector<8x128xf32>
    %cst_62 = arith.constant 1.000000e+00 : f32
    %115 = vector.broadcast %cst_62 : f32 to vector<8x128xf32>
    %116 = arith.addf %115, %114 : vector<8x128xf32>
    %117 = arith.mulf %111, %116 : vector<8x128xf32>
    %c0_63 = arith.constant 0 : index
    %c0_64 = arith.constant 0 : index
    %118 = vector.load %arg17[%c0_63, %c0_64] : memref<128x32xf32, #tpu.memory_space<vmem>>, vector<128x32xf32>
    %cst_65 = arith.constant dense<0.000000e+00> : vector<8x32xf32>
    %119 = tpu.matmul %117, %118, %cst_65 {dimension_numbers = #tpu.dot_dimension_numbers<[1], [0], [0], [1], [0, 0, 1, 1], [], []>} : vector<8x128xf32>, vector<128x32xf32>, vector<8x32xf32> -> vector<8x32xf32>
    %c0_66 = arith.constant 0 : index
    %c0_67 = arith.constant 0 : index
    %120 = vector.load %arg18[%c0_66, %c0_67] : memref<1x32xf32, #tpu.memory_space<vmem>>, vector<1x32xf32>
    %121 = vector.broadcast %120 : vector<1x32xf32> to vector<8x32xf32>
    %122 = arith.addf %119, %121 : vector<8x32xf32>
    %123 = arith.addf %80, %122 : vector<8x32xf32>
    %c0_68 = arith.constant 0 : index
    %c0_69 = arith.constant 0 : index
    %c0_70 = arith.constant 0 : index
    %124 = vector.load %arg19[%c0_68, %c0_69, %c0_70] : memref<1x8x32xf32, #tpu.memory_space<vmem>>, vector<1x8x32xf32>
    %125 = vector.shape_cast %124 : vector<1x8x32xf32> to vector<8x32xf32>
    %126 = vector.shape_cast %123 : vector<8x32xf32> to vector<1x8x32xf32>
    tpu.vector_store %arg19[%c0_68, %c0_69, %c0_70], %126 {strides = array<i32>} : memref<1x8x32xf32, #tpu.memory_space<vmem>>, vector<1x8x32xf32>,
    return
  }
  func.func @transform_0(%arg0: i32, %arg1: i32) -> (i32, i32, i32) {
    %c0_i32 = arith.constant 0 : i32
    %c0_i32_0 = arith.constant 0 : i32
    %c0_i32_1 = arith.constant 0 : i32
    return %arg0, %c0_i32, %c0_i32_0 : i32, i32, i32
  }
  func.func @transform_1(%arg0: i32, %arg1: i32) -> (i32, i32) {
    %c0_i32 = arith.constant 0 : i32
    %c0_i32_0 = arith.constant 0 : i32
    %c0_i32_1 = arith.constant 0 : i32
    return %c0_i32, %c0_i32_0 : i32, i32
  }
  func.func @transform_2(%arg0: i32, %arg1: i32) -> (i32, i32) {
    %c0_i32 = arith.constant 0 : i32
    %c0_i32_0 = arith.constant 0 : i32
    %c0_i32_1 = arith.constant 0 : i32
    return %c0_i32, %c0_i32_0 : i32, i32
  }
  func.func @transform_3(%arg0: i32, %arg1: i32) -> (i32, i32) {
    %c0_i32 = arith.constant 0 : i32
    %c0_i32_0 = arith.constant 0 : i32
    %c0_i32_1 = arith.constant 0 : i32
    return %c0_i32, %c0_i32_0 : i32, i32
  }
  func.func @transform_4(%arg0: i32, %arg1: i32) -> (i32, i32) {
    %c0_i32 = arith.constant 0 : i32
    %c0_i32_0 = arith.constant 0 : i32
    %c0_i32_1 = arith.constant 0 : i32
    return %c0_i32, %c0_i32_0 : i32, i32
  }
  func.func @transform_5(%arg0: i32, %arg1: i32) -> (i32, i32) {
    %c0_i32 = arith.constant 0 : i32
    %c0_i32_0 = arith.constant 0 : i32
    %c0_i32_1 = arith.constant 0 : i32
    return %c0_i32, %c0_i32_0 : i32, i32
  }
  func.func @transform_6(%arg0: i32, %arg1: i32) -> (i32, i32) {
    %c0_i32 = arith.constant 0 : i32
    %c0_i32_0 = arith.constant 0 : i32
    %c0_i32_1 = arith.constant 0 : i32
    return %c0_i32, %c0_i32_0 : i32, i32
  }
  func.func @transform_7(%arg0: i32, %arg1: i32) -> (i32, i32) {
    %c0_i32 = arith.constant 0 : i32
    %c0_i32_0 = arith.constant 0 : i32
    %c0_i32_1 = arith.constant 0 : i32
    return %c0_i32, %c0_i32_0 : i32, i32
  }
  func.func @transform_8(%arg0: i32, %arg1: i32) -> (i32, i32) {
    %c0_i32 = arith.constant 0 : i32
    %c0_i32_0 = arith.constant 0 : i32
    %c0_i32_1 = arith.constant 0 : i32
    return %c0_i32, %c0_i32_0 : i32, i32
  }
  func.func @transform_9(%arg0: i32, %arg1: i32) -> (i32, i32) {
    %c0_i32 = arith.constant 0 : i32
    %c0_i32_0 = arith.constant 0 : i32
    %c0_i32_1 = arith.constant 0 : i32
    return %c0_i32, %c0_i32_0 : i32, i32
  }
  func.func @transform_10(%arg0: i32, %arg1: i32) -> (i32, i32) {
    %c0_i32 = arith.constant 0 : i32
    %c0_i32_0 = arith.constant 0 : i32
    %c0_i32_1 = arith.constant 0 : i32
    return %c0_i32, %c0_i32_0 : i32, i32
  }
  func.func @transform_11(%arg0: i32, %arg1: i32) -> (i32, i32) {
    %c0_i32 = arith.constant 0 : i32
    %c0_i32_0 = arith.constant 0 : i32
    %c0_i32_1 = arith.constant 0 : i32
    return %c0_i32, %c0_i32_0 : i32, i32
  }
  func.func @transform_12(%arg0: i32, %arg1: i32) -> (i32, i32) {
    %c0_i32 = arith.constant 0 : i32
    %c0_i32_0 = arith.constant 0 : i32
    %c0_i32_1 = arith.constant 0 : i32
    return %c0_i32, %c0_i32_0 : i32, i32
  }
  func.func @transform_13(%arg0: i32, %arg1: i32) -> (i32, i32) {
    %c0_i32 = arith.constant 0 : i32
    %c0_i32_0 = arith.constant 0 : i32
    %c0_i32_1 = arith.constant 0 : i32
    return %c0_i32, %c0_i32_0 : i32, i32
  }
  func.func @transform_14(%arg0: i32, %arg1: i32) -> (i32, i32) {
    %c0_i32 = arith.constant 0 : i32
    %c0_i32_0 = arith.constant 0 : i32
    %c0_i32_1 = arith.constant 0 : i32
    return %c0_i32, %c0_i32_0 : i32, i32
  }
  func.func @transform_15(%arg0: i32, %arg1: i32) -> (i32, i32) {
    %c0_i32 = arith.constant 0 : i32
    %c0_i32_0 = arith.constant 0 : i32
    %c0_i32_1 = arith.constant 0 : i32
    return %c0_i32, %c0_i32_0 : i32, i32
  }
  func.func @transform_16(%arg0: i32, %arg1: i32) -> (i32, i32) {
    %c0_i32 = arith.constant 0 : i32
    %c0_i32_0 = arith.constant 0 : i32
    %c0_i32_1 = arith.constant 0 : i32
    return %c0_i32, %c0_i32_0 : i32, i32
  }
  func.func @transform_17(%arg0: i32, %arg1: i32) -> (i32, i32, i32) {
    %c0_i32 = arith.constant 0 : i32
    %c0_i32_0 = arith.constant 0 : i32
    return %arg0, %arg1, %c0_i32 : i32, i32, i32
  }
}

module attributes {stable_mosaic.version = 11 : i64} {
  func.func @_encoder_block_kernel(%arg0: i32, %arg1: i32, %arg2: memref<1x16x32xf32, #tpu.memory_space<vmem>>, %arg3: memref<1x32xf32, #tpu.memory_space<vmem>>, %arg4: memref<1x32xf32, #tpu.memory_space<vmem>>, %arg5: memref<32x32xf32, #tpu.memory_space<vmem>>, %arg6: memref<1x32xf32, #tpu.memory_space<vmem>>, %arg7: memref<32x32xf32, #tpu.memory_space<vmem>>, %arg8: memref<1x32xf32, #tpu.memory_space<vmem>>, %arg9: memref<32x32xf32, #tpu.memory_space<vmem>>, %arg10: memref<1x32xf32, #tpu.memory_space<vmem>>, %arg11: memref<32x32xf32, #tpu.memory_space<vmem>>, %arg12: memref<1x32xf32, #tpu.memory_space<vmem>>, %arg13: memref<1x32xf32, #tpu.memory_space<vmem>>, %arg14: memref<1x32xf32, #tpu.memory_space<vmem>>, %arg15: memref<32x128xf32, #tpu.memory_space<vmem>>, %arg16: memref<1x128xf32, #tpu.memory_space<vmem>>, %arg17: memref<128x32xf32, #tpu.memory_space<vmem>>, %arg18: memref<1x32xf32, #tpu.memory_space<vmem>>, %arg19: memref<1x8x32xf32, #tpu.memory_space<vmem>>, %arg20: memref<16x32xf32, #tpu.memory_space<vmem>>, %arg21: memref<16x32xf32, #tpu.memory_space<vmem>>, %arg22: memref<16x32xf32, #tpu.memory_space<vmem>>, %arg23: memref<8x32xf32, #tpu.memory_space<vmem>>) attributes {dimension_semantics = [#tpu.dimension_semantics<parallel>, #tpu.dimension_semantics<arbitrary>], iteration_bounds = array<i64: 2, 2>, scalar_prefetch = 0 : i64, scratch_operands = 4 : i64, tpu.core_type = #tpu.core_type<tc>, window_params = [{transform_indices = @transform_0, window_bounds = array<i64: 1, 16, 32>}, {pipeline_mode = #tpu.pipeline_mode<synchronous>, transform_indices = @transform_1, window_bounds = array<i64: 1, 32>}, {pipeline_mode = #tpu.pipeline_mode<synchronous>, transform_indices = @transform_2, window_bounds = array<i64: 1, 32>}, {pipeline_mode = #tpu.pipeline_mode<synchronous>, transform_indices = @transform_3, window_bounds = array<i64: 32, 32>}, {pipeline_mode = #tpu.pipeline_mode<synchronous>, transform_indices = @transform_4, window_bounds = array<i64: 1, 32>}, {pipeline_mode = #tpu.pipeline_mode<synchronous>, transform_indices = @transform_5, window_bounds = array<i64: 32, 32>}, {pipeline_mode = #tpu.pipeline_mode<synchronous>, transform_indices = @transform_6, window_bounds = array<i64: 1, 32>}, {pipeline_mode = #tpu.pipeline_mode<synchronous>, transform_indices = @transform_7, window_bounds = array<i64: 32, 32>}, {pipeline_mode = #tpu.pipeline_mode<synchronous>, transform_indices = @transform_8, window_bounds = array<i64: 1, 32>}, {pipeline_mode = #tpu.pipeline_mode<synchronous>, transform_indices = @transform_9, window_bounds = array<i64: 32, 32>}, {pipeline_mode = #tpu.pipeline_mode<synchronous>, transform_indices = @transform_10, window_bounds = array<i64: 1, 32>}, {pipeline_mode = #tpu.pipeline_mode<synchronous>, transform_indices = @transform_11, window_bounds = array<i64: 1, 32>}, {pipeline_mode = #tpu.pipeline_mode<synchronous>, transform_indices = @transform_12, window_bounds = array<i64: 1, 32>}, {pipeline_mode = #tpu.pipeline_mode<synchronous>, transform_indices = @transform_13, window_bounds = array<i64: 32, 128>}, {pipeline_mode = #tpu.pipeline_mode<synchronous>, transform_indices = @transform_14, window_bounds = array<i64: 1, 128>}, {pipeline_mode = #tpu.pipeline_mode<synchronous>, transform_indices = @transform_15, window_bounds = array<i64: 128, 32>}, {pipeline_mode = #tpu.pipeline_mode<synchronous>, transform_indices = @transform_16, window_bounds = array<i64: 1, 32>}, {transform_indices = @transform_17, window_bounds = array<i64: 1, 8, 32>}]} {
    %c8_i32 = arith.constant 8 : i32
    %0 = arith.muli %arg1, %c8_i32 : i32
    %1 = tpu.assume_multiple %0, 8 : i32
    %c0_i32 = arith.constant 0 : i32
    %2 = arith.cmpi eq, %arg1, %c0_i32 : i32
    %3 = arith.extui %2 : i1 to i32
    %c0_i32_0 = arith.constant 0 : i32
    %4 = arith.cmpi ne, %3, %c0_i32_0 : i32
    scf.if %4 {
      %c0_71 = arith.constant 0 : index
      %c0_72 = arith.constant 0 : index
      %c0_73 = arith.constant 0 : index
      %127 = vector.load %arg2[%c0_71, %c0_72, %c0_73] : memref<1x16x32xf32, #tpu.memory_space<vmem>>, vector<1x16x32xf32>
      %128 = vector.shape_cast %127 : vector<1x16x32xf32> to vector<16x32xf32>
      %c0_74 = arith.constant 0 : index
      %c0_75 = arith.constant 0 : index
      %129 = vector.load %arg3[%c0_74, %c0_75] : memref<1x32xf32, #tpu.memory_space<vmem>>, vector<1x32xf32>
      %c0_76 = arith.constant 0 : index
      %c0_77 = arith.constant 0 : index
      %130 = vector.load %arg4[%c0_76, %c0_77] : memref<1x32xf32, #tpu.memory_space<vmem>>, vector<1x32xf32>
      %cst_78 = arith.constant dense<0.000000e+00> : vector<16xf32>
      %131 = vector.multi_reduction <add>, %128, %cst_78 [1] : vector<16x32xf32> to vector<16xf32>
      %132 = vector.shape_cast %131 : vector<16xf32> to vector<16x1xf32>
      %cst_79 = arith.constant 3.200000e+01 : f32
      %133 = vector.broadcast %cst_79 : f32 to vector<16x1xf32>
      %134 = arith.divf %132, %133 : vector<16x1xf32>
      %135 = vector.broadcast %134 : vector<16x1xf32> to vector<16x32xf32>
      %136 = arith.subf %128, %135 : vector<16x32xf32>
      %137 = arith.mulf %136, %136 : vector<16x32xf32>
      %cst_80 = arith.constant dense<0.000000e+00> : vector<16xf32>
      %138 = vector.multi_reduction <add>, %137, %cst_80 [1] : vector<16x32xf32> to vector<16xf32>
      %139 = vector.shape_cast %138 : vector<16xf32> to vector<16x1xf32>
      %cst_81 = arith.constant 3.200000e+01 : f32
      %140 = vector.broadcast %cst_81 : f32 to vector<16x1xf32>
      %141 = arith.divf %139, %140 : vector<16x1xf32>
      %142 = vector.broadcast %134 : vector<16x1xf32> to vector<16x32xf32>
      %143 = arith.subf %128, %142 : vector<16x32xf32>
      %cst_82 = arith.constant 9.99999974E-6 : f32
      %144 = vector.broadcast %cst_82 : f32 to vector<16x1xf32>
      %145 = arith.addf %141, %144 : vector<16x1xf32>
      %146 = math.rsqrt %145 : vector<16x1xf32>
      %147 = vector.broadcast %146 : vector<16x1xf32> to vector<16x32xf32>
      %148 = arith.mulf %143, %147 : vector<16x32xf32>
      %149 = vector.broadcast %129 : vector<1x32xf32> to vector<16x32xf32>
      %150 = arith.mulf %148, %149 : vector<16x32xf32>
      %151 = vector.broadcast %130 : vector<1x32xf32> to vector<16x32xf32>
      %152 = arith.addf %150, %151 : vector<16x32xf32>
      %c0_83 = arith.constant 0 : index
      %c0_84 = arith.constant 0 : index
      %153 = vector.load %arg5[%c0_83, %c0_84] : memref<32x32xf32, #tpu.memory_space<vmem>>, vector<32x32xf32>
      %cst_85 = arith.constant dense<0.000000e+00> : vector<16x32xf32>
      %154 = tpu.matmul %152, %153, %cst_85 {dimension_numbers = #tpu.dot_dimension_numbers<[1], [0], [0], [1], [0, 0, 1, 1], [], []>} : vector<16x32xf32>, vector<32x32xf32>, vector<16x32xf32> -> vector<16x32xf32>
      %c0_86 = arith.constant 0 : index
      %c0_87 = arith.constant 0 : index
      %155 = vector.load %arg6[%c0_86, %c0_87] : memref<1x32xf32, #tpu.memory_space<vmem>>, vector<1x32xf32>
      %156 = vector.broadcast %155 : vector<1x32xf32> to vector<16x32xf32>
      %157 = arith.addf %154, %156 : vector<16x32xf32>
      %c0_88 = arith.constant 0 : index
      %c0_89 = arith.constant 0 : index
      %158 = vector.load %arg20[%c0_88, %c0_89] : memref<16x32xf32, #tpu.memory_space<vmem>>, vector<16x32xf32>
      tpu.vector_store %arg20[%c0_88, %c0_89], %157 {strides = array<i32>} : memref<16x32xf32, #tpu.memory_space<vmem>>, vector<16x32xf32>,
      %c0_90 = arith.constant 0 : index
      %c0_91 = arith.constant 0 : index
      %159 = vector.load %arg7[%c0_90, %c0_91] : memref<32x32xf32, #tpu.memory_space<vmem>>, vector<32x32xf32>
      %cst_92 = arith.constant dense<0.000000e+00> : vector<16x32xf32>
      %160 = tpu.matmul %152, %159, %cst_92 {dimension_numbers = #tpu.dot_dimension_numbers<[1], [0], [0], [1], [0, 0, 1, 1], [], []>} : vector<16x32xf32>, vector<32x32xf32>, vector<16x32xf32> -> vector<16x32xf32>
      %c0_93 = arith.constant 0 : index
      %c0_94 = arith.constant 0 : index
      %161 = vector.load %arg8[%c0_93, %c0_94] : memref<1x32xf32, #tpu.memory_space<vmem>>, vector<1x32xf32>
      %162 = vector.broadcast %161 : vector<1x32xf32> to vector<16x32xf32>
      %163 = arith.addf %160, %162 : vector<16x32xf32>
      %c0_95 = arith.constant 0 : index
      %c0_96 = arith.constant 0 : index
      %164 = vector.load %arg21[%c0_95, %c0_96] : memref<16x32xf32, #tpu.memory_space<vmem>>, vector<16x32xf32>
      tpu.vector_store %arg21[%c0_95, %c0_96], %163 {strides = array<i32>} : memref<16x32xf32, #tpu.memory_space<vmem>>, vector<16x32xf32>,
      %c0_97 = arith.constant 0 : index
      %c0_98 = arith.constant 0 : index
      %165 = vector.load %arg9[%c0_97, %c0_98] : memref<32x32xf32, #tpu.memory_space<vmem>>, vector<32x32xf32>
      %cst_99 = arith.constant dense<0.000000e+00> : vector<16x32xf32>
      %166 = tpu.matmul %152, %165, %cst_99 {dimension_numbers = #tpu.dot_dimension_numbers<[1], [0], [0], [1], [0, 0, 1, 1], [], []>} : vector<16x32xf32>, vector<32x32xf32>, vector<16x32xf32> -> vector<16x32xf32>
      %c0_100 = arith.constant 0 : index
      %c0_101 = arith.constant 0 : index
      %167 = vector.load %arg10[%c0_100, %c0_101] : memref<1x32xf32, #tpu.memory_space<vmem>>, vector<1x32xf32>
      %168 = vector.broadcast %167 : vector<1x32xf32> to vector<16x32xf32>
      %169 = arith.addf %166, %168 : vector<16x32xf32>
      %c0_102 = arith.constant 0 : index
      %c0_103 = arith.constant 0 : index
      %170 = vector.load %arg22[%c0_102, %c0_103] : memref<16x32xf32, #tpu.memory_space<vmem>>, vector<16x32xf32>
      tpu.vector_store %arg22[%c0_102, %c0_103], %169 {strides = array<i32>} : memref<16x32xf32, #tpu.memory_space<vmem>>, vector<16x32xf32>,
    } else {
    }
    %5 = arith.index_cast %1 : i32 to index
    %c0 = arith.constant 0 : index
    %6 = vector.load %arg20[%5, %c0] : memref<16x32xf32, #tpu.memory_space<vmem>>, vector<8x32xf32>
    %7 = vector.extract_strided_slice %6 {offsets = [0, 0], sizes = [8, 8], strides = [1, 1]} : vector<8x32xf32> to vector<8x8xf32>
    %c0_1 = arith.constant 0 : index
    %c0_2 = arith.constant 0 : index
    %8 = vector.load %arg21[%c0_1, %c0_2] : memref<16x32xf32, #tpu.memory_space<vmem>>, vector<16x8xf32>
    %c0_3 = arith.constant 0 : index
    %c0_4 = arith.constant 0 : index
    %9 = vector.load %arg22[%c0_3, %c0_4] : memref<16x32xf32, #tpu.memory_space<vmem>>, vector<16x8xf32>
    %cst = arith.constant dense<0.000000e+00> : vector<8x16xf32>
    %10 = tpu.matmul %7, %8, %cst {dimension_numbers = #tpu.dot_dimension_numbers<[1], [1], [0], [0], [0, 0, 1, 0], [], []>} : vector<8x8xf32>, vector<16x8xf32>, vector<8x16xf32> -> vector<8x16xf32>
    %cst_5 = arith.constant dense<0xFF800000> : vector<8xf32>
    %11 = vector.multi_reduction <maximumf>, %10, %cst_5 [1] : vector<8x16xf32> to vector<8xf32>
    %12 = vector.shape_cast %11 : vector<8xf32> to vector<8x1xf32>
    %13 = vector.broadcast %12 : vector<8x1xf32> to vector<8x16xf32>
    %14 = arith.subf %10, %13 : vector<8x16xf32>
    %15 = math.exp %14 : vector<8x16xf32>
    %cst_6 = arith.constant dense<0.000000e+00> : vector<8xf32>
    %16 = vector.multi_reduction <add>, %15, %cst_6 [1] : vector<8x16xf32> to vector<8xf32>
    %17 = vector.shape_cast %16 : vector<8xf32> to vector<8x1xf32>
    %18 = tpu.reciprocal %17 {approx = true} : vector<8x1xf32> -> vector<8x1xf32>
    %19 = vector.broadcast %18 : vector<8x1xf32> to vector<8x16xf32>
    %20 = arith.mulf %15, %19 : vector<8x16xf32>
    %cst_7 = arith.constant dense<0.000000e+00> : vector<8x8xf32>
    %21 = tpu.matmul %20, %9, %cst_7 {dimension_numbers = #tpu.dot_dimension_numbers<[1], [0], [0], [1], [0, 0, 1, 1], [], []>} : vector<8x16xf32>, vector<16x8xf32>, vector<8x8xf32> -> vector<8x8xf32>
    %c0_8 = arith.constant 0 : index
    %c0_9 = arith.constant 0 : index
    %22 = vector.load %arg23[%c0_8, %c0_9] : memref<8x32xf32, #tpu.memory_space<vmem>>, vector<8x8xf32>
    tpu.vector_store %arg23[%c0_8, %c0_9], %21 {strides = array<i32>} : memref<8x32xf32, #tpu.memory_space<vmem>>, vector<8x8xf32>,
    %23 = vector.extract_strided_slice %6 {offsets = [0, 8], sizes = [8, 8], strides = [1, 1]} : vector<8x32xf32> to vector<8x8xf32>
    %c0_10 = arith.constant 0 : index
    %c8 = arith.constant 8 : index
    %24 = vector.load %arg21[%c0_10, %c8] : memref<16x32xf32, #tpu.memory_space<vmem>>, vector<16x8xf32>
    %c0_11 = arith.constant 0 : index
    %c8_12 = arith.constant 8 : index
    %25 = vector.load %arg22[%c0_11, %c8_12] : memref<16x32xf32, #tpu.memory_space<vmem>>, vector<16x8xf32>
    %cst_13 = arith.constant dense<0.000000e+00> : vector<8x16xf32>
    %26 = tpu.matmul %23, %24, %cst_13 {dimension_numbers = #tpu.dot_dimension_numbers<[1], [1], [0], [0], [0, 0, 1, 0], [], []>} : vector<8x8xf32>, vector<16x8xf32>, vector<8x16xf32> -> vector<8x16xf32>
    %cst_14 = arith.constant dense<0xFF800000> : vector<8xf32>
    %27 = vector.multi_reduction <maximumf>, %26, %cst_14 [1] : vector<8x16xf32> to vector<8xf32>
    %28 = vector.shape_cast %27 : vector<8xf32> to vector<8x1xf32>
    %29 = vector.broadcast %28 : vector<8x1xf32> to vector<8x16xf32>
    %30 = arith.subf %26, %29 : vector<8x16xf32>
    %31 = math.exp %30 : vector<8x16xf32>
    %cst_15 = arith.constant dense<0.000000e+00> : vector<8xf32>
    %32 = vector.multi_reduction <add>, %31, %cst_15 [1] : vector<8x16xf32> to vector<8xf32>
    %33 = vector.shape_cast %32 : vector<8xf32> to vector<8x1xf32>
    %34 = tpu.reciprocal %33 {approx = true} : vector<8x1xf32> -> vector<8x1xf32>
    %35 = vector.broadcast %34 : vector<8x1xf32> to vector<8x16xf32>
    %36 = arith.mulf %31, %35 : vector<8x16xf32>
    %cst_16 = arith.constant dense<0.000000e+00> : vector<8x8xf32>
    %37 = tpu.matmul %36, %25, %cst_16 {dimension_numbers = #tpu.dot_dimension_numbers<[1], [0], [0], [1], [0, 0, 1, 1], [], []>} : vector<8x16xf32>, vector<16x8xf32>, vector<8x8xf32> -> vector<8x8xf32>
    %c0_17 = arith.constant 0 : index
    %c8_18 = arith.constant 8 : index
    %38 = vector.load %arg23[%c0_17, %c8_18] : memref<8x32xf32, #tpu.memory_space<vmem>>, vector<8x8xf32>
    tpu.vector_store %arg23[%c0_17, %c8_18], %37 {strides = array<i32>} : memref<8x32xf32, #tpu.memory_space<vmem>>, vector<8x8xf32>,
    %39 = vector.extract_strided_slice %6 {offsets = [0, 16], sizes = [8, 8], strides = [1, 1]} : vector<8x32xf32> to vector<8x8xf32>
    %c0_19 = arith.constant 0 : index
    %c16 = arith.constant 16 : index
    %40 = vector.load %arg21[%c0_19, %c16] : memref<16x32xf32, #tpu.memory_space<vmem>>, vector<16x8xf32>
    %c0_20 = arith.constant 0 : index
    %c16_21 = arith.constant 16 : index
    %41 = vector.load %arg22[%c0_20, %c16_21] : memref<16x32xf32, #tpu.memory_space<vmem>>, vector<16x8xf32>
    %cst_22 = arith.constant dense<0.000000e+00> : vector<8x16xf32>
    %42 = tpu.matmul %39, %40, %cst_22 {dimension_numbers = #tpu.dot_dimension_numbers<[1], [1], [0], [0], [0, 0, 1, 0], [], []>} : vector<8x8xf32>, vector<16x8xf32>, vector<8x16xf32> -> vector<8x16xf32>
    %cst_23 = arith.constant dense<0xFF800000> : vector<8xf32>
    %43 = vector.multi_reduction <maximumf>, %42, %cst_23 [1] : vector<8x16xf32> to vector<8xf32>
    %44 = vector.shape_cast %43 : vector<8xf32> to vector<8x1xf32>
    %45 = vector.broadcast %44 : vector<8x1xf32> to vector<8x16xf32>
    %46 = arith.subf %42, %45 : vector<8x16xf32>
    %47 = math.exp %46 : vector<8x16xf32>
    %cst_24 = arith.constant dense<0.000000e+00> : vector<8xf32>
    %48 = vector.multi_reduction <add>, %47, %cst_24 [1] : vector<8x16xf32> to vector<8xf32>
    %49 = vector.shape_cast %48 : vector<8xf32> to vector<8x1xf32>
    %50 = tpu.reciprocal %49 {approx = true} : vector<8x1xf32> -> vector<8x1xf32>
    %51 = vector.broadcast %50 : vector<8x1xf32> to vector<8x16xf32>
    %52 = arith.mulf %47, %51 : vector<8x16xf32>
    %cst_25 = arith.constant dense<0.000000e+00> : vector<8x8xf32>
    %53 = tpu.matmul %52, %41, %cst_25 {dimension_numbers = #tpu.dot_dimension_numbers<[1], [0], [0], [1], [0, 0, 1, 1], [], []>} : vector<8x16xf32>, vector<16x8xf32>, vector<8x8xf32> -> vector<8x8xf32>
    %c0_26 = arith.constant 0 : index
    %c16_27 = arith.constant 16 : index
    %54 = vector.load %arg23[%c0_26, %c16_27] : memref<8x32xf32, #tpu.memory_space<vmem>>, vector<8x8xf32>
    tpu.vector_store %arg23[%c0_26, %c16_27], %53 {strides = array<i32>} : memref<8x32xf32, #tpu.memory_space<vmem>>, vector<8x8xf32>,
    %55 = vector.extract_strided_slice %6 {offsets = [0, 24], sizes = [8, 8], strides = [1, 1]} : vector<8x32xf32> to vector<8x8xf32>
    %c0_28 = arith.constant 0 : index
    %c24 = arith.constant 24 : index
    %56 = vector.load %arg21[%c0_28, %c24] : memref<16x32xf32, #tpu.memory_space<vmem>>, vector<16x8xf32>
    %c0_29 = arith.constant 0 : index
    %c24_30 = arith.constant 24 : index
    %57 = vector.load %arg22[%c0_29, %c24_30] : memref<16x32xf32, #tpu.memory_space<vmem>>, vector<16x8xf32>
    %cst_31 = arith.constant dense<0.000000e+00> : vector<8x16xf32>
    %58 = tpu.matmul %55, %56, %cst_31 {dimension_numbers = #tpu.dot_dimension_numbers<[1], [1], [0], [0], [0, 0, 1, 0], [], []>} : vector<8x8xf32>, vector<16x8xf32>, vector<8x16xf32> -> vector<8x16xf32>
    %cst_32 = arith.constant dense<0xFF800000> : vector<8xf32>
    %59 = vector.multi_reduction <maximumf>, %58, %cst_32 [1] : vector<8x16xf32> to vector<8xf32>
    %60 = vector.shape_cast %59 : vector<8xf32> to vector<8x1xf32>
    %61 = vector.broadcast %60 : vector<8x1xf32> to vector<8x16xf32>
    %62 = arith.subf %58, %61 : vector<8x16xf32>
    %63 = math.exp %62 : vector<8x16xf32>
    %cst_33 = arith.constant dense<0.000000e+00> : vector<8xf32>
    %64 = vector.multi_reduction <add>, %63, %cst_33 [1] : vector<8x16xf32> to vector<8xf32>
    %65 = vector.shape_cast %64 : vector<8xf32> to vector<8x1xf32>
    %66 = tpu.reciprocal %65 {approx = true} : vector<8x1xf32> -> vector<8x1xf32>
    %67 = vector.broadcast %66 : vector<8x1xf32> to vector<8x16xf32>
    %68 = arith.mulf %63, %67 : vector<8x16xf32>
    %cst_34 = arith.constant dense<0.000000e+00> : vector<8x8xf32>
    %69 = tpu.matmul %68, %57, %cst_34 {dimension_numbers = #tpu.dot_dimension_numbers<[1], [0], [0], [1], [0, 0, 1, 1], [], []>} : vector<8x16xf32>, vector<16x8xf32>, vector<8x8xf32> -> vector<8x8xf32>
    %c0_35 = arith.constant 0 : index
    %c24_36 = arith.constant 24 : index
    %70 = vector.load %arg23[%c0_35, %c24_36] : memref<8x32xf32, #tpu.memory_space<vmem>>, vector<8x8xf32>
    tpu.vector_store %arg23[%c0_35, %c24_36], %69 {strides = array<i32>} : memref<8x32xf32, #tpu.memory_space<vmem>>, vector<8x8xf32>,
    %c0_37 = arith.constant 0 : index
    %c0_38 = arith.constant 0 : index
    %71 = vector.load %arg23[%c0_37, %c0_38] : memref<8x32xf32, #tpu.memory_space<vmem>>, vector<8x32xf32>
    %c0_39 = arith.constant 0 : index
    %c0_40 = arith.constant 0 : index
    %72 = vector.load %arg11[%c0_39, %c0_40] : memref<32x32xf32, #tpu.memory_space<vmem>>, vector<32x32xf32>
    %cst_41 = arith.constant dense<0.000000e+00> : vector<8x32xf32>
    %73 = tpu.matmul %71, %72, %cst_41 {dimension_numbers = #tpu.dot_dimension_numbers<[1], [0], [0], [1], [0, 0, 1, 1], [], []>} : vector<8x32xf32>, vector<32x32xf32>, vector<8x32xf32> -> vector<8x32xf32>
    %c0_42 = arith.constant 0 : index
    %c0_43 = arith.constant 0 : index
    %74 = vector.load %arg12[%c0_42, %c0_43] : memref<1x32xf32, #tpu.memory_space<vmem>>, vector<1x32xf32>
    %75 = vector.broadcast %74 : vector<1x32xf32> to vector<8x32xf32>
    %76 = arith.addf %73, %75 : vector<8x32xf32>
    %c0_44 = arith.constant 0 : index
    %77 = arith.index_cast %1 : i32 to index
    %c0_45 = arith.constant 0 : index
    %78 = vector.load %arg2[%c0_44, %77, %c0_45] : memref<1x16x32xf32, #tpu.memory_space<vmem>>, vector<1x8x32xf32>
    %79 = vector.shape_cast %78 : vector<1x8x32xf32> to vector<8x32xf32>
    %80 = arith.addf %79, %76 : vector<8x32xf32>
    %c0_46 = arith.constant 0 : index
    %c0_47 = arith.constant 0 : index
    %81 = vector.load %arg13[%c0_46, %c0_47] : memref<1x32xf32, #tpu.memory_space<vmem>>, vector<1x32xf32>
    %c0_48 = arith.constant 0 : index
    %c0_49 = arith.constant 0 : index
    %82 = vector.load %arg14[%c0_48, %c0_49] : memref<1x32xf32, #tpu.memory_space<vmem>>, vector<1x32xf32>
    %cst_50 = arith.constant dense<0.000000e+00> : vector<8xf32>
    %83 = vector.multi_reduction <add>, %80, %cst_50 [1] : vector<8x32xf32> to vector<8xf32>
    %84 = vector.shape_cast %83 : vector<8xf32> to vector<8x1xf32>
    %cst_51 = arith.constant 3.200000e+01 : f32
    %85 = vector.broadcast %cst_51 : f32 to vector<8x1xf32>
    %86 = arith.divf %84, %85 : vector<8x1xf32>
    %87 = vector.broadcast %86 : vector<8x1xf32> to vector<8x32xf32>
    %88 = arith.subf %80, %87 : vector<8x32xf32>
    %89 = arith.mulf %88, %88 : vector<8x32xf32>
    %cst_52 = arith.constant dense<0.000000e+00> : vector<8xf32>
    %90 = vector.multi_reduction <add>, %89, %cst_52 [1] : vector<8x32xf32> to vector<8xf32>
    %91 = vector.shape_cast %90 : vector<8xf32> to vector<8x1xf32>
    %cst_53 = arith.constant 3.200000e+01 : f32
    %92 = vector.broadcast %cst_53 : f32 to vector<8x1xf32>
    %93 = arith.divf %91, %92 : vector<8x1xf32>
    %94 = vector.broadcast %86 : vector<8x1xf32> to vector<8x32xf32>
    %95 = arith.subf %80, %94 : vector<8x32xf32>
    %cst_54 = arith.constant 9.99999974E-6 : f32
    %96 = vector.broadcast %cst_54 : f32 to vector<8x1xf32>
    %97 = arith.addf %93, %96 : vector<8x1xf32>
    %98 = math.rsqrt %97 : vector<8x1xf32>
    %99 = vector.broadcast %98 : vector<8x1xf32> to vector<8x32xf32>
    %100 = arith.mulf %95, %99 : vector<8x32xf32>
    %101 = vector.broadcast %81 : vector<1x32xf32> to vector<8x32xf32>
    %102 = arith.mulf %100, %101 : vector<8x32xf32>
    %103 = vector.broadcast %82 : vector<1x32xf32> to vector<8x32xf32>
    %104 = arith.addf %102, %103 : vector<8x32xf32>
    %c0_55 = arith.constant 0 : index
    %c0_56 = arith.constant 0 : index
    %105 = vector.load %arg15[%c0_55, %c0_56] : memref<32x128xf32, #tpu.memory_space<vmem>>, vector<32x128xf32>
    %cst_57 = arith.constant dense<0.000000e+00> : vector<8x128xf32>
    %106 = tpu.matmul %104, %105, %cst_57 {dimension_numbers = #tpu.dot_dimension_numbers<[1], [0], [0], [1], [0, 0, 1, 1], [], []>} : vector<8x32xf32>, vector<32x128xf32>, vector<8x128xf32> -> vector<8x128xf32>
    %c0_58 = arith.constant 0 : index
    %c0_59 = arith.constant 0 : index
    %107 = vector.load %arg16[%c0_58, %c0_59] : memref<1x128xf32, #tpu.memory_space<vmem>>, vector<1x128xf32>
    %108 = vector.broadcast %107 : vector<1x128xf32> to vector<8x128xf32>
    %109 = arith.addf %106, %108 : vector<8x128xf32>
    %cst_60 = arith.constant 5.000000e-01 : f32
    %110 = vector.broadcast %cst_60 : f32 to vector<8x128xf32>
    %111 = arith.mulf %110, %109 : vector<8x128xf32>
    %cst_61 = arith.constant 0.707106769 : f32
    %112 = vector.broadcast %cst_61 : f32 to vector<8x128xf32>
    %113 = arith.mulf %109, %112 : vector<8x128xf32>
    %114 = math.erf %113 : vector<8x128xf32>
    %cst_62 = arith.constant 1.000000e+00 : f32
    %115 = vector.broadcast %cst_62 : f32 to vector<8x128xf32>
    %116 = arith.addf %115, %114 : vector<8x128xf32>
    %117 = arith.mulf %111, %116 : vector<8x128xf32>
    %c0_63 = arith.constant 0 : index
    %c0_64 = arith.constant 0 : index
    %118 = vector.load %arg17[%c0_63, %c0_64] : memref<128x32xf32, #tpu.memory_space<vmem>>, vector<128x32xf32>
    %cst_65 = arith.constant dense<0.000000e+00> : vector<8x32xf32>
    %119 = tpu.matmul %117, %118, %cst_65 {dimension_numbers = #tpu.dot_dimension_numbers<[1], [0], [0], [1], [0, 0, 1, 1], [], []>} : vector<8x128xf32>, vector<128x32xf32>, vector<8x32xf32> -> vector<8x32xf32>
    %c0_66 = arith.constant 0 : index
    %c0_67 = arith.constant 0 : index
    %120 = vector.load %arg18[%c0_66, %c0_67] : memref<1x32xf32, #tpu.memory_space<vmem>>, vector<1x32xf32>
    %121 = vector.broadcast %120 : vector<1x32xf32> to vector<8x32xf32>
    %122 = arith.addf %119, %121 : vector<8x32xf32>
    %123 = arith.addf %80, %122 : vector<8x32xf32>
    %c0_68 = arith.constant 0 : index
    %c0_69 = arith.constant 0 : index
    %c0_70 = arith.constant 0 : index
    %124 = vector.load %arg19[%c0_68, %c0_69, %c0_70] : memref<1x8x32xf32, #tpu.memory_space<vmem>>, vector<1x8x32xf32>
    %125 = vector.shape_cast %124 : vector<1x8x32xf32> to vector<8x32xf32>
    %126 = vector.shape_cast %123 : vector<8x32xf32> to vector<1x8x32xf32>
    tpu.vector_store %arg19[%c0_68, %c0_69, %c0_70], %126 {strides = array<i32>} : memref<1x8x32xf32, #tpu.memory_space<vmem>>, vector<1x8x32xf32>,
    return
  }
  func.func @transform_0(%arg0: i32, %arg1: i32) -> (i32, i32, i32) {
    %c0_i32 = arith.constant 0 : i32
    %c0_i32_0 = arith.constant 0 : i32
    %c0_i32_1 = arith.constant 0 : i32
    return %arg0, %c0_i32, %c0_i32_0 : i32, i32, i32
  }
  func.func @transform_1(%arg0: i32, %arg1: i32) -> (i32, i32) {
    %c0_i32 = arith.constant 0 : i32
    %c0_i32_0 = arith.constant 0 : i32
    %c0_i32_1 = arith.constant 0 : i32
    return %c0_i32, %c0_i32_0 : i32, i32
  }
  func.func @transform_2(%arg0: i32, %arg1: i32) -> (i32, i32) {
    %c0_i32 = arith.constant 0 : i32
    %c0_i32_0 = arith.constant 0 : i32
    %c0_i32_1 = arith.constant 0 : i32
    return %c0_i32, %c0_i32_0 : i32, i32
  }
  func.func @transform_3(%arg0: i32, %arg1: i32) -> (i32, i32) {
    %c0_i32 = arith.constant 0 : i32
    %c0_i32_0 = arith.constant 0 : i32
    %c0_i32_1 = arith.constant 0 : i32
    return %c0_i32, %c0_i32_0 : i32, i32
  }
  func.func @transform_4(%arg0: i32, %arg1: i32) -> (i32, i32) {
    %c0_i32 = arith.constant 0 : i32
    %c0_i32_0 = arith.constant 0 : i32
    %c0_i32_1 = arith.constant 0 : i32
    return %c0_i32, %c0_i32_0 : i32, i32
  }
  func.func @transform_5(%arg0: i32, %arg1: i32) -> (i32, i32) {
    %c0_i32 = arith.constant 0 : i32
    %c0_i32_0 = arith.constant 0 : i32
    %c0_i32_1 = arith.constant 0 : i32
    return %c0_i32, %c0_i32_0 : i32, i32
  }
  func.func @transform_6(%arg0: i32, %arg1: i32) -> (i32, i32) {
    %c0_i32 = arith.constant 0 : i32
    %c0_i32_0 = arith.constant 0 : i32
    %c0_i32_1 = arith.constant 0 : i32
    return %c0_i32, %c0_i32_0 : i32, i32
  }
  func.func @transform_7(%arg0: i32, %arg1: i32) -> (i32, i32) {
    %c0_i32 = arith.constant 0 : i32
    %c0_i32_0 = arith.constant 0 : i32
    %c0_i32_1 = arith.constant 0 : i32
    return %c0_i32, %c0_i32_0 : i32, i32
  }
  func.func @transform_8(%arg0: i32, %arg1: i32) -> (i32, i32) {
    %c0_i32 = arith.constant 0 : i32
    %c0_i32_0 = arith.constant 0 : i32
    %c0_i32_1 = arith.constant 0 : i32
    return %c0_i32, %c0_i32_0 : i32, i32
  }
  func.func @transform_9(%arg0: i32, %arg1: i32) -> (i32, i32) {
    %c0_i32 = arith.constant 0 : i32
    %c0_i32_0 = arith.constant 0 : i32
    %c0_i32_1 = arith.constant 0 : i32
    return %c0_i32, %c0_i32_0 : i32, i32
  }
  func.func @transform_10(%arg0: i32, %arg1: i32) -> (i32, i32) {
    %c0_i32 = arith.constant 0 : i32
    %c0_i32_0 = arith.constant 0 : i32
    %c0_i32_1 = arith.constant 0 : i32
    return %c0_i32, %c0_i32_0 : i32, i32
  }
  func.func @transform_11(%arg0: i32, %arg1: i32) -> (i32, i32) {
    %c0_i32 = arith.constant 0 : i32
    %c0_i32_0 = arith.constant 0 : i32
    %c0_i32_1 = arith.constant 0 : i32
    return %c0_i32, %c0_i32_0 : i32, i32
  }
  func.func @transform_12(%arg0: i32, %arg1: i32) -> (i32, i32) {
    %c0_i32 = arith.constant 0 : i32
    %c0_i32_0 = arith.constant 0 : i32
    %c0_i32_1 = arith.constant 0 : i32
    return %c0_i32, %c0_i32_0 : i32, i32
  }
  func.func @transform_13(%arg0: i32, %arg1: i32) -> (i32, i32) {
    %c0_i32 = arith.constant 0 : i32
    %c0_i32_0 = arith.constant 0 : i32
    %c0_i32_1 = arith.constant 0 : i32
    return %c0_i32, %c0_i32_0 : i32, i32
  }
  func.func @transform_14(%arg0: i32, %arg1: i32) -> (i32, i32) {
    %c0_i32 = arith.constant 0 : i32
    %c0_i32_0 = arith.constant 0 : i32
    %c0_i32_1 = arith.constant 0 : i32
    return %c0_i32, %c0_i32_0 : i32, i32
  }
  func.func @transform_15(%arg0: i32, %arg1: i32) -> (i32, i32) {
    %c0_i32 = arith.constant 0 : i32
    %c0_i32_0 = arith.constant 0 : i32
    %c0_i32_1 = arith.constant 0 : i32
    return %c0_i32, %c0_i32_0 : i32, i32
  }
  func.func @transform_16(%arg0: i32, %arg1: i32) -> (i32, i32) {
    %c0_i32 = arith.constant 0 : i32
    %c0_i32_0 = arith.constant 0 : i32
    %c0_i32_1 = arith.constant 0 : i32
    return %c0_i32, %c0_i32_0 : i32, i32
  }
  func.func @transform_17(%arg0: i32, %arg1: i32) -> (i32, i32, i32) {
    %c0_i32 = arith.constant 0 : i32
    %c0_i32_0 = arith.constant 0 : i32
    return %arg0, %arg1, %c0_i32 : i32, i32, i32
  }
}

</mosaic_0001>

<llo_original>
// kernel: tpu_custom_call.1
$region0: #{tpu_custom_call.1}
  #allocation0 [shape = 'u32[]', space=smem, size = 0x4, offset = 0x4, fixed_abs, tag = 'smem constant byte address 0x4 - core index']
  #allocation1 [shape = 'u32[144,128]{1,0:T(1,128)}', space=vmem, size = 0x12000, scoped, tag = 'internal scratch']
  #allocation2 [shape = 'f32[16,32]{1,0:T(8,128)}', space=vmem, size = 0x2000, scoped, tag = 'scratch operand']
  #allocation3 [shape = 'f32[16,32]{1,0:T(8,128)}', space=vmem, size = 0x2000, scoped, tag = 'scratch operand']
  #allocation4 [shape = 'f32[16,32]{1,0:T(8,128)}', space=vmem, size = 0x2000, scoped, tag = 'scratch operand']
  #allocation5 [shape = 'f32[8,32]{1,0:T(8,128)}', space=vmem, size = 0x1000, scoped, tag = 'scratch operand']
  %s0 = inlined_call_operand.vmem [shape: f32[2,16,32], index: 0, kind: input, shape index: {}]
  %s1 = inlined_call_operand.vmem [shape: f32[1,32], index: 1, kind: input, shape index: {}]
  %s2 = inlined_call_operand.vmem [shape: f32[1,32], index: 2, kind: input, shape index: {}]
  %s3 = inlined_call_operand.vmem [shape: f32[32,32], index: 3, kind: input, shape index: {}]
  %s4 = inlined_call_operand.vmem [shape: f32[1,32], index: 4, kind: input, shape index: {}]
  %s5 = inlined_call_operand.vmem [shape: f32[32,32], index: 5, kind: input, shape index: {}]
  %s6 = inlined_call_operand.vmem [shape: f32[1,32], index: 6, kind: input, shape index: {}]
  %s7 = inlined_call_operand.vmem [shape: f32[32,32], index: 7, kind: input, shape index: {}]
  %s8 = inlined_call_operand.vmem [shape: f32[1,32], index: 8, kind: input, shape index: {}]
  %s9 = inlined_call_operand.vmem [shape: f32[32,32], index: 9, kind: input, shape index: {}]
  %s10 = inlined_call_operand.vmem [shape: f32[1,32], index: 10, kind: input, shape index: {}]
  %s11 = inlined_call_operand.vmem [shape: f32[1,32], index: 11, kind: input, shape index: {}]
  %s12 = inlined_call_operand.vmem [shape: f32[1,32], index: 12, kind: input, shape index: {}]
  %s13 = inlined_call_operand.hbm [shape: f32[32,128], index: 13, kind: input, shape index: {}]
  %s14 = inlined_call_operand.vmem [shape: f32[1,128], index: 14, kind: input, shape index: {}]
  %s15 = inlined_call_operand.vmem [shape: f32[128,32], index: 15, kind: input, shape index: {}]
  %s16 = inlined_call_operand.vmem [shape: f32[1,32], index: 16, kind: input, shape index: {}]
  %s17 = inlined_call_operand.hbm [shape: f32[2,16,32], index: 17, kind: output, shape index: {}]
  %s18 = sld [smem:[#allocation0]]
  $region109: #{tpu_custom_call.1} parent=0
    _
  %s20 = ssub.s32 1, %s18
  %s21 = scalar_select 0, %s20, %s18
  $region1: #{tpu_custom_call.1} parent=0
    #allocation6 [shape = 'u8[16384]{0}', space=vmem, size = 0x4000, scoped, tag = 'input window, operand 13, single buffered']
    #allocation7 [shape = 's32[2]{0}', space=sflag, size = 0x8, scoped, tag = 'scoped memory for tpu_custom_call.1']
    #allocation8 [shape = 's32[2]{0}', space=sflag, size = 0x8, scoped, tag = 'scoped memory for tpu_custom_call.1']
    #allocation9 [shape = 'u8[8192]{0}', space=vmem, size = 0x2000, scoped, tag = 'output window, operand 0']
    %22 = vsyncpa [#allocation7], 0
    %23 = vsyncpa [#allocation8], 0
    %s24 = scalar_lea.sflag [#allocation8], 1
    %25 = vsyncpa %s24, 0
    loop: start=0, step=1, limit=6
    $region2: #{tpu_custom_call.1} parent=1 // loop_pre_header
      _
    $region3: #{tpu_custom_call.1} parent=1 // loop_header
      %s27 = sphi 0, %s31
      %p28 = scmp.ge.s32.totalorder %s27, 6
      %s34 = sphi 0, %s46
      %s35 = sphi 0, %s42
      %s36 = sphi 0, %s34
      %s37 = sphi 0, %s35
      %s38 = sphi 0, %s36
      %s39 = sphi 0, %s37
      %s49 = sphi 0, %s51
      %s52 = sphi 0, %s49
      %s53 = sphi 0, %s52
      %s69 = sphi 0, %s53
      %s73 = sphi 0, %s73
      %s75 = sphi 0, %s73
      %s76 = sphi 0, %s75
      %s90 = sphi 0, %s76
      %s94 = sphi 0, %s94
      %s96 = sphi 0, %s94
      %s97 = sphi 0, %s96
      %s111 = sphi 0, %s97
      %s115 = sphi 0, %s115
      %s117 = sphi 0, %s115
      %s118 = sphi 0, %s117
      %s132 = sphi 0, %s118
      %s136 = sphi 0, %s136
      %s138 = sphi 0, %s136
      %s139 = sphi 0, %s138
      %s153 = sphi 0, %s139
      %s157 = sphi 0, %s157
      %s159 = sphi 0, %s157
      %s160 = sphi 0, %s159
      %s174 = sphi 0, %s160
      %s178 = sphi 0, %s178
      %s180 = sphi 0, %s178
      %s181 = sphi 0, %s180
      %s195 = sphi 0, %s181
      %s199 = sphi 0, %s199
      %s201 = sphi 0, %s199
      %s202 = sphi 0, %s201
      %s216 = sphi 0, %s202
      %s220 = sphi 0, %s220
      %s222 = sphi 0, %s220
      %s223 = sphi 0, %s222
      %s237 = sphi 0, %s223
      %s241 = sphi 0, %s241
      %s243 = sphi 0, %s241
      %s244 = sphi 0, %s243
      %s258 = sphi 0, %s244
      %s262 = sphi 0, %s262
      %s264 = sphi 0, %s262
      %s265 = sphi 0, %s264
      %s279 = sphi 0, %s265
      %s283 = sphi 0, %s283
      %s285 = sphi 0, %s283
      %s286 = sphi 0, %s285
      %s300 = sphi 0, %s286
      %s304 = sphi 0, %s304
      %s306 = sphi 0, %s304
      %s307 = sphi 0, %s306
      %s321 = sphi 0, %s307
      %s325 = sphi 0, %s325
      %s327 = sphi 0, %s325
      %s328 = sphi 0, %s327
      %s342 = sphi 0, %s328
      %s346 = sphi 0, %s346
      %s348 = sphi 0, %s346
      %s349 = sphi 0, %s348
      %s363 = sphi 0, %s349
      %s367 = sphi 0, %s367
      %s369 = sphi 0, %s367
      %s370 = sphi 0, %s369
      %s384 = sphi 0, %s370
      %s388 = sphi 0, %s388
      %s390 = sphi 0, %s388
      %s391 = sphi 0, %s390
      %s405 = sphi 0, %s391
      %s413 = sphi 0, %s415
      %s416 = sphi 0, %s413
      %s417 = sphi 0, %s416
      %s433 = sphi 0, %s417
    $region4: #{tpu_custom_call.1} parent=1 // loop_header_branch
      %30 = sbr.rel (%p28) target = $region8
    $region5: #{tpu_custom_call.1} parent=1 // loop_body
      %s32 = ssub.s32 %s27, 1
      %s33 = ssub.s32 %s27, 2
      %s40 = sadd.s32 1, %s35
      %p41 = scmp.ge.s32.totalorder %s40, 2
      %s42 = scalar_select %p41, 0, %s40
      %s43 = sadd.s32 1, %s34
      %s44 = scalar_select %p41, %s43, %s34
      %p45 = scmp.ge.s32.totalorder %s44, 2
      %s46 = scalar_select %p45, 0, %s44
      %s47 = ssub.s32 %s34, %s46
      %p48 = scmp.eq.s32.totalorder %s47, 0
      %s50 = sadd.s32 %s49, 1
      %s51 = scalar_select %p48, %s49, %s50
      %p54 = pneg %p48
      %p55 = scmp.eq.s32.totalorder %s27, 3
      %p56 = por %p54, %p55
      %p57 = scmp.ne.s32.totalorder %s49, %s52
      %p58 = scmp.eq.s32.totalorder %s27, 0
      %p59 = por %p57, %p58
      %p60 = scmp.ne.s32.totalorder %s49, %s52
      %p61 = scmp.eq.s32.totalorder %s32, 3
      %p62 = por %p60, %p61
      %p63 = scmp.ne.s32.totalorder %s52, %s53
      %p64 = scmp.eq.s32.totalorder %s32, 0
      %p65 = por %p63, %p64
      %p66 = scmp.ne.s32.totalorder %s52, %s53
      %p67 = scmp.eq.s32.totalorder %s33, 3
      %p68 = por %p66, %p67
      %p70 = scmp.ne.s32.totalorder %s53, %s69
      %p71 = scmp.eq.s32.totalorder %s33, 0
      %p72 = por %p70, %p71
      %s74 = sadd.s32 %s73, 1
      %p77 = scmp.eq.s32.totalorder %s27, 3
      %p78 = scmp.ne.s32.totalorder %s73, %s75
      %p79 = scmp.eq.s32.totalorder %s27, 0
      %p80 = por %p78, %p79
      %p81 = scmp.ne.s32.totalorder %s73, %s75
      %p82 = scmp.eq.s32.totalorder %s32, 3
      %p83 = por %p81, %p82
      %p84 = scmp.ne.s32.totalorder %s75, %s76
      %p85 = scmp.eq.s32.totalorder %s32, 0
      %p86 = por %p84, %p85
      %p87 = scmp.ne.s32.totalorder %s75, %s76
      %p88 = scmp.eq.s32.totalorder %s33, 3
      %p89 = por %p87, %p88
      %p91 = scmp.ne.s32.totalorder %s76, %s90
      %p92 = scmp.eq.s32.totalorder %s33, 0
      %p93 = por %p91, %p92
      %s95 = sadd.s32 %s94, 1
      %p98 = scmp.eq.s32.totalorder %s27, 3
      %p99 = scmp.ne.s32.totalorder %s94, %s96
      %p100 = scmp.eq.s32.totalorder %s27, 0
      %p101 = por %p99, %p100
      %p102 = scmp.ne.s32.totalorder %s94, %s96
      %p103 = scmp.eq.s32.totalorder %s32, 3
      %p104 = por %p102, %p103
      %p105 = scmp.ne.s32.totalorder %s96, %s97
      %p106 = scmp.eq.s32.totalorder %s32, 0
      %p107 = por %p105, %p106
      %p108 = scmp.ne.s32.totalorder %s96, %s97
      %p109 = scmp.eq.s32.totalorder %s33, 3
      %p110 = por %p108, %p109
      %p112 = scmp.ne.s32.totalorder %s97, %s111
      %p113 = scmp.eq.s32.totalorder %s33, 0
      %p114 = por %p112, %p113
      %s116 = sadd.s32 %s115, 1
      %p119 = scmp.eq.s32.totalorder %s27, 3
      %p120 = scmp.ne.s32.totalorder %s115, %s117
      %p121 = scmp.eq.s32.totalorder %s27, 0
      %p122 = por %p120, %p121
      %p123 = scmp.ne.s32.totalorder %s115, %s117
      %p124 = scmp.eq.s32.totalorder %s32, 3
      %p125 = por %p123, %p124
      %p126 = scmp.ne.s32.totalorder %s117, %s118
      %p127 = scmp.eq.s32.totalorder %s32, 0
      %p128 = por %p126, %p127
      %p129 = scmp.ne.s32.totalorder %s117, %s118
      %p130 = scmp.eq.s32.totalorder %s33, 3
      %p131 = por %p129, %p130
      %p133 = scmp.ne.s32.totalorder %s118, %s132
      %p134 = scmp.eq.s32.totalorder %s33, 0
      %p135 = por %p133, %p134
      %s137 = sadd.s32 %s136, 1
      %p140 = scmp.eq.s32.totalorder %s27, 3
      %p141 = scmp.ne.s32.totalorder %s136, %s138
      %p142 = scmp.eq.s32.totalorder %s27, 0
      %p143 = por %p141, %p142
      %p144 = scmp.ne.s32.totalorder %s136, %s138
      %p145 = scmp.eq.s32.totalorder %s32, 3
      %p146 = por %p144, %p145
      %p147 = scmp.ne.s32.totalorder %s138, %s139
      %p148 = scmp.eq.s32.totalorder %s32, 0
      %p149 = por %p147, %p148
      %p150 = scmp.ne.s32.totalorder %s138, %s139
      %p151 = scmp.eq.s32.totalorder %s33, 3
      %p152 = por %p150, %p151
      %p154 = scmp.ne.s32.totalorder %s139, %s153
      %p155 = scmp.eq.s32.totalorder %s33, 0
      %p156 = por %p154, %p155
      %s158 = sadd.s32 %s157, 1
      %p161 = scmp.eq.s32.totalorder %s27, 3
      %p162 = scmp.ne.s32.totalorder %s157, %s159
      %p163 = scmp.eq.s32.totalorder %s27, 0
      %p164 = por %p162, %p163
      %p165 = scmp.ne.s32.totalorder %s157, %s159
      %p166 = scmp.eq.s32.totalorder %s32, 3
      %p167 = por %p165, %p166
      %p168 = scmp.ne.s32.totalorder %s159, %s160
      %p169 = scmp.eq.s32.totalorder %s32, 0
      %p170 = por %p168, %p169
      %p171 = scmp.ne.s32.totalorder %s159, %s160
      %p172 = scmp.eq.s32.totalorder %s33, 3
      %p173 = por %p171, %p172
      %p175 = scmp.ne.s32.totalorder %s160, %s174
      %p176 = scmp.eq.s32.totalorder %s33, 0
      %p177 = por %p175, %p176
      %s179 = sadd.s32 %s178, 1
      %p182 = scmp.eq.s32.totalorder %s27, 3
      %p183 = scmp.ne.s32.totalorder %s178, %s180
      %p184 = scmp.eq.s32.totalorder %s27, 0
      %p185 = por %p183, %p184
      %p186 = scmp.ne.s32.totalorder %s178, %s180
      %p187 = scmp.eq.s32.totalorder %s32, 3
      %p188 = por %p186, %p187
      %p189 = scmp.ne.s32.totalorder %s180, %s181
      %p190 = scmp.eq.s32.totalorder %s32, 0
      %p191 = por %p189, %p190
      %p192 = scmp.ne.s32.totalorder %s180, %s181
      %p193 = scmp.eq.s32.totalorder %s33, 3
      %p194 = por %p192, %p193
      %p196 = scmp.ne.s32.totalorder %s181, %s195
      %p197 = scmp.eq.s32.totalorder %s33, 0
      %p198 = por %p196, %p197
      %s200 = sadd.s32 %s199, 1
      %p203 = scmp.eq.s32.totalorder %s27, 3
      %p204 = scmp.ne.s32.totalorder %s199, %s201
      %p205 = scmp.eq.s32.totalorder %s27, 0
      %p206 = por %p204, %p205
      %p207 = scmp.ne.s32.totalorder %s199, %s201
      %p208 = scmp.eq.s32.totalorder %s32, 3
      %p209 = por %p207, %p208
      %p210 = scmp.ne.s32.totalorder %s201, %s202
      %p211 = scmp.eq.s32.totalorder %s32, 0
      %p212 = por %p210, %p211
      %p213 = scmp.ne.s32.totalorder %s201, %s202
      %p214 = scmp.eq.s32.totalorder %s33, 3
      %p215 = por %p213, %p214
      %p217 = scmp.ne.s32.totalorder %s202, %s216
      %p218 = scmp.eq.s32.totalorder %s33, 0
      %p219 = por %p217, %p218
      %s221 = sadd.s32 %s220, 1
      %p224 = scmp.eq.s32.totalorder %s27, 3
      %p225 = scmp.ne.s32.totalorder %s220, %s222
      %p226 = scmp.eq.s32.totalorder %s27, 0
      %p227 = por %p225, %p226
      %p228 = scmp.ne.s32.totalorder %s220, %s222
      %p229 = scmp.eq.s32.totalorder %s32, 3
      %p230 = por %p228, %p229
      %p231 = scmp.ne.s32.totalorder %s222, %s223
      %p232 = scmp.eq.s32.totalorder %s32, 0
      %p233 = por %p231, %p232
      %p234 = scmp.ne.s32.totalorder %s222, %s223
      %p235 = scmp.eq.s32.totalorder %s33, 3
      %p236 = por %p234, %p235
      %p238 = scmp.ne.s32.totalorder %s223, %s237
      %p239 = scmp.eq.s32.totalorder %s33, 0
      %p240 = por %p238, %p239
      %s242 = sadd.s32 %s241, 1
      %p245 = scmp.eq.s32.totalorder %s27, 3
      %p246 = scmp.ne.s32.totalorder %s241, %s243
      %p247 = scmp.eq.s32.totalorder %s27, 0
      %p248 = por %p246, %p247
      %p249 = scmp.ne.s32.totalorder %s241, %s243
      %p250 = scmp.eq.s32.totalorder %s32, 3
      %p251 = por %p249, %p250
      %p252 = scmp.ne.s32.totalorder %s243, %s244
      %p253 = scmp.eq.s32.totalorder %s32, 0
      %p254 = por %p252, %p253
      %p255 = scmp.ne.s32.totalorder %s243, %s244
      %p256 = scmp.eq.s32.totalorder %s33, 3
      %p257 = por %p255, %p256
      %p259 = scmp.ne.s32.totalorder %s244, %s258
      %p260 = scmp.eq.s32.totalorder %s33, 0
      %p261 = por %p259, %p260
      %s263 = sadd.s32 %s262, 1
      %p266 = scmp.eq.s32.totalorder %s27, 3
      %p267 = scmp.ne.s32.totalorder %s262, %s264
      %p268 = scmp.eq.s32.totalorder %s27, 0
      %p269 = por %p267, %p268
      %p270 = scmp.ne.s32.totalorder %s262, %s264
      %p271 = scmp.eq.s32.totalorder %s32, 3
      %p272 = por %p270, %p271
      %p273 = scmp.ne.s32.totalorder %s264, %s265
      %p274 = scmp.eq.s32.totalorder %s32, 0
      %p275 = por %p273, %p274
      %p276 = scmp.ne.s32.totalorder %s264, %s265
      %p277 = scmp.eq.s32.totalorder %s33, 3
      %p278 = por %p276, %p277
      %p280 = scmp.ne.s32.totalorder %s265, %s279
      %p281 = scmp.eq.s32.totalorder %s33, 0
      %p282 = por %p280, %p281
      %s284 = sadd.s32 %s283, 1
      %p287 = scmp.eq.s32.totalorder %s27, 3
      %p288 = scmp.ne.s32.totalorder %s283, %s285
      %p289 = scmp.eq.s32.totalorder %s27, 0
      %p290 = por %p288, %p289
      %p291 = scmp.ne.s32.totalorder %s283, %s285
      %p292 = scmp.eq.s32.totalorder %s32, 3
      %p293 = por %p291, %p292
      %p294 = scmp.ne.s32.totalorder %s285, %s286
      %p295 = scmp.eq.s32.totalorder %s32, 0
      %p296 = por %p294, %p295
      %p297 = scmp.ne.s32.totalorder %s285, %s286
      %p298 = scmp.eq.s32.totalorder %s33, 3
      %p299 = por %p297, %p298
      %p301 = scmp.ne.s32.totalorder %s286, %s300
      %p302 = scmp.eq.s32.totalorder %s33, 0
      %p303 = por %p301, %p302
      %s305 = sadd.s32 %s304, 1
      %p308 = scmp.eq.s32.totalorder %s27, 3
      %p309 = scmp.ne.s32.totalorder %s304, %s306
      %p310 = scmp.eq.s32.totalorder %s27, 0
      %p311 = por %p309, %p310
      %p312 = scmp.ne.s32.totalorder %s304, %s306
      %p313 = scmp.eq.s32.totalorder %s32, 3
      %p314 = por %p312, %p313
      %p315 = scmp.ne.s32.totalorder %s306, %s307
      %p316 = scmp.eq.s32.totalorder %s32, 0
      %p317 = por %p315, %p316
      %p318 = scmp.ne.s32.totalorder %s306, %s307
      %p319 = scmp.eq.s32.totalorder %s33, 3
      %p320 = por %p318, %p319
      %p322 = scmp.ne.s32.totalorder %s307, %s321
      %p323 = scmp.eq.s32.totalorder %s33, 0
      %p324 = por %p322, %p323
      %s326 = sadd.s32 %s325, 1
      %p329 = scmp.eq.s32.totalorder %s27, 3
      %p330 = scmp.ne.s32.totalorder %s325, %s327
      %p331 = scmp.eq.s32.totalorder %s27, 0
      %p332 = por %p330, %p331
      %p333 = scmp.ne.s32.totalorder %s325, %s327
      %p334 = scmp.eq.s32.totalorder %s32, 3
      %p335 = por %p333, %p334
      %p336 = scmp.ne.s32.totalorder %s327, %s328
      %p337 = scmp.eq.s32.totalorder %s32, 0
      %p338 = por %p336, %p337
      %p339 = scmp.ne.s32.totalorder %s327, %s328
      %p340 = scmp.eq.s32.totalorder %s33, 3
      %p341 = por %p339, %p340
      %p343 = scmp.ne.s32.totalorder %s328, %s342
      %p344 = scmp.eq.s32.totalorder %s33, 0
      %p345 = por %p343, %p344
      %s347 = sadd.s32 %s346, 1
      %p350 = scmp.eq.s32.totalorder %s27, 3
      %p351 = scmp.ne.s32.totalorder %s346, %s348
      %p352 = scmp.eq.s32.totalorder %s27, 0
      %p353 = por %p351, %p352
      %p354 = scmp.ne.s32.totalorder %s346, %s348
      %p355 = scmp.eq.s32.totalorder %s32, 3
      %p356 = por %p354, %p355
      %p357 = scmp.ne.s32.totalorder %s348, %s349
      %p358 = scmp.eq.s32.totalorder %s32, 0
      %p359 = por %p357, %p358
      %p360 = scmp.ne.s32.totalorder %s348, %s349
      %p361 = scmp.eq.s32.totalorder %s33, 3
      %p362 = por %p360, %p361
      %p364 = scmp.ne.s32.totalorder %s349, %s363
      %p365 = scmp.eq.s32.totalorder %s33, 0
      %p366 = por %p364, %p365
      %s368 = sadd.s32 %s367, 1
      %p371 = scmp.eq.s32.totalorder %s27, 3
      %p372 = scmp.ne.s32.totalorder %s367, %s369
      %p373 = scmp.eq.s32.totalorder %s27, 0
      %p374 = por %p372, %p373
      %p375 = scmp.ne.s32.totalorder %s367, %s369
      %p376 = scmp.eq.s32.totalorder %s32, 3
      %p377 = por %p375, %p376
      %p378 = scmp.ne.s32.totalorder %s369, %s370
      %p379 = scmp.eq.s32.totalorder %s32, 0
      %p380 = por %p378, %p379
      %p381 = scmp.ne.s32.totalorder %s369, %s370
      %p382 = scmp.eq.s32.totalorder %s33, 3
      %p383 = por %p381, %p382
      %p385 = scmp.ne.s32.totalorder %s370, %s384
      %p386 = scmp.eq.s32.totalorder %s33, 0
      %p387 = por %p385, %p386
      %s389 = sadd.s32 %s388, 1
      %p392 = scmp.eq.s32.totalorder %s27, 3
      %p393 = scmp.ne.s32.totalorder %s388, %s390
      %p394 = scmp.eq.s32.totalorder %s27, 0
      %p395 = por %p393, %p394
      %p396 = scmp.ne.s32.totalorder %s388, %s390
      %p397 = scmp.eq.s32.totalorder %s32, 3
      %p398 = por %p396, %p397
      %p399 = scmp.ne.s32.totalorder %s390, %s391
      %p400 = scmp.eq.s32.totalorder %s32, 0
      %p401 = por %p399, %p400
      %p402 = scmp.ne.s32.totalorder %s390, %s391
      %p403 = scmp.eq.s32.totalorder %s33, 3
      %p404 = por %p402, %p403
      %p406 = scmp.ne.s32.totalorder %s391, %s405
      %p407 = scmp.eq.s32.totalorder %s33, 0
      %p408 = por %p406, %p407
      %s409 = ssub.s32 %s34, %s46
      %s410 = ssub.s32 %s35, %s42
      %s411 = sor.u32 %s409, %s410
      %p412 = scmp.eq.s32.totalorder %s411, 0
      %s414 = sadd.s32 %s413, 1
      %s415 = scalar_select %p412, %s413, %s414
      %p418 = pneg %p412
      %p419 = scmp.eq.s32.totalorder %s27, 3
      %p420 = por %p418, %p419
      %p421 = scmp.ne.s32.totalorder %s413, %s416
      %p422 = scmp.eq.s32.totalorder %s27, 0
      %p423 = por %p421, %p422
      %p424 = scmp.ne.s32.totalorder %s413, %s416
      %p425 = scmp.eq.s32.totalorder %s32, 3
      %p426 = por %p424, %p425
      %p427 = scmp.ne.s32.totalorder %s416, %s417
      %p428 = scmp.eq.s32.totalorder %s32, 0
      %p429 = por %p427, %p428
      %p430 = scmp.ne.s32.totalorder %s416, %s417
      %p431 = scmp.eq.s32.totalorder %s33, 3
      %p432 = por %p430, %p431
      %p434 = scmp.ne.s32.totalorder %s417, %s433
      %p435 = scmp.eq.s32.totalorder %s33, 0
      %p436 = por %p434, %p435
      %p437 = scmp.le.s32.totalorder 1, %s27
      %p438 = scmp.lt.s32.totalorder %s27, 5
      %p439 = pnand %p437, %p438
      %p440 = pneg %p439
      // Predicated region
      $region9: #{tpu_custom_call.1} parent=5 // pred_check
        _
      $region10: #{tpu_custom_call.1} parent=5 // pred_check_branch
        %442 = sbr.rel (%p439) target = $region12
      $region11: #{tpu_custom_call.1} parent=5 // pred_region
        %s443 = ssub.s32 %s27, 1
        // Predicated region
        $region13: #{tpu_custom_call.1} parent=11 // pred_check
          %p444 = pneg %p65
        $region14: #{tpu_custom_call.1} parent=11 // pred_check_branch
          %446 = sbr.rel (%p444) target = $region16
        $region15: #{tpu_custom_call.1} parent=11 // pred_region
          %p447 = scmp.lt.s32.totalorder %s36, 1
          %s448 = scalar_select %p447, %s36, 1
          %s449 = smul.addr %s448, 2
          %s450 = smul.addr %s449, 8
          %s451 = scalar_lea.vmem %s0, %s450
        $region16: #{tpu_custom_call.1} parent=11 // pred_fallthru
          _
        // Predicated region
        $region17: #{tpu_custom_call.1} parent=11 // pred_check
          %p452 = pneg %p86
        $region18: #{tpu_custom_call.1} parent=11 // pred_check_branch
          %454 = sbr.rel (%p452) target = $region20
        $region19: #{tpu_custom_call.1} parent=11 // pred_region
          _
        $region20: #{tpu_custom_call.1} parent=11 // pred_fallthru
          _
        // Predicated region
        $region21: #{tpu_custom_call.1} parent=11 // pred_check
          %p455 = pneg %p107
        $region22: #{tpu_custom_call.1} parent=11 // pred_check_branch
          %457 = sbr.rel (%p455) target = $region24
        $region23: #{tpu_custom_call.1} parent=11 // pred_region
          _
        $region24: #{tpu_custom_call.1} parent=11 // pred_fallthru
          _
        // Predicated region
        $region25: #{tpu_custom_call.1} parent=11 // pred_check
          %p458 = pneg %p128
        $region26: #{tpu_custom_call.1} parent=11 // pred_check_branch
          %460 = sbr.rel (%p458) target = $region28
        $region27: #{tpu_custom_call.1} parent=11 // pred_region
          _
        $region28: #{tpu_custom_call.1} parent=11 // pred_fallthru
          _
        // Predicated region
        $region29: #{tpu_custom_call.1} parent=11 // pred_check
          %p461 = pneg %p149
        $region30: #{tpu_custom_call.1} parent=11 // pred_check_branch
          %463 = sbr.rel (%p461) target = $region32
        $region31: #{tpu_custom_call.1} parent=11 // pred_region
          _
        $region32: #{tpu_custom_call.1} parent=11 // pred_fallthru
          _
        // Predicated region
        $region33: #{tpu_custom_call.1} parent=11 // pred_check
          %p464 = pneg %p170
        $region34: #{tpu_custom_call.1} parent=11 // pred_check_branch
          %466 = sbr.rel (%p464) target = $region36
        $region35: #{tpu_custom_call.1} parent=11 // pred_region
          _
        $region36: #{tpu_custom_call.1} parent=11 // pred_fallthru
          _
        // Predicated region
        $region37: #{tpu_custom_call.1} parent=11 // pred_check
          %p467 = pneg %p191
        $region38: #{tpu_custom_call.1} parent=11 // pred_check_branch
          %469 = sbr.rel (%p467) target = $region40
        $region39: #{tpu_custom_call.1} parent=11 // pred_region
          _
        $region40: #{tpu_custom_call.1} parent=11 // pred_fallthru
          _
        // Predicated region
        $region41: #{tpu_custom_call.1} parent=11 // pred_check
          %p470 = pneg %p212
        $region42: #{tpu_custom_call.1} parent=11 // pred_check_branch
          %472 = sbr.rel (%p470) target = $region44
        $region43: #{tpu_custom_call.1} parent=11 // pred_region
          _
        $region44: #{tpu_custom_call.1} parent=11 // pred_fallthru
          _
        // Predicated region
        $region45: #{tpu_custom_call.1} parent=11 // pred_check
          %p473 = pneg %p233
        $region46: #{tpu_custom_call.1} parent=11 // pred_check_branch
          %475 = sbr.rel (%p473) target = $region48
        $region47: #{tpu_custom_call.1} parent=11 // pred_region
          _
        $region48: #{tpu_custom_call.1} parent=11 // pred_fallthru
          _
        // Predicated region
        $region49: #{tpu_custom_call.1} parent=11 // pred_check
          %p476 = pneg %p254
        $region50: #{tpu_custom_call.1} parent=11 // pred_check_branch
          %478 = sbr.rel (%p476) target = $region52
        $region51: #{tpu_custom_call.1} parent=11 // pred_region
          _
        $region52: #{tpu_custom_call.1} parent=11 // pred_fallthru
          _
        // Predicated region
        $region53: #{tpu_custom_call.1} parent=11 // pred_check
          %p479 = pneg %p275
        $region54: #{tpu_custom_call.1} parent=11 // pred_check_branch
          %481 = sbr.rel (%p479) target = $region56
        $region55: #{tpu_custom_call.1} parent=11 // pred_region
          _
        $region56: #{tpu_custom_call.1} parent=11 // pred_fallthru
          _
        // Predicated region
        $region57: #{tpu_custom_call.1} parent=11 // pred_check
          %p482 = pneg %p296
        $region58: #{tpu_custom_call.1} parent=11 // pred_check_branch
          %484 = sbr.rel (%p482) target = $region60
        $region59: #{tpu_custom_call.1} parent=11 // pred_region
          _
        $region60: #{tpu_custom_call.1} parent=11 // pred_fallthru
          _
        // Predicated region
        $region61: #{tpu_custom_call.1} parent=11 // pred_check
          %p485 = pneg %p317
        $region62: #{tpu_custom_call.1} parent=11 // pred_check_branch
          %487 = sbr.rel (%p485) target = $region64
        $region63: #{tpu_custom_call.1} parent=11 // pred_region
          _
        $region64: #{tpu_custom_call.1} parent=11 // pred_fallthru
          _
        // Predicated region
        $region65: #{tpu_custom_call.1} parent=11 // pred_check
          %p488 = pneg %p338
        $region66: #{tpu_custom_call.1} parent=11 // pred_check_branch
          %490 = sbr.rel (%p488) target = $region68
        $region67: #{tpu_custom_call.1} parent=11 // pred_region
          %s492 = ssub.s32 512, 512
          %493 = vsyncadd [#allocation7], %s492
          %s494 = sshll.u32 [#allocation6], 4
          %s495 = int_to_ptr.vmem [resolvable:$true] %s494
          %500 = dma.hbm_to_vmem [thread:$0]  %s13, 512, %s495, [#allocation7], 128, 128, 8
        $region68: #{tpu_custom_call.1} parent=11 // pred_fallthru
          _
        // Predicated region
        $region69: #{tpu_custom_call.1} parent=11 // pred_check
          %p501 = pneg %p359
        $region70: #{tpu_custom_call.1} parent=11 // pred_check_branch
          %503 = sbr.rel (%p501) target = $region72
        $region71: #{tpu_custom_call.1} parent=11 // pred_region
          _
        $region72: #{tpu_custom_call.1} parent=11 // pred_fallthru
          _
        // Predicated region
        $region73: #{tpu_custom_call.1} parent=11 // pred_check
          %p504 = pneg %p380
        $region74: #{tpu_custom_call.1} parent=11 // pred_check_branch
          %506 = sbr.rel (%p504) target = $region76
        $region75: #{tpu_custom_call.1} parent=11 // pred_region
          _
        $region76: #{tpu_custom_call.1} parent=11 // pred_fallthru
          _
        // Predicated region
        $region77: #{tpu_custom_call.1} parent=11 // pred_check
          %p507 = pneg %p401
        $region78: #{tpu_custom_call.1} parent=11 // pred_check_branch
          %509 = sbr.rel (%p507) target = $region80
        $region79: #{tpu_custom_call.1} parent=11 // pred_region
          _
        $region80: #{tpu_custom_call.1} parent=11 // pred_fallthru
          _
      $region12: #{tpu_custom_call.1} parent=5 // pred_fallthru
        _
      %p510 = scmp.lt.s32.totalorder %s27, 4
      // Predicated region
      $region81: #{tpu_custom_call.1} parent=5 // pred_check
        %p511 = pneg %p510
      $region82: #{tpu_custom_call.1} parent=5 // pred_check_branch
        %513 = sbr.rel (%p511) target = $region84
      $region83: #{tpu_custom_call.1} parent=5 // pred_region
        _
      $region84: #{tpu_custom_call.1} parent=5 // pred_fallthru
        _
      %p514 = scmp.le.s32.totalorder 1, %s27
      %p515 = scmp.lt.s32.totalorder %s27, 5
      %p516 = pnand %p514, %p515
      %p517 = pneg %p516
      // Predicated region
      $region85: #{tpu_custom_call.1} parent=5 // pred_check
        _
      $region86: #{tpu_custom_call.1} parent=5 // pred_check_branch
        %519 = sbr.rel (%p516) target = $region88
      $region87: #{tpu_custom_call.1} parent=5 // pred_region
        %s520 = ssub.s32 %s27, 1
        // Predicated region
        $region89: #{tpu_custom_call.1} parent=87 // pred_check
          %p521 = pneg %p338
        $region90: #{tpu_custom_call.1} parent=87 // pred_check_branch
          %523 = sbr.rel (%p521) target = $region92
        $region91: #{tpu_custom_call.1} parent=87 // pred_region
          %524 = dma.done [#allocation7], 512
        $region92: #{tpu_custom_call.1} parent=87 // pred_fallthru
          _
        %p525 = scmp.lt.s32.totalorder %s36, 1
        %s526 = scalar_select %p525, %s36, 1
        %s527 = smul.addr %s526, 2
        %s528 = smul.addr %s527, 8
        %s529 = scalar_lea.vmem %s0, %s528
        %p530 = pneg %p65
        %p531 = pneg %p62
        %p532 = pneg %p86
        %p533 = pneg %p83
        %p534 = pneg %p107
        %p535 = pneg %p104
        %p536 = pneg %p128
        %p537 = pneg %p125
        %p538 = pneg %p149
        %p539 = pneg %p146
        %p540 = pneg %p170
        %p541 = pneg %p167
        %p542 = pneg %p191
        %p543 = pneg %p188
        %p544 = pneg %p212
        %p545 = pneg %p209
        %p546 = pneg %p233
        %p547 = pneg %p230
        %p548 = pneg %p254
        %p549 = pneg %p251
        %p550 = pneg %p275
        %p551 = pneg %p272
        %p552 = pneg %p296
        %p553 = pneg %p293
        %p554 = pneg %p317
        %p555 = pneg %p314
        %p556 = pneg %p338
        %p557 = pneg %p335
        %p558 = pneg %p359
        %p559 = pneg %p356
        %p560 = pneg %p380
        %p561 = pneg %p377
        %p562 = pneg %p401
        %p563 = pneg %p398
        %p564 = pneg %p429
        %p565 = pneg %p426
        %s566 = sand.u32 %s416, 1
        %s567 = scalar_lea.sflag [#allocation8], %s566
        %s568 = sand.u32 %s416, 1
        %s569 = smul.addr %s568, 8
        %s570 = scalar_lea.vmem [#allocation9], %s569
        %p571 = scmp.lt.s32.totalorder %s36, 1
        %s572 = scalar_select %p571, %s36, 1
        %s573 = smul.addr %s572, 2
        %s574 = smul.addr %s573, 8
        %s575 = scalar_lea.vmem %s0, %s574
        %s576 = smul.u32 %s37, 8
        %p577 = scmp.eq.s32.totalorder %s37, 0
        // Predicated region
        $region93: #{tpu_custom_call.1} parent=87 // pred_check
          %p578 = pneg %p577
        $region94: #{tpu_custom_call.1} parent=87 // pred_check_branch
          %580 = sbr.rel (%p578) target = $region96
        $region95: #{tpu_custom_call.1} parent=87 // pred_region
          %v581 = vld [vmem:[%s575] sm:$0xff]
          %v582 = vld [vmem:[%s575 + $0x8] sm:$0xff]
          %v583 = vld [vmem:[%s1] sm:$0x1]
          %v584 = vld [vmem:[%s2] sm:$0x1]
          %vm585 = vcmask 261120
          %v586 = vsel %vm585, %v581, 0.0
          %587 = vadd.xlane.f32.xlu0 %v586
          %v588 = vpop.xlane.xlu0 %587
          %v589 = vsel %vm585, %v582, 0.0
          %590 = vadd.xlane.f32.xlu0 %v589
          %v591 = vpop.xlane.xlu0 %590
          %v592 = vrcp.pop 32.0
          %v593 = vmul.f32 %v588, %v592
          %v594 = vmul.f32 %v591, %v592
          %v595 = vsub.f32 %v581, %v593
          %v596 = vsub.f32 %v582, %v594
          %v597 = vmul.f32 %v595, %v595
          %v598 = vmul.f32 %v596, %v596
          %v599 = vsel %vm585, %v597, 0.0
          %600 = vadd.xlane.f32.xlu0 %v599
          %v601 = vpop.xlane.xlu0 %600
          %v602 = vsel %vm585, %v598, 0.0
          %603 = vadd.xlane.f32.xlu0 %v602
          %v604 = vpop.xlane.xlu0 %603
          %v605 = vmul.f32 %v601, %v592
          %v606 = vmul.f32 %v604, %v592
          %v607 = vadd.f32 %v605, 1e-05
          %v608 = vadd.f32 %v606, 1e-05
          %v609 = vrsqrt.pop %v607
          %v610 = vrsqrt.pop %v608
          %v611 = vmul.f32 %v595, %v609
          %v612 = vmul.f32 %v596, %v610
          %v614 = vlaneseq
          %v615 = vshrl.u32 %v614, 7
          %v616 = vsub.s32 0, %v615
          %v617 = vrot.slane %v583, %v616
          %v619 = vmul.f32 %v611, %v617
          %v620 = vmul.f32 %v612, %v617
          %v622 = vlaneseq
          %v623 = vshrl.u32 %v622, 7
          %v624 = vsub.s32 0, %v623
          %v625 = vrot.slane %v584, %v624
          %v627 = vadd.f32 %v619, %v625
          %v628 = vadd.f32 %v620, %v625
          %v629 = vld [vmem:[%s3] sm:$0xff]
          %v630 = vld [vmem:[%s3 + $0x8] sm:$0xff]
          %v631 = vld [vmem:[%s3 + $0x10] sm:$0xff]
          %v632 = vld [vmem:[%s3 + $0x18] sm:$0xff]
          %v633 = vld [vmem:[%s4] sm:$0x1]
          %v635 = vlaneseq
          %v636 = vshrl.u32 %v635, 7
          %v637 = vsub.s32 0, %v636
          %v638 = vrot.slane %v633, %v637
          %v641 = vsel %vm585, %v627, 0
          %v644 = vsel %vm585, %v628, 0
          %646 = vmatprep.subr.mxu0 0.0
          %647 = vmatpush1.msra.mxu0 %v629
          %648 = vmatprep.subr.mxu0 0.0
          %649 = vmatpush1.msra.mxu0 %v630
          %650 = vmatprep.subr.mxu0 0.0
          %651 = vmatpush1.msra.mxu0 %v631
          %652 = vmatprep.subr.mxu0 0.0
          %653 = vmatpush1.msra.mxu0 %v632
          %654 = vmatprep.subr.mxu0 0.0
          %655 = vmatpush1.msra.mxu0 0.0
          %656 = vmatprep.subr.mxu0 0.0
          %657 = vmatpush1.msra.mxu0 0.0
          %658 = vmatprep.subr.mxu0 0.0
          %659 = vmatpush1.msra.mxu0 0.0
          %660 = vmatprep.subr.mxu0 0.0
          %661 = vmatpush1.msra.mxu0 0.0
          %662 = vmatprep.subr.mxu0 0.0
          %663 = vmatpush1.msra.mxu0 0.0
          %664 = vmatprep.subr.mxu0 0.0
          %665 = vmatpush1.msra.mxu0 0.0
          %666 = vmatprep.subr.mxu0 0.0
          %667 = vmatpush1.msra.mxu0 0.0
          %668 = vmatprep.subr.mxu0 0.0
          %669 = vmatpush1.msra.mxu0 0.0
          %670 = vmatprep.subr.mxu0 0.0
          %671 = vmatpush1.msra.mxu0 0.0
          %672 = vmatprep.subr.mxu0 0.0
          %673 = vmatpush1.msra.mxu0 0.0
          %674 = vmatprep.subr.mxu0 0.0
          %675 = vmatpush1.msra.mxu0 0.0
          %676 = vmatprep.subr.mxu0 0.0
          %677 = vmatpush1.msra.mxu0 0.0
          %678 = vmatprep.subr.mxu0 0.0
          %679 = vmatpush1.msra.mxu0 0.0
          %680 = vmatprep.subr.mxu0 0.0
          %681 = vmatpush1.msra.mxu0 0.0
          %682 = vmatprep.subr.mxu0 0.0
          %683 = vmatpush1.msra.mxu0 0.0
          %684 = vmatprep.subr.mxu0 0.0
          %685 = vmatpush1.msra.mxu0 0.0
          %686 = vmatprep.subr.mxu0 0.0
          %687 = vmatpush1.msra.mxu0 0.0
          %688 = vmatprep.subr.mxu0 0.0
          %689 = vmatpush1.msra.mxu0 0.0
          %690 = vmatprep.subr.mxu0 0.0
          %691 = vmatpush1.msra.mxu0 0.0
          %692 = vmatprep.subr.mxu0 0.0
          %693 = vmatpush1.msra.mxu0 0.0
          %694 = vmatprep.subr.mxu0 0.0
          %695 = vmatpush1.msra.mxu0 0.0
          %696 = vmatprep.subr.mxu0 0.0
          %697 = vmatpush1.msra.mxu0 0.0
          %698 = vmatprep.subr.mxu0 0.0
          %699 = vmatpush1.msra.mxu0 0.0
          %700 = vmatprep.subr.mxu0 0.0
          %701 = vmatpush1.msra.mxu0 0.0
          %702 = vmatprep.subr.mxu0 0.0
          %703 = vmatpush1.msra.mxu0 0.0
          %704 = vmatprep.subr.mxu0 0.0
          %705 = vmatpush1.msra.mxu0 0.0
          %706 = vmatprep.subr.mxu0 0.0
          %707 = vmatpush1.msra.mxu0 0.0
          %708 = vmatprep.subr.mxu0 0.0
          %709 = vmatpush1.msra.mxu0 0.0
          %710 = vmatprep.mubr.f32.mxu0 0.0
          %711 = vmatmul.mubr.f32.gmra.mrb[0].mxu0 %v641
          %v712 = vpop.f32.mrb[0].mxu0
          %v713 = vadd.f32 %v638, %v712
          %v714 = vpop.f32.mrb[0].mxu0
          %715 = vmatprep.mubr.f32.mxu0 0.0
          %716 = vmatmul.mubr.f32.gmra.mrb[0].mxu0 %v644
          %v717 = vpop.f32.mrb[0].mxu0
          %v718 = vadd.f32 %v638, %v717
          %v719 = vpop.f32.mrb[0].mxu0
          %720 = vdwg.mxu0
          %721 = vst.msk [vmem:[#allocation2] sm:$0xff] %vm585, %v713
          %722 = vst.msk [vmem:[#allocation2 + $0x8] sm:$0xff] %vm585, %v718
          %v723 = vld [vmem:[%s5] sm:$0xff]
          %v724 = vld [vmem:[%s5 + $0x8] sm:$0xff]
          %v725 = vld [vmem:[%s5 + $0x10] sm:$0xff]
          %v726 = vld [vmem:[%s5 + $0x18] sm:$0xff]
          %v727 = vld [vmem:[%s6] sm:$0x1]
          %v729 = vlaneseq
          %v730 = vshrl.u32 %v729, 7
          %v731 = vsub.s32 0, %v730
          %v732 = vrot.slane %v727, %v731
          %734 = vmatprep.subr.mxu0 0.0
          %735 = vmatpush1.msra.mxu0 %v723
          %736 = vmatprep.subr.mxu0 0.0
          %737 = vmatpush1.msra.mxu0 %v724
          %738 = vmatprep.subr.mxu0 0.0
          %739 = vmatpush1.msra.mxu0 %v725
          %740 = vmatprep.subr.mxu0 0.0
          %741 = vmatpush1.msra.mxu0 %v726
          %742 = vmatprep.subr.mxu0 0.0
          %743 = vmatpush1.msra.mxu0 0.0
          %744 = vmatprep.subr.mxu0 0.0
          %745 = vmatpush1.msra.mxu0 0.0
          %746 = vmatprep.subr.mxu0 0.0
          %747 = vmatpush1.msra.mxu0 0.0
          %748 = vmatprep.subr.mxu0 0.0
          %749 = vmatpush1.msra.mxu0 0.0
          %750 = vmatprep.subr.mxu0 0.0
          %751 = vmatpush1.msra.mxu0 0.0
          %752 = vmatprep.subr.mxu0 0.0
          %753 = vmatpush1.msra.mxu0 0.0
          %754 = vmatprep.subr.mxu0 0.0
          %755 = vmatpush1.msra.mxu0 0.0
          %756 = vmatprep.subr.mxu0 0.0
          %757 = vmatpush1.msra.mxu0 0.0
          %758 = vmatprep.subr.mxu0 0.0
          %759 = vmatpush1.msra.mxu0 0.0
          %760 = vmatprep.subr.mxu0 0.0
          %761 = vmatpush1.msra.mxu0 0.0
          %762 = vmatprep.subr.mxu0 0.0
          %763 = vmatpush1.msra.mxu0 0.0
          %764 = vmatprep.subr.mxu0 0.0
          %765 = vmatpush1.msra.mxu0 0.0
          %766 = vmatprep.subr.mxu0 0.0
          %767 = vmatpush1.msra.mxu0 0.0
          %768 = vmatprep.subr.mxu0 0.0
          %769 = vmatpush1.msra.mxu0 0.0
          %770 = vmatprep.subr.mxu0 0.0
          %771 = vmatpush1.msra.mxu0 0.0
          %772 = vmatprep.subr.mxu0 0.0
          %773 = vmatpush1.msra.mxu0 0.0
          %774 = vmatprep.subr.mxu0 0.0
          %775 = vmatpush1.msra.mxu0 0.0
          %776 = vmatprep.subr.mxu0 0.0
          %777 = vmatpush1.msra.mxu0 0.0
          %778 = vmatprep.subr.mxu0 0.0
          %779 = vmatpush1.msra.mxu0 0.0
          %780 = vmatprep.subr.mxu0 0.0
          %781 = vmatpush1.msra.mxu0 0.0
          %782 = vmatprep.subr.mxu0 0.0
          %783 = vmatpush1.msra.mxu0 0.0
          %784 = vmatprep.subr.mxu0 0.0
          %785 = vmatpush1.msra.mxu0 0.0
          %786 = vmatprep.subr.mxu0 0.0
          %787 = vmatpush1.msra.mxu0 0.0
          %788 = vmatprep.subr.mxu0 0.0
          %789 = vmatpush1.msra.mxu0 0.0
          %790 = vmatprep.subr.mxu0 0.0
          %791 = vmatpush1.msra.mxu0 0.0
          %792 = vmatprep.subr.mxu0 0.0
          %793 = vmatpush1.msra.mxu0 0.0
          %794 = vmatprep.subr.mxu0 0.0
          %795 = vmatpush1.msra.mxu0 0.0
          %796 = vmatprep.subr.mxu0 0.0
          %797 = vmatpush1.msra.mxu0 0.0
          %798 = vmatprep.mubr.f32.mxu0 0.0
          %799 = vmatmul.mubr.f32.gmra.mrb[0].mxu0 %v641
          %v800 = vpop.f32.mrb[0].mxu0
          %v801 = vadd.f32 %v732, %v800
          %v802 = vpop.f32.mrb[0].mxu0
          %803 = vmatprep.mubr.f32.mxu0 0.0
          %804 = vmatmul.mubr.f32.gmra.mrb[0].mxu0 %v644
          %v805 = vpop.f32.mrb[0].mxu0
          %v806 = vadd.f32 %v732, %v805
          %v807 = vpop.f32.mrb[0].mxu0
          %808 = vdwg.mxu0
          %809 = vst.msk [vmem:[#allocation3] sm:$0xff] %vm585, %v801
          %810 = vst.msk [vmem:[#allocation3 + $0x8] sm:$0xff] %vm585, %v806
          %v811 = vld [vmem:[%s7] sm:$0xff]
          %v812 = vld [vmem:[%s7 + $0x8] sm:$0xff]
          %v813 = vld [vmem:[%s7 + $0x10] sm:$0xff]
          %v814 = vld [vmem:[%s7 + $0x18] sm:$0xff]
          %v815 = vld [vmem:[%s8] sm:$0x1]
          %v817 = vlaneseq
          %v818 = vshrl.u32 %v817, 7
          %v819 = vsub.s32 0, %v818
          %v820 = vrot.slane %v815, %v819
          %822 = vmatprep.subr.mxu0 0.0
          %823 = vmatpush1.msra.mxu0 %v811
          %824 = vmatprep.subr.mxu0 0.0
          %825 = vmatpush1.msra.mxu0 %v812
          %826 = vmatprep.subr.mxu0 0.0
          %827 = vmatpush1.msra.mxu0 %v813
          %828 = vmatprep.subr.mxu0 0.0
          %829 = vmatpush1.msra.mxu0 %v814
          %830 = vmatprep.subr.mxu0 0.0
          %831 = vmatpush1.msra.mxu0 0.0
          %832 = vmatprep.subr.mxu0 0.0
          %833 = vmatpush1.msra.mxu0 0.0
          %834 = vmatprep.subr.mxu0 0.0
          %835 = vmatpush1.msra.mxu0 0.0
          %836 = vmatprep.subr.mxu0 0.0
          %837 = vmatpush1.msra.mxu0 0.0
          %838 = vmatprep.subr.mxu0 0.0
          %839 = vmatpush1.msra.mxu0 0.0
          %840 = vmatprep.subr.mxu0 0.0
          %841 = vmatpush1.msra.mxu0 0.0
          %842 = vmatprep.subr.mxu0 0.0
          %843 = vmatpush1.msra.mxu0 0.0
          %844 = vmatprep.subr.mxu0 0.0
          %845 = vmatpush1.msra.mxu0 0.0
          %846 = vmatprep.subr.mxu0 0.0
          %847 = vmatpush1.msra.mxu0 0.0
          %848 = vmatprep.subr.mxu0 0.0
          %849 = vmatpush1.msra.mxu0 0.0
          %850 = vmatprep.subr.mxu0 0.0
          %851 = vmatpush1.msra.mxu0 0.0
          %852 = vmatprep.subr.mxu0 0.0
          %853 = vmatpush1.msra.mxu0 0.0
          %854 = vmatprep.subr.mxu0 0.0
          %855 = vmatpush1.msra.mxu0 0.0
          %856 = vmatprep.subr.mxu0 0.0
          %857 = vmatpush1.msra.mxu0 0.0
          %858 = vmatprep.subr.mxu0 0.0
          %859 = vmatpush1.msra.mxu0 0.0
          %860 = vmatprep.subr.mxu0 0.0
          %861 = vmatpush1.msra.mxu0 0.0
          %862 = vmatprep.subr.mxu0 0.0
          %863 = vmatpush1.msra.mxu0 0.0
          %864 = vmatprep.subr.mxu0 0.0
          %865 = vmatpush1.msra.mxu0 0.0
          %866 = vmatprep.subr.mxu0 0.0
          %867 = vmatpush1.msra.mxu0 0.0
          %868 = vmatprep.subr.mxu0 0.0
          %869 = vmatpush1.msra.mxu0 0.0
          %870 = vmatprep.subr.mxu0 0.0
          %871 = vmatpush1.msra.mxu0 0.0
          %872 = vmatprep.subr.mxu0 0.0
          %873 = vmatpush1.msra.mxu0 0.0
          %874 = vmatprep.subr.mxu0 0.0
          %875 = vmatpush1.msra.mxu0 0.0
          %876 = vmatprep.subr.mxu0 0.0
          %877 = vmatpush1.msra.mxu0 0.0
          %878 = vmatprep.subr.mxu0 0.0
          %879 = vmatpush1.msra.mxu0 0.0
          %880 = vmatprep.subr.mxu0 0.0
          %881 = vmatpush1.msra.mxu0 0.0
          %882 = vmatprep.subr.mxu0 0.0
          %883 = vmatpush1.msra.mxu0 0.0
          %884 = vmatprep.subr.mxu0 0.0
          %885 = vmatpush1.msra.mxu0 0.0
          %886 = vmatprep.mubr.f32.mxu0 0.0
          %887 = vmatmul.mubr.f32.gmra.mrb[0].mxu0 %v641
          %v888 = vpop.f32.mrb[0].mxu0
          %v889 = vadd.f32 %v820, %v888
          %v890 = vpop.f32.mrb[0].mxu0
          %891 = vmatprep.mubr.f32.mxu0 0.0
          %892 = vmatmul.mubr.f32.gmra.mrb[0].mxu0 %v644
          %v893 = vpop.f32.mrb[0].mxu0
          %v894 = vadd.f32 %v820, %v893
          %v895 = vpop.f32.mrb[0].mxu0
          %896 = vdwg.mxu0
          %897 = vst.msk [vmem:[#allocation4] sm:$0xff] %vm585, %v889
          %898 = vst.msk [vmem:[#allocation4 + $0x8] sm:$0xff] %vm585, %v894
        $region96: #{tpu_custom_call.1} parent=87 // pred_fallthru
          _
        %s899 = scalar_lea.vmem [#allocation2], %s576
        %v900 = vld [vmem:[%s899] sm:$0xff]
        %v901 = vld [vmem:[#allocation3] sm:$0xff]
        %v902 = vld [vmem:[#allocation3 + $0x8] sm:$0xff]
        %v903 = vld [vmem:[#allocation4] sm:$0xff]
        %v904 = vld [vmem:[#allocation4 + $0x8] sm:$0xff]
        %vm905 = vcmask 64512
        %v907 = vsel %vm905, %v900, 0
        %v910 = vsel %vm905, %v901, 0
        %v913 = vsel %vm905, %v902, 0
        %915 = vmatprep.subr.mxu0 0.0
        %916 = vmatpush1.xpose.msra.mxu0 %v910
        %917 = vmatprep.subr.mxu0 0.0
        %918 = vmatpush1.xpose.msra.mxu0 %v913
        %919 = vmatprep.subr.mxu0 0.0
        %920 = vmatpush1.xpose.msra.mxu0 0.0
        %921 = vmatprep.subr.mxu0 0.0
        %922 = vmatpush1.xpose.msra.mxu0 0.0
        %923 = vmatprep.subr.mxu0 0.0
        %924 = vmatpush1.xpose.msra.mxu0 0.0
        %925 = vmatprep.subr.mxu0 0.0
        %926 = vmatpush1.xpose.msra.mxu0 0.0
        %927 = vmatprep.subr.mxu0 0.0
        %928 = vmatpush1.xpose.msra.mxu0 0.0
        %929 = vmatprep.subr.mxu0 0.0
        %930 = vmatpush1.xpose.msra.mxu0 0.0
        %931 = vmatprep.subr.mxu0 0.0
        %932 = vmatpush1.xpose.msra.mxu0 0.0
        %933 = vmatprep.subr.mxu0 0.0
        %934 = vmatpush1.xpose.msra.mxu0 0.0
        %935 = vmatprep.subr.mxu0 0.0
        %936 = vmatpush1.xpose.msra.mxu0 0.0
        %937 = vmatprep.subr.mxu0 0.0
        %938 = vmatpush1.xpose.msra.mxu0 0.0
        %939 = vmatprep.subr.mxu0 0.0
        %940 = vmatpush1.xpose.msra.mxu0 0.0
        %941 = vmatprep.subr.mxu0 0.0
        %942 = vmatpush1.xpose.msra.mxu0 0.0
        %943 = vmatprep.subr.mxu0 0.0
        %944 = vmatpush1.xpose.msra.mxu0 0.0
        %945 = vmatprep.subr.mxu0 0.0
        %946 = vmatpush1.xpose.msra.mxu0 0.0
        %947 = vmatprep.subr.mxu0 0.0
        %948 = vmatpush1.xpose.msra.mxu0 0.0
        %949 = vmatprep.subr.mxu0 0.0
        %950 = vmatpush1.xpose.msra.mxu0 0.0
        %951 = vmatprep.subr.mxu0 0.0
        %952 = vmatpush1.xpose.msra.mxu0 0.0
        %953 = vmatprep.subr.mxu0 0.0
        %954 = vmatpush1.xpose.msra.mxu0 0.0
        %955 = vmatprep.subr.mxu0 0.0
        %956 = vmatpush1.xpose.msra.mxu0 0.0
        %957 = vmatprep.subr.mxu0 0.0
        %958 = vmatpush1.xpose.msra.mxu0 0.0
        %959 = vmatprep.subr.mxu0 0.0
        %960 = vmatpush1.xpose.msra.mxu0 0.0
        %961 = vmatprep.subr.mxu0 0.0
        %962 = vmatpush1.xpose.msra.mxu0 0.0
        %963 = vmatprep.subr.mxu0 0.0
        %964 = vmatpush1.xpose.msra.mxu0 0.0
        %965 = vmatprep.subr.mxu0 0.0
        %966 = vmatpush1.xpose.msra.mxu0 0.0
        %967 = vmatprep.subr.mxu0 0.0
        %968 = vmatpush1.xpose.msra.mxu0 0.0
        %969 = vmatprep.subr.mxu0 0.0
        %970 = vmatpush1.xpose.msra.mxu0 0.0
        %971 = vmatprep.subr.mxu0 0.0
        %972 = vmatpush1.xpose.msra.mxu0 0.0
        %973 = vmatprep.subr.mxu0 0.0
        %974 = vmatpush1.xpose.msra.mxu0 0.0
        %975 = vmatprep.subr.mxu0 0.0
        %976 = vmatpush1.xpose.msra.mxu0 0.0
        %977 = vmatprep.subr.mxu0 0.0
        %978 = vmatpush1.xpose.msra.mxu0 0.0
        %979 = vmatprep.mubr.f32.mxu0 0.0
        %980 = vmatmul.mubr.f32.gmra.mrb[0].mxu0 %v907
        %v981 = vpop.f32.mrb[0].mxu0
        %v982 = vadd.f32 0.0, %v981
        %v983 = vpop.f32.mrb[0].mxu0
        %984 = vdwg.mxu0
        %vm985 = vcmask 130048
        %v986 = vsel %vm985, %v982, -inf
        %987 = vmax.xlane.f32.xlu0 %v986
        %v988 = vpop.xlane.xlu0 %987
        %v989 = vsub.f32 %v982, %v988
        %v990 = vmul.f32 %v989, 1.442695
        %v991 = vpow.pop %v990
        %v992 = vsel %vm985, %v991, 0.0
        %993 = vadd.xlane.f32.xlu0 %v992
        %v994 = vpop.xlane.xlu0 %993
        %v995 = vrcp.pop %v994
        %v996 = vmul.f32 %v991, %v995
        %v998 = vsel %vm985, %v996, 0
        %1000 = vmatprep.subr.mxu0 0.0
        %1001 = vmatpush1.msra.mxu0 %v903
        %1002 = vmatprep.subr.mxu0 0.0
        %1003 = vmatpush1.msra.mxu0 %v904
        %1004 = vmatprep.subr.mxu0 0.0
        %1005 = vmatpush1.msra.mxu0 0.0
        %1006 = vmatprep.subr.mxu0 0.0
        %1007 = vmatpush1.msra.mxu0 0.0
        %1008 = vmatprep.subr.mxu0 0.0
        %1009 = vmatpush1.msra.mxu0 0.0
        %1010 = vmatprep.subr.mxu0 0.0
        %1011 = vmatpush1.msra.mxu0 0.0
        %1012 = vmatprep.subr.mxu0 0.0
        %1013 = vmatpush1.msra.mxu0 0.0
        %1014 = vmatprep.subr.mxu0 0.0
        %1015 = vmatpush1.msra.mxu0 0.0
        %1016 = vmatprep.subr.mxu0 0.0
        %1017 = vmatpush1.msra.mxu0 0.0
        %1018 = vmatprep.subr.mxu0 0.0
        %1019 = vmatpush1.msra.mxu0 0.0
        %1020 = vmatprep.subr.mxu0 0.0
        %1021 = vmatpush1.msra.mxu0 0.0
        %1022 = vmatprep.subr.mxu0 0.0
        %1023 = vmatpush1.msra.mxu0 0.0
        %1024 = vmatprep.subr.mxu0 0.0
        %1025 = vmatpush1.msra.mxu0 0.0
        %1026 = vmatprep.subr.mxu0 0.0
        %1027 = vmatpush1.msra.mxu0 0.0
        %1028 = vmatprep.subr.mxu0 0.0
        %1029 = vmatpush1.msra.mxu0 0.0
        %1030 = vmatprep.subr.mxu0 0.0
        %1031 = vmatpush1.msra.mxu0 0.0
        %1032 = vmatprep.subr.mxu0 0.0
        %1033 = vmatpush1.msra.mxu0 0.0
        %1034 = vmatprep.subr.mxu0 0.0
        %1035 = vmatpush1.msra.mxu0 0.0
        %1036 = vmatprep.subr.mxu0 0.0
        %1037 = vmatpush1.msra.mxu0 0.0
        %1038 = vmatprep.subr.mxu0 0.0
        %1039 = vmatpush1.msra.mxu0 0.0
        %1040 = vmatprep.subr.mxu0 0.0
        %1041 = vmatpush1.msra.mxu0 0.0
        %1042 = vmatprep.subr.mxu0 0.0
        %1043 = vmatpush1.msra.mxu0 0.0
        %1044 = vmatprep.subr.mxu0 0.0
        %1045 = vmatpush1.msra.mxu0 0.0
        %1046 = vmatprep.subr.mxu0 0.0
        %1047 = vmatpush1.msra.mxu0 0.0
        %1048 = vmatprep.subr.mxu0 0.0
        %1049 = vmatpush1.msra.mxu0 0.0
        %1050 = vmatprep.subr.mxu0 0.0
        %1051 = vmatpush1.msra.mxu0 0.0
        %1052 = vmatprep.subr.mxu0 0.0
        %1053 = vmatpush1.msra.mxu0 0.0
        %1054 = vmatprep.subr.mxu0 0.0
        %1055 = vmatpush1.msra.mxu0 0.0
        %1056 = vmatprep.subr.mxu0 0.0
        %1057 = vmatpush1.msra.mxu0 0.0
        %1058 = vmatprep.subr.mxu0 0.0
        %1059 = vmatpush1.msra.mxu0 0.0
        %1060 = vmatprep.subr.mxu0 0.0
        %1061 = vmatpush1.msra.mxu0 0.0
        %1062 = vmatprep.subr.mxu0 0.0
        %1063 = vmatpush1.msra.mxu0 0.0
        %1064 = vmatprep.mubr.f32.mxu0 0.0
        %1065 = vmatmul.mubr.f32.gmra.mrb[0].mxu0 %v998
        %v1066 = vpop.f32.mrb[0].mxu0
        %v1067 = vadd.f32 0.0, %v1066
        %v1068 = vpop.f32.mrb[0].mxu0
        %1069 = vdwg.mxu0
        %1070 = vst.msk [vmem:[#allocation5] sm:$0xff] %vm905, %v1067
        %v1071 = vld [vmem:[#allocation3] sm:$0xff]
        %v1072 = vld [vmem:[#allocation3 + $0x8] sm:$0xff]
        %v1073 = vld [vmem:[#allocation4] sm:$0xff]
        %v1074 = vld [vmem:[#allocation4 + $0x8] sm:$0xff]
        %1075 = vrot.lane.b32.xlu0 %v900, 120
        %v1076 = vpop.permute.xlu0 %1075
        %1079 = vrot.lane.b32.xlu0 %v1071, 120
        %v1080 = vpop.permute.xlu0 %1079
        %1081 = vrot.lane.b32.xlu0 %v1072, 120
        %v1082 = vpop.permute.xlu0 %1081
        %v1083 = vsel %vm905, %v1076, 0
        %v1085 = vsel %vm905, %v1080, 0
        %v1087 = vsel %vm905, %v1082, 0
        %1089 = vmatprep.subr.mxu0 0.0
        %1090 = vmatpush1.xpose.msra.mxu0 %v1085
        %1091 = vmatprep.subr.mxu0 0.0
        %1092 = vmatpush1.xpose.msra.mxu0 %v1087
        %1093 = vmatprep.subr.mxu0 0.0
        %1094 = vmatpush1.xpose.msra.mxu0 0.0
        %1095 = vmatprep.subr.mxu0 0.0
        %1096 = vmatpush1.xpose.msra.mxu0 0.0
        %1097 = vmatprep.subr.mxu0 0.0
        %1098 = vmatpush1.xpose.msra.mxu0 0.0
        %1099 = vmatprep.subr.mxu0 0.0
        %1100 = vmatpush1.xpose.msra.mxu0 0.0
        %1101 = vmatprep.subr.mxu0 0.0
        %1102 = vmatpush1.xpose.msra.mxu0 0.0
        %1103 = vmatprep.subr.mxu0 0.0
        %1104 = vmatpush1.xpose.msra.mxu0 0.0
        %1105 = vmatprep.subr.mxu0 0.0
        %1106 = vmatpush1.xpose.msra.mxu0 0.0
        %1107 = vmatprep.subr.mxu0 0.0
        %1108 = vmatpush1.xpose.msra.mxu0 0.0
        %1109 = vmatprep.subr.mxu0 0.0
        %1110 = vmatpush1.xpose.msra.mxu0 0.0
        %1111 = vmatprep.subr.mxu0 0.0
        %1112 = vmatpush1.xpose.msra.mxu0 0.0
        %1113 = vmatprep.subr.mxu0 0.0
        %1114 = vmatpush1.xpose.msra.mxu0 0.0
        %1115 = vmatprep.subr.mxu0 0.0
        %1116 = vmatpush1.xpose.msra.mxu0 0.0
        %1117 = vmatprep.subr.mxu0 0.0
        %1118 = vmatpush1.xpose.msra.mxu0 0.0
        %1119 = vmatprep.subr.mxu0 0.0
        %1120 = vmatpush1.xpose.msra.mxu0 0.0
        %1121 = vmatprep.subr.mxu0 0.0
        %1122 = vmatpush1.xpose.msra.mxu0 0.0
        %1123 = vmatprep.subr.mxu0 0.0
        %1124 = vmatpush1.xpose.msra.mxu0 0.0
        %1125 = vmatprep.subr.mxu0 0.0
        %1126 = vmatpush1.xpose.msra.mxu0 0.0
        %1127 = vmatprep.subr.mxu0 0.0
        %1128 = vmatpush1.xpose.msra.mxu0 0.0
        %1129 = vmatprep.subr.mxu0 0.0
        %1130 = vmatpush1.xpose.msra.mxu0 0.0
        %1131 = vmatprep.subr.mxu0 0.0
        %1132 = vmatpush1.xpose.msra.mxu0 0.0
        %1133 = vmatprep.subr.mxu0 0.0
        %1134 = vmatpush1.xpose.msra.mxu0 0.0
        %1135 = vmatprep.subr.mxu0 0.0
        %1136 = vmatpush1.xpose.msra.mxu0 0.0
        %1137 = vmatprep.subr.mxu0 0.0
        %1138 = vmatpush1.xpose.msra.mxu0 0.0
        %1139 = vmatprep.subr.mxu0 0.0
        %1140 = vmatpush1.xpose.msra.mxu0 0.0
        %1141 = vmatprep.subr.mxu0 0.0
        %1142 = vmatpush1.xpose.msra.mxu0 0.0
        %1143 = vmatprep.subr.mxu0 0.0
        %1144 = vmatpush1.xpose.msra.mxu0 0.0
        %1145 = vmatprep.subr.mxu0 0.0
        %1146 = vmatpush1.xpose.msra.mxu0 0.0
        %1147 = vmatprep.subr.mxu0 0.0
        %1148 = vmatpush1.xpose.msra.mxu0 0.0
        %1149 = vmatprep.subr.mxu0 0.0
        %1150 = vmatpush1.xpose.msra.mxu0 0.0
        %1151 = vmatprep.subr.mxu0 0.0
        %1152 = vmatpush1.xpose.msra.mxu0 0.0
        %1153 = vmatprep.mubr.f32.mxu0 0.0
        %1154 = vmatmul.mubr.f32.gmra.mrb[0].mxu0 %v1083
        %v1155 = vpop.f32.mrb[0].mxu0
        %v1156 = vadd.f32 0.0, %v1155
        %v1157 = vpop.f32.mrb[0].mxu0
        %1158 = vdwg.mxu0
        %v1159 = vsel %vm985, %v1156, -inf
        %1160 = vmax.xlane.f32.xlu0 %v1159
        %v1161 = vpop.xlane.xlu0 %1160
        %v1162 = vsub.f32 %v1156, %v1161
        %v1163 = vmul.f32 %v1162, 1.442695
        %v1164 = vpow.pop %v1163
        %v1165 = vsel %vm985, %v1164, 0.0
        %1166 = vadd.xlane.f32.xlu0 %v1165
        %v1167 = vpop.xlane.xlu0 %1166
        %v1168 = vrcp.pop %v1167
        %v1169 = vmul.f32 %v1164, %v1168
        %1172 = vrot.lane.b32.xlu0 %v1073, 120
        %v1173 = vpop.permute.xlu0 %1172
        %1174 = vrot.lane.b32.xlu0 %v1074, 120
        %v1175 = vpop.permute.xlu0 %1174
        %v1179 = vsel %vm985, %v1169, 0
        %1181 = vmatprep.subr.mxu0 0.0
        %1182 = vmatpush1.msra.mxu0 %v1173
        %1183 = vmatprep.subr.mxu0 0.0
        %1184 = vmatpush1.msra.mxu0 %v1175
        %1185 = vmatprep.subr.mxu0 0.0
        %1186 = vmatpush1.msra.mxu0 0.0
        %1187 = vmatprep.subr.mxu0 0.0
        %1188 = vmatpush1.msra.mxu0 0.0
        %1189 = vmatprep.subr.mxu0 0.0
        %1190 = vmatpush1.msra.mxu0 0.0
        %1191 = vmatprep.subr.mxu0 0.0
        %1192 = vmatpush1.msra.mxu0 0.0
        %1193 = vmatprep.subr.mxu0 0.0
        %1194 = vmatpush1.msra.mxu0 0.0
        %1195 = vmatprep.subr.mxu0 0.0
        %1196 = vmatpush1.msra.mxu0 0.0
        %1197 = vmatprep.subr.mxu0 0.0
        %1198 = vmatpush1.msra.mxu0 0.0
        %1199 = vmatprep.subr.mxu0 0.0
        %1200 = vmatpush1.msra.mxu0 0.0
        %1201 = vmatprep.subr.mxu0 0.0
        %1202 = vmatpush1.msra.mxu0 0.0
        %1203 = vmatprep.subr.mxu0 0.0
        %1204 = vmatpush1.msra.mxu0 0.0
        %1205 = vmatprep.subr.mxu0 0.0
        %1206 = vmatpush1.msra.mxu0 0.0
        %1207 = vmatprep.subr.mxu0 0.0
        %1208 = vmatpush1.msra.mxu0 0.0
        %1209 = vmatprep.subr.mxu0 0.0
        %1210 = vmatpush1.msra.mxu0 0.0
        %1211 = vmatprep.subr.mxu0 0.0
        %1212 = vmatpush1.msra.mxu0 0.0
        %1213 = vmatprep.subr.mxu0 0.0
        %1214 = vmatpush1.msra.mxu0 0.0
        %1215 = vmatprep.subr.mxu0 0.0
        %1216 = vmatpush1.msra.mxu0 0.0
        %1217 = vmatprep.subr.mxu0 0.0
        %1218 = vmatpush1.msra.mxu0 0.0
        %1219 = vmatprep.subr.mxu0 0.0
        %1220 = vmatpush1.msra.mxu0 0.0
        %1221 = vmatprep.subr.mxu0 0.0
        %1222 = vmatpush1.msra.mxu0 0.0
        %1223 = vmatprep.subr.mxu0 0.0
        %1224 = vmatpush1.msra.mxu0 0.0
        %1225 = vmatprep.subr.mxu0 0.0
        %1226 = vmatpush1.msra.mxu0 0.0
        %1227 = vmatprep.subr.mxu0 0.0
        %1228 = vmatpush1.msra.mxu0 0.0
        %1229 = vmatprep.subr.mxu0 0.0
        %1230 = vmatpush1.msra.mxu0 0.0
        %1231 = vmatprep.subr.mxu0 0.0
        %1232 = vmatpush1.msra.mxu0 0.0
        %1233 = vmatprep.subr.mxu0 0.0
        %1234 = vmatpush1.msra.mxu0 0.0
        %1235 = vmatprep.subr.mxu0 0.0
        %1236 = vmatpush1.msra.mxu0 0.0
        %1237 = vmatprep.subr.mxu0 0.0
        %1238 = vmatpush1.msra.mxu0 0.0
        %1239 = vmatprep.subr.mxu0 0.0
        %1240 = vmatpush1.msra.mxu0 0.0
        %1241 = vmatprep.subr.mxu0 0.0
        %1242 = vmatpush1.msra.mxu0 0.0
        %1243 = vmatprep.subr.mxu0 0.0
        %1244 = vmatpush1.msra.mxu0 0.0
        %1245 = vmatprep.mubr.f32.mxu0 0.0
        %1246 = vmatmul.mubr.f32.gmra.mrb[0].mxu0 %v1179
        %v1247 = vpop.f32.mrb[0].mxu0
        %v1248 = vadd.f32 0.0, %v1247
        %v1249 = vpop.f32.mrb[0].mxu0
        %1250 = vdwg.mxu0
        %1252 = vrot.lane.b32.xlu0 %v1248, 8
        %v1253 = vpop.permute.xlu0 %1252
        %vm1255 = vcmask 130112
        %1256 = vst.msk [vmem:[#allocation5] sm:$0xff] %vm1255, %v1253
        %v1257 = vld [vmem:[#allocation3] sm:$0xff]
        %v1258 = vld [vmem:[#allocation3 + $0x8] sm:$0xff]
        %v1259 = vld [vmem:[#allocation4] sm:$0xff]
        %v1260 = vld [vmem:[#allocation4 + $0x8] sm:$0xff]
        %1261 = vrot.lane.b32.xlu0 %v900, 112
        %v1262 = vpop.permute.xlu0 %1261
        %1265 = vrot.lane.b32.xlu0 %v1257, 112
        %v1266 = vpop.permute.xlu0 %1265
        %1267 = vrot.lane.b32.xlu0 %v1258, 112
        %v1268 = vpop.permute.xlu0 %1267
        %v1269 = vsel %vm905, %v1262, 0
        %v1271 = vsel %vm905, %v1266, 0
        %v1273 = vsel %vm905, %v1268, 0
        %1275 = vmatprep.subr.mxu0 0.0
        %1276 = vmatpush1.xpose.msra.mxu0 %v1271
        %1277 = vmatprep.subr.mxu0 0.0
        %1278 = vmatpush1.xpose.msra.mxu0 %v1273
        %1279 = vmatprep.subr.mxu0 0.0
        %1280 = vmatpush1.xpose.msra.mxu0 0.0
        %1281 = vmatprep.subr.mxu0 0.0
        %1282 = vmatpush1.xpose.msra.mxu0 0.0
        %1283 = vmatprep.subr.mxu0 0.0
        %1284 = vmatpush1.xpose.msra.mxu0 0.0
        %1285 = vmatprep.subr.mxu0 0.0
        %1286 = vmatpush1.xpose.msra.mxu0 0.0
        %1287 = vmatprep.subr.mxu0 0.0
        %1288 = vmatpush1.xpose.msra.mxu0 0.0
        %1289 = vmatprep.subr.mxu0 0.0
        %1290 = vmatpush1.xpose.msra.mxu0 0.0
        %1291 = vmatprep.subr.mxu0 0.0
        %1292 = vmatpush1.xpose.msra.mxu0 0.0
        %1293 = vmatprep.subr.mxu0 0.0
        %1294 = vmatpush1.xpose.msra.mxu0 0.0
        %1295 = vmatprep.subr.mxu0 0.0
        %1296 = vmatpush1.xpose.msra.mxu0 0.0
        %1297 = vmatprep.subr.mxu0 0.0
        %1298 = vmatpush1.xpose.msra.mxu0 0.0
        %1299 = vmatprep.subr.mxu0 0.0
        %1300 = vmatpush1.xpose.msra.mxu0 0.0
        %1301 = vmatprep.subr.mxu0 0.0
        %1302 = vmatpush1.xpose.msra.mxu0 0.0
        %1303 = vmatprep.subr.mxu0 0.0
        %1304 = vmatpush1.xpose.msra.mxu0 0.0
        %1305 = vmatprep.subr.mxu0 0.0
        %1306 = vmatpush1.xpose.msra.mxu0 0.0
        %1307 = vmatprep.subr.mxu0 0.0
        %1308 = vmatpush1.xpose.msra.mxu0 0.0
        %1309 = vmatprep.subr.mxu0 0.0
        %1310 = vmatpush1.xpose.msra.mxu0 0.0
        %1311 = vmatprep.subr.mxu0 0.0
        %1312 = vmatpush1.xpose.msra.mxu0 0.0
        %1313 = vmatprep.subr.mxu0 0.0
        %1314 = vmatpush1.xpose.msra.mxu0 0.0
        %1315 = vmatprep.subr.mxu0 0.0
        %1316 = vmatpush1.xpose.msra.mxu0 0.0
        %1317 = vmatprep.subr.mxu0 0.0
        %1318 = vmatpush1.xpose.msra.mxu0 0.0
        %1319 = vmatprep.subr.mxu0 0.0
        %1320 = vmatpush1.xpose.msra.mxu0 0.0
        %1321 = vmatprep.subr.mxu0 0.0
        %1322 = vmatpush1.xpose.msra.mxu0 0.0
        %1323 = vmatprep.subr.mxu0 0.0
        %1324 = vmatpush1.xpose.msra.mxu0 0.0
        %1325 = vmatprep.subr.mxu0 0.0
        %1326 = vmatpush1.xpose.msra.mxu0 0.0
        %1327 = vmatprep.subr.mxu0 0.0
        %1328 = vmatpush1.xpose.msra.mxu0 0.0
        %1329 = vmatprep.subr.mxu0 0.0
        %1330 = vmatpush1.xpose.msra.mxu0 0.0
        %1331 = vmatprep.subr.mxu0 0.0
        %1332 = vmatpush1.xpose.msra.mxu0 0.0
        %1333 = vmatprep.subr.mxu0 0.0
        %1334 = vmatpush1.xpose.msra.mxu0 0.0
        %1335 = vmatprep.subr.mxu0 0.0
        %1336 = vmatpush1.xpose.msra.mxu0 0.0
        %1337 = vmatprep.subr.mxu0 0.0
        %1338 = vmatpush1.xpose.msra.mxu0 0.0
        %1339 = vmatprep.mubr.f32.mxu0 0.0
        %1340 = vmatmul.mubr.f32.gmra.mrb[0].mxu0 %v1269
        %v1341 = vpop.f32.mrb[0].mxu0
        %v1342 = vadd.f32 0.0, %v1341
        %v1343 = vpop.f32.mrb[0].mxu0
        %1344 = vdwg.mxu0
        %v1345 = vsel %vm985, %v1342, -inf
        %1346 = vmax.xlane.f32.xlu0 %v1345
        %v1347 = vpop.xlane.xlu0 %1346
        %v1348 = vsub.f32 %v1342, %v1347
        %v1349 = vmul.f32 %v1348, 1.442695
        %v1350 = vpow.pop %v1349
        %v1351 = vsel %vm985, %v1350, 0.0
        %1352 = vadd.xlane.f32.xlu0 %v1351
        %v1353 = vpop.xlane.xlu0 %1352
        %v1354 = vrcp.pop %v1353
        %v1355 = vmul.f32 %v1350, %v1354
        %1358 = vrot.lane.b32.xlu0 %v1259, 112
        %v1359 = vpop.permute.xlu0 %1358
        %1360 = vrot.lane.b32.xlu0 %v1260, 112
        %v1361 = vpop.permute.xlu0 %1360
        %v1365 = vsel %vm985, %v1355, 0
        %1367 = vmatprep.subr.mxu0 0.0
        %1368 = vmatpush1.msra.mxu0 %v1359
        %1369 = vmatprep.subr.mxu0 0.0
        %1370 = vmatpush1.msra.mxu0 %v1361
        %1371 = vmatprep.subr.mxu0 0.0
        %1372 = vmatpush1.msra.mxu0 0.0
        %1373 = vmatprep.subr.mxu0 0.0
        %1374 = vmatpush1.msra.mxu0 0.0
        %1375 = vmatprep.subr.mxu0 0.0
        %1376 = vmatpush1.msra.mxu0 0.0
        %1377 = vmatprep.subr.mxu0 0.0
        %1378 = vmatpush1.msra.mxu0 0.0
        %1379 = vmatprep.subr.mxu0 0.0
        %1380 = vmatpush1.msra.mxu0 0.0
        %1381 = vmatprep.subr.mxu0 0.0
        %1382 = vmatpush1.msra.mxu0 0.0
        %1383 = vmatprep.subr.mxu0 0.0
        %1384 = vmatpush1.msra.mxu0 0.0
        %1385 = vmatprep.subr.mxu0 0.0
        %1386 = vmatpush1.msra.mxu0 0.0
        %1387 = vmatprep.subr.mxu0 0.0
        %1388 = vmatpush1.msra.mxu0 0.0
        %1389 = vmatprep.subr.mxu0 0.0
        %1390 = vmatpush1.msra.mxu0 0.0
        %1391 = vmatprep.subr.mxu0 0.0
        %1392 = vmatpush1.msra.mxu0 0.0
        %1393 = vmatprep.subr.mxu0 0.0
        %1394 = vmatpush1.msra.mxu0 0.0
        %1395 = vmatprep.subr.mxu0 0.0
        %1396 = vmatpush1.msra.mxu0 0.0
        %1397 = vmatprep.subr.mxu0 0.0
        %1398 = vmatpush1.msra.mxu0 0.0
        %1399 = vmatprep.subr.mxu0 0.0
        %1400 = vmatpush1.msra.mxu0 0.0
        %1401 = vmatprep.subr.mxu0 0.0
        %1402 = vmatpush1.msra.mxu0 0.0
        %1403 = vmatprep.subr.mxu0 0.0
        %1404 = vmatpush1.msra.mxu0 0.0
        %1405 = vmatprep.subr.mxu0 0.0
        %1406 = vmatpush1.msra.mxu0 0.0
        %1407 = vmatprep.subr.mxu0 0.0
        %1408 = vmatpush1.msra.mxu0 0.0
        %1409 = vmatprep.subr.mxu0 0.0
        %1410 = vmatpush1.msra.mxu0 0.0
        %1411 = vmatprep.subr.mxu0 0.0
        %1412 = vmatpush1.msra.mxu0 0.0
        %1413 = vmatprep.subr.mxu0 0.0
        %1414 = vmatpush1.msra.mxu0 0.0
        %1415 = vmatprep.subr.mxu0 0.0
        %1416 = vmatpush1.msra.mxu0 0.0
        %1417 = vmatprep.subr.mxu0 0.0
        %1418 = vmatpush1.msra.mxu0 0.0
        %1419 = vmatprep.subr.mxu0 0.0
        %1420 = vmatpush1.msra.mxu0 0.0
        %1421 = vmatprep.subr.mxu0 0.0
        %1422 = vmatpush1.msra.mxu0 0.0
        %1423 = vmatprep.subr.mxu0 0.0
        %1424 = vmatpush1.msra.mxu0 0.0
        %1425 = vmatprep.subr.mxu0 0.0
        %1426 = vmatpush1.msra.mxu0 0.0
        %1427 = vmatprep.subr.mxu0 0.0
        %1428 = vmatpush1.msra.mxu0 0.0
        %1429 = vmatprep.subr.mxu0 0.0
        %1430 = vmatpush1.msra.mxu0 0.0
        %1431 = vmatprep.mubr.f32.mxu0 0.0
        %1432 = vmatmul.mubr.f32.gmra.mrb[0].mxu0 %v1365
        %v1433 = vpop.f32.mrb[0].mxu0
        %v1434 = vadd.f32 0.0, %v1433
        %v1435 = vpop.f32.mrb[0].mxu0
        %1436 = vdwg.mxu0
        %1438 = vrot.lane.b32.xlu0 %v1434, 16
        %v1439 = vpop.permute.xlu0 %1438
        %vm1441 = vcmask 195712
        %1442 = vst.msk [vmem:[#allocation5] sm:$0xff] %vm1441, %v1439
        %v1443 = vld [vmem:[#allocation3] sm:$0xff]
        %v1444 = vld [vmem:[#allocation3 + $0x8] sm:$0xff]
        %v1445 = vld [vmem:[#allocation4] sm:$0xff]
        %v1446 = vld [vmem:[#allocation4 + $0x8] sm:$0xff]
        %1447 = vrot.lane.b32.xlu0 %v900, 104
        %v1448 = vpop.permute.xlu0 %1447
        %1451 = vrot.lane.b32.xlu0 %v1443, 104
        %v1452 = vpop.permute.xlu0 %1451
        %1453 = vrot.lane.b32.xlu0 %v1444, 104
        %v1454 = vpop.permute.xlu0 %1453
        %v1455 = vsel %vm905, %v1448, 0
        %v1457 = vsel %vm905, %v1452, 0
        %v1459 = vsel %vm905, %v1454, 0
        %1461 = vmatprep.subr.mxu0 0.0
        %1462 = vmatpush1.xpose.msra.mxu0 %v1457
        %1463 = vmatprep.subr.mxu0 0.0
        %1464 = vmatpush1.xpose.msra.mxu0 %v1459
        %1465 = vmatprep.subr.mxu0 0.0
        %1466 = vmatpush1.xpose.msra.mxu0 0.0
        %1467 = vmatprep.subr.mxu0 0.0
        %1468 = vmatpush1.xpose.msra.mxu0 0.0
        %1469 = vmatprep.subr.mxu0 0.0
        %1470 = vmatpush1.xpose.msra.mxu0 0.0
        %1471 = vmatprep.subr.mxu0 0.0
        %1472 = vmatpush1.xpose.msra.mxu0 0.0
        %1473 = vmatprep.subr.mxu0 0.0
        %1474 = vmatpush1.xpose.msra.mxu0 0.0
        %1475 = vmatprep.subr.mxu0 0.0
        %1476 = vmatpush1.xpose.msra.mxu0 0.0
        %1477 = vmatprep.subr.mxu0 0.0
        %1478 = vmatpush1.xpose.msra.mxu0 0.0
        %1479 = vmatprep.subr.mxu0 0.0
        %1480 = vmatpush1.xpose.msra.mxu0 0.0
        %1481 = vmatprep.subr.mxu0 0.0
        %1482 = vmatpush1.xpose.msra.mxu0 0.0
        %1483 = vmatprep.subr.mxu0 0.0
        %1484 = vmatpush1.xpose.msra.mxu0 0.0
        %1485 = vmatprep.subr.mxu0 0.0
        %1486 = vmatpush1.xpose.msra.mxu0 0.0
        %1487 = vmatprep.subr.mxu0 0.0
        %1488 = vmatpush1.xpose.msra.mxu0 0.0
        %1489 = vmatprep.subr.mxu0 0.0
        %1490 = vmatpush1.xpose.msra.mxu0 0.0
        %1491 = vmatprep.subr.mxu0 0.0
        %1492 = vmatpush1.xpose.msra.mxu0 0.0
        %1493 = vmatprep.subr.mxu0 0.0
        %1494 = vmatpush1.xpose.msra.mxu0 0.0
        %1495 = vmatprep.subr.mxu0 0.0
        %1496 = vmatpush1.xpose.msra.mxu0 0.0
        %1497 = vmatprep.subr.mxu0 0.0
        %1498 = vmatpush1.xpose.msra.mxu0 0.0
        %1499 = vmatprep.subr.mxu0 0.0
        %1500 = vmatpush1.xpose.msra.mxu0 0.0
        %1501 = vmatprep.subr.mxu0 0.0
        %1502 = vmatpush1.xpose.msra.mxu0 0.0
        %1503 = vmatprep.subr.mxu0 0.0
        %1504 = vmatpush1.xpose.msra.mxu0 0.0
        %1505 = vmatprep.subr.mxu0 0.0
        %1506 = vmatpush1.xpose.msra.mxu0 0.0
        %1507 = vmatprep.subr.mxu0 0.0
        %1508 = vmatpush1.xpose.msra.mxu0 0.0
        %1509 = vmatprep.subr.mxu0 0.0
        %1510 = vmatpush1.xpose.msra.mxu0 0.0
        %1511 = vmatprep.subr.mxu0 0.0
        %1512 = vmatpush1.xpose.msra.mxu0 0.0
        %1513 = vmatprep.subr.mxu0 0.0
        %1514 = vmatpush1.xpose.msra.mxu0 0.0
        %1515 = vmatprep.subr.mxu0 0.0
        %1516 = vmatpush1.xpose.msra.mxu0 0.0
        %1517 = vmatprep.subr.mxu0 0.0
        %1518 = vmatpush1.xpose.msra.mxu0 0.0
        %1519 = vmatprep.subr.mxu0 0.0
        %1520 = vmatpush1.xpose.msra.mxu0 0.0
        %1521 = vmatprep.subr.mxu0 0.0
        %1522 = vmatpush1.xpose.msra.mxu0 0.0
        %1523 = vmatprep.subr.mxu0 0.0
        %1524 = vmatpush1.xpose.msra.mxu0 0.0
        %1525 = vmatprep.mubr.f32.mxu0 0.0
        %1526 = vmatmul.mubr.f32.gmra.mrb[0].mxu0 %v1455
        %v1527 = vpop.f32.mrb[0].mxu0
        %v1528 = vadd.f32 0.0, %v1527
        %v1529 = vpop.f32.mrb[0].mxu0
        %1530 = vdwg.mxu0
        %v1531 = vsel %vm985, %v1528, -inf
        %1532 = vmax.xlane.f32.xlu0 %v1531
        %v1533 = vpop.xlane.xlu0 %1532
        %v1534 = vsub.f32 %v1528, %v1533
        %v1535 = vmul.f32 %v1534, 1.442695
        %v1536 = vpow.pop %v1535
        %v1537 = vsel %vm985, %v1536, 0.0
        %1538 = vadd.xlane.f32.xlu0 %v1537
        %v1539 = vpop.xlane.xlu0 %1538
        %v1540 = vrcp.pop %v1539
        %v1541 = vmul.f32 %v1536, %v1540
        %1544 = vrot.lane.b32.xlu0 %v1445, 104
        %v1545 = vpop.permute.xlu0 %1544
        %1546 = vrot.lane.b32.xlu0 %v1446, 104
        %v1547 = vpop.permute.xlu0 %1546
        %v1551 = vsel %vm985, %v1541, 0
        %1553 = vmatprep.subr.mxu0 0.0
        %1554 = vmatpush1.msra.mxu0 %v1545
        %1555 = vmatprep.subr.mxu0 0.0
        %1556 = vmatpush1.msra.mxu0 %v1547
        %1557 = vmatprep.subr.mxu0 0.0
        %1558 = vmatpush1.msra.mxu0 0.0
        %1559 = vmatprep.subr.mxu0 0.0
        %1560 = vmatpush1.msra.mxu0 0.0
        %1561 = vmatprep.subr.mxu0 0.0
        %1562 = vmatpush1.msra.mxu0 0.0
        %1563 = vmatprep.subr.mxu0 0.0
        %1564 = vmatpush1.msra.mxu0 0.0
        %1565 = vmatprep.subr.mxu0 0.0
        %1566 = vmatpush1.msra.mxu0 0.0
        %1567 = vmatprep.subr.mxu0 0.0
        %1568 = vmatpush1.msra.mxu0 0.0
        %1569 = vmatprep.subr.mxu0 0.0
        %1570 = vmatpush1.msra.mxu0 0.0
        %1571 = vmatprep.subr.mxu0 0.0
        %1572 = vmatpush1.msra.mxu0 0.0
        %1573 = vmatprep.subr.mxu0 0.0
        %1574 = vmatpush1.msra.mxu0 0.0
        %1575 = vmatprep.subr.mxu0 0.0
        %1576 = vmatpush1.msra.mxu0 0.0
        %1577 = vmatprep.subr.mxu0 0.0
        %1578 = vmatpush1.msra.mxu0 0.0
        %1579 = vmatprep.subr.mxu0 0.0
        %1580 = vmatpush1.msra.mxu0 0.0
        %1581 = vmatprep.subr.mxu0 0.0
        %1582 = vmatpush1.msra.mxu0 0.0
        %1583 = vmatprep.subr.mxu0 0.0
        %1584 = vmatpush1.msra.mxu0 0.0
        %1585 = vmatprep.subr.mxu0 0.0
        %1586 = vmatpush1.msra.mxu0 0.0
        %1587 = vmatprep.subr.mxu0 0.0
        %1588 = vmatpush1.msra.mxu0 0.0
        %1589 = vmatprep.subr.mxu0 0.0
        %1590 = vmatpush1.msra.mxu0 0.0
        %1591 = vmatprep.subr.mxu0 0.0
        %1592 = vmatpush1.msra.mxu0 0.0
        %1593 = vmatprep.subr.mxu0 0.0
        %1594 = vmatpush1.msra.mxu0 0.0
        %1595 = vmatprep.subr.mxu0 0.0
        %1596 = vmatpush1.msra.mxu0 0.0
        %1597 = vmatprep.subr.mxu0 0.0
        %1598 = vmatpush1.msra.mxu0 0.0
        %1599 = vmatprep.subr.mxu0 0.0
        %1600 = vmatpush1.msra.mxu0 0.0
        %1601 = vmatprep.subr.mxu0 0.0
        %1602 = vmatpush1.msra.mxu0 0.0
        %1603 = vmatprep.subr.mxu0 0.0
        %1604 = vmatpush1.msra.mxu0 0.0
        %1605 = vmatprep.subr.mxu0 0.0
        %1606 = vmatpush1.msra.mxu0 0.0
        %1607 = vmatprep.subr.mxu0 0.0
        %1608 = vmatpush1.msra.mxu0 0.0
        %1609 = vmatprep.subr.mxu0 0.0
        %1610 = vmatpush1.msra.mxu0 0.0
        %1611 = vmatprep.subr.mxu0 0.0
        %1612 = vmatpush1.msra.mxu0 0.0
        %1613 = vmatprep.subr.mxu0 0.0
        %1614 = vmatpush1.msra.mxu0 0.0
        %1615 = vmatprep.subr.mxu0 0.0
        %1616 = vmatpush1.msra.mxu0 0.0
        %1617 = vmatprep.mubr.f32.mxu0 0.0
        %1618 = vmatmul.mubr.f32.gmra.mrb[0].mxu0 %v1551
        %v1619 = vpop.f32.mrb[0].mxu0
        %v1620 = vadd.f32 0.0, %v1619
        %v1621 = vpop.f32.mrb[0].mxu0
        %1622 = vdwg.mxu0
        %1624 = vrot.lane.b32.xlu0 %v1620, 24
        %v1625 = vpop.permute.xlu0 %1624
        %vm1627 = vcmask 261312
        %1628 = vst.msk [vmem:[#allocation5] sm:$0xff] %vm1627, %v1625
        %v1629 = vld [vmem:[#allocation5] sm:$0xff]
        %v1630 = vld [vmem:[%s9] sm:$0xff]
        %v1631 = vld [vmem:[%s9 + $0x8] sm:$0xff]
        %v1632 = vld [vmem:[%s9 + $0x10] sm:$0xff]
        %v1633 = vld [vmem:[%s9 + $0x18] sm:$0xff]
        %v1634 = vld [vmem:[%s10] sm:$0x1]
        %v1636 = vlaneseq
        %v1637 = vshrl.u32 %v1636, 7
        %v1638 = vsub.s32 0, %v1637
        %v1639 = vrot.slane %v1634, %v1638
        %vm1641 = vcmask 261120
        %v1643 = vsel %vm1641, %v1629, 0
        %1645 = vmatprep.subr.mxu0 0.0
        %1646 = vmatpush1.msra.mxu0 %v1630
        %1647 = vmatprep.subr.mxu0 0.0
        %1648 = vmatpush1.msra.mxu0 %v1631
        %1649 = vmatprep.subr.mxu0 0.0
        %1650 = vmatpush1.msra.mxu0 %v1632
        %1651 = vmatprep.subr.mxu0 0.0
        %1652 = vmatpush1.msra.mxu0 %v1633
        %1653 = vmatprep.subr.mxu0 0.0
        %1654 = vmatpush1.msra.mxu0 0.0
        %1655 = vmatprep.subr.mxu0 0.0
        %1656 = vmatpush1.msra.mxu0 0.0
        %1657 = vmatprep.subr.mxu0 0.0
        %1658 = vmatpush1.msra.mxu0 0.0
        %1659 = vmatprep.subr.mxu0 0.0
        %1660 = vmatpush1.msra.mxu0 0.0
        %1661 = vmatprep.subr.mxu0 0.0
        %1662 = vmatpush1.msra.mxu0 0.0
        %1663 = vmatprep.subr.mxu0 0.0
        %1664 = vmatpush1.msra.mxu0 0.0
        %1665 = vmatprep.subr.mxu0 0.0
        %1666 = vmatpush1.msra.mxu0 0.0
        %1667 = vmatprep.subr.mxu0 0.0
        %1668 = vmatpush1.msra.mxu0 0.0
        %1669 = vmatprep.subr.mxu0 0.0
        %1670 = vmatpush1.msra.mxu0 0.0
        %1671 = vmatprep.subr.mxu0 0.0
        %1672 = vmatpush1.msra.mxu0 0.0
        %1673 = vmatprep.subr.mxu0 0.0
        %1674 = vmatpush1.msra.mxu0 0.0
        %1675 = vmatprep.subr.mxu0 0.0
        %1676 = vmatpush1.msra.mxu0 0.0
        %1677 = vmatprep.subr.mxu0 0.0
        %1678 = vmatpush1.msra.mxu0 0.0
        %1679 = vmatprep.subr.mxu0 0.0
        %1680 = vmatpush1.msra.mxu0 0.0
        %1681 = vmatprep.subr.mxu0 0.0
        %1682 = vmatpush1.msra.mxu0 0.0
        %1683 = vmatprep.subr.mxu0 0.0
        %1684 = vmatpush1.msra.mxu0 0.0
        %1685 = vmatprep.subr.mxu0 0.0
        %1686 = vmatpush1.msra.mxu0 0.0
        %1687 = vmatprep.subr.mxu0 0.0
        %1688 = vmatpush1.msra.mxu0 0.0
        %1689 = vmatprep.subr.mxu0 0.0
        %1690 = vmatpush1.msra.mxu0 0.0
        %1691 = vmatprep.subr.mxu0 0.0
        %1692 = vmatpush1.msra.mxu0 0.0
        %1693 = vmatprep.subr.mxu0 0.0
        %1694 = vmatpush1.msra.mxu0 0.0
        %1695 = vmatprep.subr.mxu0 0.0
        %1696 = vmatpush1.msra.mxu0 0.0
        %1697 = vmatprep.subr.mxu0 0.0
        %1698 = vmatpush1.msra.mxu0 0.0
        %1699 = vmatprep.subr.mxu0 0.0
        %1700 = vmatpush1.msra.mxu0 0.0
        %1701 = vmatprep.subr.mxu0 0.0
        %1702 = vmatpush1.msra.mxu0 0.0
        %1703 = vmatprep.subr.mxu0 0.0
        %1704 = vmatpush1.msra.mxu0 0.0
        %1705 = vmatprep.subr.mxu0 0.0
        %1706 = vmatpush1.msra.mxu0 0.0
        %1707 = vmatprep.subr.mxu0 0.0
        %1708 = vmatpush1.msra.mxu0 0.0
        %1709 = vmatprep.mubr.f32.mxu0 0.0
        %1710 = vmatmul.mubr.f32.gmra.mrb[0].mxu0 %v1643
        %v1711 = vpop.f32.mrb[0].mxu0
        %v1712 = vadd.f32 %v1639, %v1711
        %v1713 = vpop.f32.mrb[0].mxu0
        %1714 = vdwg.mxu0
        %s1715 = scalar_lea.vmem %s575, %s576
        %v1716 = vld [vmem:[%s1715] sm:$0xff]
        %v1717 = vadd.f32 %v1716, %v1712
        %v1718 = vld [vmem:[%s11] sm:$0x1]
        %v1719 = vld [vmem:[%s12] sm:$0x1]
        %v1720 = vsel %vm1641, %v1717, 0.0
        %1721 = vadd.xlane.f32.xlu0 %v1720
        %v1722 = vpop.xlane.xlu0 %1721
        %v1723 = vrcp.pop 32.0
        %v1724 = vmul.f32 %v1722, %v1723
        %v1725 = vsub.f32 %v1717, %v1724
        %v1726 = vmul.f32 %v1725, %v1725
        %v1727 = vsel %vm1641, %v1726, 0.0
        %1728 = vadd.xlane.f32.xlu0 %v1727
        %v1729 = vpop.xlane.xlu0 %1728
        %v1730 = vmul.f32 %v1729, %v1723
        %v1731 = vadd.f32 %v1730, 1e-05
        %v1732 = vrsqrt.pop %v1731
        %v1733 = vmul.f32 %v1725, %v1732
        %v1735 = vlaneseq
        %v1736 = vshrl.u32 %v1735, 7
        %v1737 = vsub.s32 0, %v1736
        %v1738 = vrot.slane %v1718, %v1737
        %v1740 = vmul.f32 %v1733, %v1738
        %v1742 = vlaneseq
        %v1743 = vshrl.u32 %v1742, 7
        %v1744 = vsub.s32 0, %v1743
        %v1745 = vrot.slane %v1719, %v1744
        %v1747 = vadd.f32 %v1740, %v1745
        %v1748 = vld [vmem:[#allocation6] sm:$0xff]
        %v1749 = vld [vmem:[#allocation6 + $0x8] sm:$0xff]
        %v1750 = vld [vmem:[#allocation6 + $0x10] sm:$0xff]
        %v1751 = vld [vmem:[#allocation6 + $0x18] sm:$0xff]
        %v1752 = vld [vmem:[%s14] sm:$0x1]
        %v1754 = vlaneseq
        %v1755 = vshrl.u32 %v1754, 7
        %v1756 = vsub.s32 0, %v1755
        %v1757 = vrot.slane %v1752, %v1756
        %v1760 = vsel %vm1641, %v1747, 0
        %1762 = vmatprep.subr.mxu0 0.0
        %1763 = vmatpush1.msra.mxu0 %v1748
        %1764 = vmatprep.subr.mxu0 0.0
        %1765 = vmatpush1.msra.mxu0 %v1749
        %1766 = vmatprep.subr.mxu0 0.0
        %1767 = vmatpush1.msra.mxu0 %v1750
        %1768 = vmatprep.subr.mxu0 0.0
        %1769 = vmatpush1.msra.mxu0 %v1751
        %1770 = vmatprep.subr.mxu0 0.0
        %1771 = vmatpush1.msra.mxu0 0.0
        %1772 = vmatprep.subr.mxu0 0.0
        %1773 = vmatpush1.msra.mxu0 0.0
        %1774 = vmatprep.subr.mxu0 0.0
        %1775 = vmatpush1.msra.mxu0 0.0
        %1776 = vmatprep.subr.mxu0 0.0
        %1777 = vmatpush1.msra.mxu0 0.0
        %1778 = vmatprep.subr.mxu0 0.0
        %1779 = vmatpush1.msra.mxu0 0.0
        %1780 = vmatprep.subr.mxu0 0.0
        %1781 = vmatpush1.msra.mxu0 0.0
        %1782 = vmatprep.subr.mxu0 0.0
        %1783 = vmatpush1.msra.mxu0 0.0
        %1784 = vmatprep.subr.mxu0 0.0
        %1785 = vmatpush1.msra.mxu0 0.0
        %1786 = vmatprep.subr.mxu0 0.0
        %1787 = vmatpush1.msra.mxu0 0.0
        %1788 = vmatprep.subr.mxu0 0.0
        %1789 = vmatpush1.msra.mxu0 0.0
        %1790 = vmatprep.subr.mxu0 0.0
        %1791 = vmatpush1.msra.mxu0 0.0
        %1792 = vmatprep.subr.mxu0 0.0
        %1793 = vmatpush1.msra.mxu0 0.0
        %1794 = vmatprep.subr.mxu0 0.0
        %1795 = vmatpush1.msra.mxu0 0.0
        %1796 = vmatprep.subr.mxu0 0.0
        %1797 = vmatpush1.msra.mxu0 0.0
        %1798 = vmatprep.subr.mxu0 0.0
        %1799 = vmatpush1.msra.mxu0 0.0
        %1800 = vmatprep.subr.mxu0 0.0
        %1801 = vmatpush1.msra.mxu0 0.0
        %1802 = vmatprep.subr.mxu0 0.0
        %1803 = vmatpush1.msra.mxu0 0.0
        %1804 = vmatprep.subr.mxu0 0.0
        %1805 = vmatpush1.msra.mxu0 0.0
        %1806 = vmatprep.subr.mxu0 0.0
        %1807 = vmatpush1.msra.mxu0 0.0
        %1808 = vmatprep.subr.mxu0 0.0
        %1809 = vmatpush1.msra.mxu0 0.0
        %1810 = vmatprep.subr.mxu0 0.0
        %1811 = vmatpush1.msra.mxu0 0.0
        %1812 = vmatprep.subr.mxu0 0.0
        %1813 = vmatpush1.msra.mxu0 0.0
        %1814 = vmatprep.subr.mxu0 0.0
        %1815 = vmatpush1.msra.mxu0 0.0
        %1816 = vmatprep.subr.mxu0 0.0
        %1817 = vmatpush1.msra.mxu0 0.0
        %1818 = vmatprep.subr.mxu0 0.0
        %1819 = vmatpush1.msra.mxu0 0.0
        %1820 = vmatprep.subr.mxu0 0.0
        %1821 = vmatpush1.msra.mxu0 0.0
        %1822 = vmatprep.subr.mxu0 0.0
        %1823 = vmatpush1.msra.mxu0 0.0
        %1824 = vmatprep.subr.mxu0 0.0
        %1825 = vmatpush1.msra.mxu0 0.0
        %1826 = vmatprep.mubr.f32.mxu0 0.0
        %1827 = vmatmul.mubr.f32.gmra.mrb[0].mxu0 %v1760
        %v1828 = vpop.f32.mrb[0].mxu0
        %v1829 = vadd.f32 %v1757, %v1828
        %v1830 = vpop.f32.mrb[0].mxu0
        %1831 = vdwg.mxu0
        %v1832 = vmul.f32 %v1829, 0.5
        %v1833 = vmul.f32 %v1829, 0.70710677
        %v1834 = verf.f32.pop %v1833
        %v1835 = vadd.f32 %v1834, 1.0
        %v1836 = vmul.f32 %v1832, %v1835
        %v1837 = vld [vmem:[%s15] sm:$0xff]
        %v1838 = vld [vmem:[%s15 + $0x8] sm:$0xff]
        %v1839 = vld [vmem:[%s15 + $0x10] sm:$0xff]
        %v1840 = vld [vmem:[%s15 + $0x18] sm:$0xff]
        %v1841 = vld [vmem:[%s15 + $0x20] sm:$0xff]
        %v1842 = vld [vmem:[%s15 + $0x28] sm:$0xff]
        %v1843 = vld [vmem:[%s15 + $0x30] sm:$0xff]
        %v1844 = vld [vmem:[%s15 + $0x38] sm:$0xff]
        %v1845 = vld [vmem:[%s15 + $0x40] sm:$0xff]
        %v1846 = vld [vmem:[%s15 + $0x48] sm:$0xff]
        %v1847 = vld [vmem:[%s15 + $0x50] sm:$0xff]
        %v1848 = vld [vmem:[%s15 + $0x58] sm:$0xff]
        %v1849 = vld [vmem:[%s15 + $0x60] sm:$0xff]
        %v1850 = vld [vmem:[%s15 + $0x68] sm:$0xff]
        %v1851 = vld [vmem:[%s15 + $0x70] sm:$0xff]
        %v1852 = vld [vmem:[%s15 + $0x78] sm:$0xff]
        %v1853 = vld [vmem:[%s16] sm:$0x1]
        %v1855 = vlaneseq
        %v1856 = vshrl.u32 %v1855, 7
        %v1857 = vsub.s32 0, %v1856
        %v1858 = vrot.slane %v1853, %v1857
        %1860 = vmatprep.subr.mxu0 0.0
        %1861 = vmatpush1.msra.mxu0 %v1837
        %1862 = vmatprep.subr.mxu0 0.0
        %1863 = vmatpush1.msra.mxu0 %v1838
        %1864 = vmatprep.subr.mxu0 0.0
        %1865 = vmatpush1.msra.mxu0 %v1839
        %1866 = vmatprep.subr.mxu0 0.0
        %1867 = vmatpush1.msra.mxu0 %v1840
        %1868 = vmatprep.subr.mxu0 0.0
        %1869 = vmatpush1.msra.mxu0 %v1841
        %1870 = vmatprep.subr.mxu0 0.0
        %1871 = vmatpush1.msra.mxu0 %v1842
        %1872 = vmatprep.subr.mxu0 0.0
        %1873 = vmatpush1.msra.mxu0 %v1843
        %1874 = vmatprep.subr.mxu0 0.0
        %1875 = vmatpush1.msra.mxu0 %v1844
        %1876 = vmatprep.subr.mxu0 0.0
        %1877 = vmatpush1.msra.mxu0 %v1845
        %1878 = vmatprep.subr.mxu0 0.0
        %1879 = vmatpush1.msra.mxu0 %v1846
        %1880 = vmatprep.subr.mxu0 0.0
        %1881 = vmatpush1.msra.mxu0 %v1847
        %1882 = vmatprep.subr.mxu0 0.0
        %1883 = vmatpush1.msra.mxu0 %v1848
        %1884 = vmatprep.subr.mxu0 0.0
        %1885 = vmatpush1.msra.mxu0 %v1849
        %1886 = vmatprep.subr.mxu0 0.0
        %1887 = vmatpush1.msra.mxu0 %v1850
        %1888 = vmatprep.subr.mxu0 0.0
        %1889 = vmatpush1.msra.mxu0 %v1851
        %1890 = vmatprep.subr.mxu0 0.0
        %1891 = vmatpush1.msra.mxu0 %v1852
        %1892 = vmatprep.subr.mxu0 0.0
        %1893 = vmatpush1.msra.mxu0 0.0
        %1894 = vmatprep.subr.mxu0 0.0
        %1895 = vmatpush1.msra.mxu0 0.0
        %1896 = vmatprep.subr.mxu0 0.0
        %1897 = vmatpush1.msra.mxu0 0.0
        %1898 = vmatprep.subr.mxu0 0.0
        %1899 = vmatpush1.msra.mxu0 0.0
        %1900 = vmatprep.subr.mxu0 0.0
        %1901 = vmatpush1.msra.mxu0 0.0
        %1902 = vmatprep.subr.mxu0 0.0
        %1903 = vmatpush1.msra.mxu0 0.0
        %1904 = vmatprep.subr.mxu0 0.0
        %1905 = vmatpush1.msra.mxu0 0.0
        %1906 = vmatprep.subr.mxu0 0.0
        %1907 = vmatpush1.msra.mxu0 0.0
        %1908 = vmatprep.subr.mxu0 0.0
        %1909 = vmatpush1.msra.mxu0 0.0
        %1910 = vmatprep.subr.mxu0 0.0
        %1911 = vmatpush1.msra.mxu0 0.0
        %1912 = vmatprep.subr.mxu0 0.0
        %1913 = vmatpush1.msra.mxu0 0.0
        %1914 = vmatprep.subr.mxu0 0.0
        %1915 = vmatpush1.msra.mxu0 0.0
        %1916 = vmatprep.subr.mxu0 0.0
        %1917 = vmatpush1.msra.mxu0 0.0
        %1918 = vmatprep.subr.mxu0 0.0
        %1919 = vmatpush1.msra.mxu0 0.0
        %1920 = vmatprep.subr.mxu0 0.0
        %1921 = vmatpush1.msra.mxu0 0.0
        %1922 = vmatprep.subr.mxu0 0.0
        %1923 = vmatpush1.msra.mxu0 0.0
        %1924 = vmatprep.mubr.f32.mxu0 0.0
        %1925 = vmatmul.mubr.f32.gmra.mrb[0].mxu0 %v1836
        %v1926 = vpop.f32.mrb[0].mxu0
        %v1927 = vadd.f32 %v1858, %v1926
        %v1928 = vpop.f32.mrb[0].mxu0
        %1929 = vdwg.mxu0
        %v1930 = vadd.f32 %v1717, %v1927
        %1931 = vst.msk [vmem:[%s570] sm:$0xff] %vm1641, %v1930
        %s1932 = sand.u32 %s416, 1
        %s1933 = scalar_lea.sflag [#allocation8], %s1932
        %s1934 = sand.u32 %s416, 1
        %s1935 = smul.addr %s1934, 8
        %s1936 = scalar_lea.vmem [#allocation9], %s1935
        // Predicated region
        $region97: #{tpu_custom_call.1} parent=87 // pred_check
          %p1937 = pneg %p426
        $region98: #{tpu_custom_call.1} parent=87 // pred_check_branch
          %1939 = sbr.rel (%p1937) target = $region100
        $region99: #{tpu_custom_call.1} parent=87 // pred_region
          %s1941 = ssub.s32 128, 128
          %1942 = vsyncadd %s1933, %s1941
          %s1943 = smul.addr %s36, 2
          %s1944 = sadd.s32 %s37, %s1943
          %s1945 = smul.addr %s1944, 128
          %s1946 = scalar_lea.hbm %s17, %s1945
          %s1948 = sshll.u32 %s1936, 4
          %s1949 = int_to_ptr.vmem [resolvable:$true] %s1948
          %1951 = dma.vmem_to_hbm [thread:$0]  %s1949, 128, %s1946, %s1933
        $region100: #{tpu_custom_call.1} parent=87 // pred_fallthru
          _
      $region88: #{tpu_custom_call.1} parent=5 // pred_fallthru
        _
      %p1952 = scmp.le.s32.totalorder 2, %s27
      // Predicated region
      $region101: #{tpu_custom_call.1} parent=5 // pred_check
        %p1953 = pneg %p1952
      $region102: #{tpu_custom_call.1} parent=5 // pred_check_branch
        %1955 = sbr.rel (%p1953) target = $region104
      $region103: #{tpu_custom_call.1} parent=5 // pred_region
        %s1956 = ssub.s32 %s27, 2
        // Predicated region
        $region105: #{tpu_custom_call.1} parent=103 // pred_check
          %p1957 = pneg %p432
        $region106: #{tpu_custom_call.1} parent=103 // pred_check_branch
          %1959 = sbr.rel (%p1957) target = $region108
        $region107: #{tpu_custom_call.1} parent=103 // pred_region
          %s1960 = sand.u32 %s417, 1
          %s1961 = scalar_lea.sflag [#allocation8], %s1960
          %s1962 = sand.u32 %s417, 1
          %s1963 = smul.addr %s1962, 8
          %s1964 = scalar_lea.vmem [#allocation9], %s1963
          %1965 = dma.done %s1961, 128
        $region108: #{tpu_custom_call.1} parent=103 // pred_fallthru
          _
      $region104: #{tpu_custom_call.1} parent=5 // pred_fallthru
        _
    $region6: #{tpu_custom_call.1} parent=1 // loop_footer
      %s31 = sadd.s32 1, %s27
    $region7: #{tpu_custom_call.1} parent=1 // loop_footer_branch
      %26 = sbr.rel target = $region3
    $region8: #{tpu_custom_call.1} parent=1 // loop_exit
      _
    %1966 = vsyncpa [#allocation7], 1
    %s1967 = scalar_lea.sflag [#allocation7], 1
    %1968 = vsyncpa %s1967, 1
    %1969 = vsyncpa [#allocation8], 1
    %s1970 = scalar_lea.sflag [#allocation8], 1
    %1971 = vsyncpa %s1970, 1

// kernel: tpu_custom_call.1
$region0: #{tpu_custom_call.1}
  #allocation0 [shape = 'u32[]', space=smem, size = 0x4, offset = 0x4, fixed_abs, tag = 'smem constant byte address 0x4 - core index']
  #allocation1 [shape = 'u32[144,128]{1,0:T(1,128)}', space=vmem, size = 0x12000, scoped, tag = 'internal scratch']
  #allocation2 [shape = 'f32[16,32]{1,0:T(8,128)}', space=vmem, size = 0x2000, scoped, tag = 'scratch operand']
  #allocation3 [shape = 'f32[16,32]{1,0:T(8,128)}', space=vmem, size = 0x2000, scoped, tag = 'scratch operand']
  #allocation4 [shape = 'f32[16,32]{1,0:T(8,128)}', space=vmem, size = 0x2000, scoped, tag = 'scratch operand']
  #allocation5 [shape = 'f32[8,32]{1,0:T(8,128)}', space=vmem, size = 0x1000, scoped, tag = 'scratch operand']
  %s0 = inlined_call_operand.vmem [shape: f32[2,16,32], index: 0, kind: input, shape index: {}]
  %s1 = inlined_call_operand.vmem [shape: f32[1,32], index: 1, kind: input, shape index: {}]
  %s2 = inlined_call_operand.vmem [shape: f32[1,32], index: 2, kind: input, shape index: {}]
  %s3 = inlined_call_operand.vmem [shape: f32[32,32], index: 3, kind: input, shape index: {}]
  %s4 = inlined_call_operand.vmem [shape: f32[1,32], index: 4, kind: input, shape index: {}]
  %s5 = inlined_call_operand.vmem [shape: f32[32,32], index: 5, kind: input, shape index: {}]
  %s6 = inlined_call_operand.vmem [shape: f32[1,32], index: 6, kind: input, shape index: {}]
  %s7 = inlined_call_operand.vmem [shape: f32[32,32], index: 7, kind: input, shape index: {}]
  %s8 = inlined_call_operand.vmem [shape: f32[1,32], index: 8, kind: input, shape index: {}]
  %s9 = inlined_call_operand.vmem [shape: f32[32,32], index: 9, kind: input, shape index: {}]
  %s10 = inlined_call_operand.vmem [shape: f32[1,32], index: 10, kind: input, shape index: {}]
  %s11 = inlined_call_operand.vmem [shape: f32[1,32], index: 11, kind: input, shape index: {}]
  %s12 = inlined_call_operand.vmem [shape: f32[1,32], index: 12, kind: input, shape index: {}]
  %s13 = inlined_call_operand.hbm [shape: f32[32,128], index: 13, kind: input, shape index: {}]
  %s14 = inlined_call_operand.vmem [shape: f32[1,128], index: 14, kind: input, shape index: {}]
  %s15 = inlined_call_operand.vmem [shape: f32[128,32], index: 15, kind: input, shape index: {}]
  %s16 = inlined_call_operand.vmem [shape: f32[1,32], index: 16, kind: input, shape index: {}]
  %s17 = inlined_call_operand.hbm [shape: f32[2,16,32], index: 17, kind: output, shape index: {}]
  %s18 = sld [smem:[#allocation0]]
  $region109: #{tpu_custom_call.1} parent=0
    _
  %s20 = ssub.s32 1, %s18
  %s21 = scalar_select 0, %s20, %s18
  $region1: #{tpu_custom_call.1} parent=0
    #allocation6 [shape = 'u8[16384]{0}', space=vmem, size = 0x4000, scoped, tag = 'input window, operand 13, single buffered']
    #allocation7 [shape = 's32[2]{0}', space=sflag, size = 0x8, scoped, tag = 'scoped memory for tpu_custom_call.1']
    #allocation8 [shape = 's32[2]{0}', space=sflag, size = 0x8, scoped, tag = 'scoped memory for tpu_custom_call.1']
    #allocation9 [shape = 'u8[8192]{0}', space=vmem, size = 0x2000, scoped, tag = 'output window, operand 0']
    %22 = vsyncpa [#allocation7], 0
    %23 = vsyncpa [#allocation8], 0
    %s24 = scalar_lea.sflag [#allocation8], 1
    %25 = vsyncpa %s24, 0
    loop: start=0, step=1, limit=6
    $region2: #{tpu_custom_call.1} parent=1 // loop_pre_header
      _
    $region3: #{tpu_custom_call.1} parent=1 // loop_header
      %s27 = sphi 0, %s31
      %p28 = scmp.ge.s32.totalorder %s27, 6
      %s34 = sphi 0, %s46
      %s35 = sphi 0, %s42
      %s36 = sphi 0, %s34
      %s37 = sphi 0, %s35
      %s38 = sphi 0, %s36
      %s39 = sphi 0, %s37
      %s49 = sphi 0, %s51
      %s52 = sphi 0, %s49
      %s53 = sphi 0, %s52
      %s69 = sphi 0, %s53
      %s73 = sphi 0, %s73
      %s75 = sphi 0, %s73
      %s76 = sphi 0, %s75
      %s90 = sphi 0, %s76
      %s94 = sphi 0, %s94
      %s96 = sphi 0, %s94
      %s97 = sphi 0, %s96
      %s111 = sphi 0, %s97
      %s115 = sphi 0, %s115
      %s117 = sphi 0, %s115
      %s118 = sphi 0, %s117
      %s132 = sphi 0, %s118
      %s136 = sphi 0, %s136
      %s138 = sphi 0, %s136
      %s139 = sphi 0, %s138
      %s153 = sphi 0, %s139
      %s157 = sphi 0, %s157
      %s159 = sphi 0, %s157
      %s160 = sphi 0, %s159
      %s174 = sphi 0, %s160
      %s178 = sphi 0, %s178
      %s180 = sphi 0, %s178
      %s181 = sphi 0, %s180
      %s195 = sphi 0, %s181
      %s199 = sphi 0, %s199
      %s201 = sphi 0, %s199
      %s202 = sphi 0, %s201
      %s216 = sphi 0, %s202
      %s220 = sphi 0, %s220
      %s222 = sphi 0, %s220
      %s223 = sphi 0, %s222
      %s237 = sphi 0, %s223
      %s241 = sphi 0, %s241
      %s243 = sphi 0, %s241
      %s244 = sphi 0, %s243
      %s258 = sphi 0, %s244
      %s262 = sphi 0, %s262
      %s264 = sphi 0, %s262
      %s265 = sphi 0, %s264
      %s279 = sphi 0, %s265
      %s283 = sphi 0, %s283
      %s285 = sphi 0, %s283
      %s286 = sphi 0, %s285
      %s300 = sphi 0, %s286
      %s304 = sphi 0, %s304
      %s306 = sphi 0, %s304
      %s307 = sphi 0, %s306
      %s321 = sphi 0, %s307
      %s325 = sphi 0, %s325
      %s327 = sphi 0, %s325
      %s328 = sphi 0, %s327
      %s342 = sphi 0, %s328
      %s346 = sphi 0, %s346
      %s348 = sphi 0, %s346
      %s349 = sphi 0, %s348
      %s363 = sphi 0, %s349
      %s367 = sphi 0, %s367
      %s369 = sphi 0, %s367
      %s370 = sphi 0, %s369
      %s384 = sphi 0, %s370
      %s388 = sphi 0, %s388
      %s390 = sphi 0, %s388
      %s391 = sphi 0, %s390
      %s405 = sphi 0, %s391
      %s413 = sphi 0, %s415
      %s416 = sphi 0, %s413
      %s417 = sphi 0, %s416
      %s433 = sphi 0, %s417
    $region4: #{tpu_custom_call.1} parent=1 // loop_header_branch
      %30 = sbr.rel (%p28) target = $region8
    $region5: #{tpu_custom_call.1} parent=1 // loop_body
      %s32 = ssub.s32 %s27, 1
      %s33 = ssub.s32 %s27, 2
      %s40 = sadd.s32 1, %s35
      %p41 = scmp.ge.s32.totalorder %s40, 2
      %s42 = scalar_select %p41, 0, %s40
      %s43 = sadd.s32 1, %s34
      %s44 = scalar_select %p41, %s43, %s34
      %p45 = scmp.ge.s32.totalorder %s44, 2
      %s46 = scalar_select %p45, 0, %s44
      %s47 = ssub.s32 %s34, %s46
      %p48 = scmp.eq.s32.totalorder %s47, 0
      %s50 = sadd.s32 %s49, 1
      %s51 = scalar_select %p48, %s49, %s50
      %p54 = pneg %p48
      %p55 = scmp.eq.s32.totalorder %s27, 3
      %p56 = por %p54, %p55
      %p57 = scmp.ne.s32.totalorder %s49, %s52
      %p58 = scmp.eq.s32.totalorder %s27, 0
      %p59 = por %p57, %p58
      %p60 = scmp.ne.s32.totalorder %s49, %s52
      %p61 = scmp.eq.s32.totalorder %s32, 3
      %p62 = por %p60, %p61
      %p63 = scmp.ne.s32.totalorder %s52, %s53
      %p64 = scmp.eq.s32.totalorder %s32, 0
      %p65 = por %p63, %p64
      %p66 = scmp.ne.s32.totalorder %s52, %s53
      %p67 = scmp.eq.s32.totalorder %s33, 3
      %p68 = por %p66, %p67
      %p70 = scmp.ne.s32.totalorder %s53, %s69
      %p71 = scmp.eq.s32.totalorder %s33, 0
      %p72 = por %p70, %p71
      %s74 = sadd.s32 %s73, 1
      %p77 = scmp.eq.s32.totalorder %s27, 3
      %p78 = scmp.ne.s32.totalorder %s73, %s75
      %p79 = scmp.eq.s32.totalorder %s27, 0
      %p80 = por %p78, %p79
      %p81 = scmp.ne.s32.totalorder %s73, %s75
      %p82 = scmp.eq.s32.totalorder %s32, 3
      %p83 = por %p81, %p82
      %p84 = scmp.ne.s32.totalorder %s75, %s76
      %p85 = scmp.eq.s32.totalorder %s32, 0
      %p86 = por %p84, %p85
      %p87 = scmp.ne.s32.totalorder %s75, %s76
      %p88 = scmp.eq.s32.totalorder %s33, 3
      %p89 = por %p87, %p88
      %p91 = scmp.ne.s32.totalorder %s76, %s90
      %p92 = scmp.eq.s32.totalorder %s33, 0
      %p93 = por %p91, %p92
      %s95 = sadd.s32 %s94, 1
      %p98 = scmp.eq.s32.totalorder %s27, 3
      %p99 = scmp.ne.s32.totalorder %s94, %s96
      %p100 = scmp.eq.s32.totalorder %s27, 0
      %p101 = por %p99, %p100
      %p102 = scmp.ne.s32.totalorder %s94, %s96
      %p103 = scmp.eq.s32.totalorder %s32, 3
      %p104 = por %p102, %p103
      %p105 = scmp.ne.s32.totalorder %s96, %s97
      %p106 = scmp.eq.s32.totalorder %s32, 0
      %p107 = por %p105, %p106
      %p108 = scmp.ne.s32.totalorder %s96, %s97
      %p109 = scmp.eq.s32.totalorder %s33, 3
      %p110 = por %p108, %p109
      %p112 = scmp.ne.s32.totalorder %s97, %s111
      %p113 = scmp.eq.s32.totalorder %s33, 0
      %p114 = por %p112, %p113
      %s116 = sadd.s32 %s115, 1
      %p119 = scmp.eq.s32.totalorder %s27, 3
      %p120 = scmp.ne.s32.totalorder %s115, %s117
      %p121 = scmp.eq.s32.totalorder %s27, 0
      %p122 = por %p120, %p121
      %p123 = scmp.ne.s32.totalorder %s115, %s117
      %p124 = scmp.eq.s32.totalorder %s32, 3
      %p125 = por %p123, %p124
      %p126 = scmp.ne.s32.totalorder %s117, %s118
      %p127 = scmp.eq.s32.totalorder %s32, 0
      %p128 = por %p126, %p127
      %p129 = scmp.ne.s32.totalorder %s117, %s118
      %p130 = scmp.eq.s32.totalorder %s33, 3
      %p131 = por %p129, %p130
      %p133 = scmp.ne.s32.totalorder %s118, %s132
      %p134 = scmp.eq.s32.totalorder %s33, 0
      %p135 = por %p133, %p134
      %s137 = sadd.s32 %s136, 1
      %p140 = scmp.eq.s32.totalorder %s27, 3
      %p141 = scmp.ne.s32.totalorder %s136, %s138
      %p142 = scmp.eq.s32.totalorder %s27, 0
      %p143 = por %p141, %p142
      %p144 = scmp.ne.s32.totalorder %s136, %s138
      %p145 = scmp.eq.s32.totalorder %s32, 3
      %p146 = por %p144, %p145
      %p147 = scmp.ne.s32.totalorder %s138, %s139
      %p148 = scmp.eq.s32.totalorder %s32, 0
      %p149 = por %p147, %p148
      %p150 = scmp.ne.s32.totalorder %s138, %s139
      %p151 = scmp.eq.s32.totalorder %s33, 3
      %p152 = por %p150, %p151
      %p154 = scmp.ne.s32.totalorder %s139, %s153
      %p155 = scmp.eq.s32.totalorder %s33, 0
      %p156 = por %p154, %p155
      %s158 = sadd.s32 %s157, 1
      %p161 = scmp.eq.s32.totalorder %s27, 3
      %p162 = scmp.ne.s32.totalorder %s157, %s159
      %p163 = scmp.eq.s32.totalorder %s27, 0
      %p164 = por %p162, %p163
      %p165 = scmp.ne.s32.totalorder %s157, %s159
      %p166 = scmp.eq.s32.totalorder %s32, 3
      %p167 = por %p165, %p166
      %p168 = scmp.ne.s32.totalorder %s159, %s160
      %p169 = scmp.eq.s32.totalorder %s32, 0
      %p170 = por %p168, %p169
      %p171 = scmp.ne.s32.totalorder %s159, %s160
      %p172 = scmp.eq.s32.totalorder %s33, 3
      %p173 = por %p171, %p172
      %p175 = scmp.ne.s32.totalorder %s160, %s174
      %p176 = scmp.eq.s32.totalorder %s33, 0
      %p177 = por %p175, %p176
      %s179 = sadd.s32 %s178, 1
      %p182 = scmp.eq.s32.totalorder %s27, 3
      %p183 = scmp.ne.s32.totalorder %s178, %s180
      %p184 = scmp.eq.s32.totalorder %s27, 0
      %p185 = por %p183, %p184
      %p186 = scmp.ne.s32.totalorder %s178, %s180
      %p187 = scmp.eq.s32.totalorder %s32, 3
      %p188 = por %p186, %p187
      %p189 = scmp.ne.s32.totalorder %s180, %s181
      %p190 = scmp.eq.s32.totalorder %s32, 0
      %p191 = por %p189, %p190
      %p192 = scmp.ne.s32.totalorder %s180, %s181
      %p193 = scmp.eq.s32.totalorder %s33, 3
      %p194 = por %p192, %p193
      %p196 = scmp.ne.s32.totalorder %s181, %s195
      %p197 = scmp.eq.s32.totalorder %s33, 0
      %p198 = por %p196, %p197
      %s200 = sadd.s32 %s199, 1
      %p203 = scmp.eq.s32.totalorder %s27, 3
      %p204 = scmp.ne.s32.totalorder %s199, %s201
      %p205 = scmp.eq.s32.totalorder %s27, 0
      %p206 = por %p204, %p205
      %p207 = scmp.ne.s32.totalorder %s199, %s201
      %p208 = scmp.eq.s32.totalorder %s32, 3
      %p209 = por %p207, %p208
      %p210 = scmp.ne.s32.totalorder %s201, %s202
      %p211 = scmp.eq.s32.totalorder %s32, 0
      %p212 = por %p210, %p211
      %p213 = scmp.ne.s32.totalorder %s201, %s202
      %p214 = scmp.eq.s32.totalorder %s33, 3
      %p215 = por %p213, %p214
      %p217 = scmp.ne.s32.totalorder %s202, %s216
      %p218 = scmp.eq.s32.totalorder %s33, 0
      %p219 = por %p217, %p218
      %s221 = sadd.s32 %s220, 1
      %p224 = scmp.eq.s32.totalorder %s27, 3
      %p225 = scmp.ne.s32.totalorder %s220, %s222
      %p226 = scmp.eq.s32.totalorder %s27, 0
      %p227 = por %p225, %p226
      %p228 = scmp.ne.s32.totalorder %s220, %s222
      %p229 = scmp.eq.s32.totalorder %s32, 3
      %p230 = por %p228, %p229
      %p231 = scmp.ne.s32.totalorder %s222, %s223
      %p232 = scmp.eq.s32.totalorder %s32, 0
      %p233 = por %p231, %p232
      %p234 = scmp.ne.s32.totalorder %s222, %s223
      %p235 = scmp.eq.s32.totalorder %s33, 3
      %p236 = por %p234, %p235
      %p238 = scmp.ne.s32.totalorder %s223, %s237
      %p239 = scmp.eq.s32.totalorder %s33, 0
      %p240 = por %p238, %p239
      %s242 = sadd.s32 %s241, 1
      %p245 = scmp.eq.s32.totalorder %s27, 3
      %p246 = scmp.ne.s32.totalorder %s241, %s243
      %p247 = scmp.eq.s32.totalorder %s27, 0
      %p248 = por %p246, %p247
      %p249 = scmp.ne.s32.totalorder %s241, %s243
      %p250 = scmp.eq.s32.totalorder %s32, 3
      %p251 = por %p249, %p250
      %p252 = scmp.ne.s32.totalorder %s243, %s244
      %p253 = scmp.eq.s32.totalorder %s32, 0
      %p254 = por %p252, %p253
      %p255 = scmp.ne.s32.totalorder %s243, %s244
      %p256 = scmp.eq.s32.totalorder %s33, 3
      %p257 = por %p255, %p256
      %p259 = scmp.ne.s32.totalorder %s244, %s258
      %p260 = scmp.eq.s32.totalorder %s33, 0
      %p261 = por %p259, %p260
      %s263 = sadd.s32 %s262, 1
      %p266 = scmp.eq.s32.totalorder %s27, 3
      %p267 = scmp.ne.s32.totalorder %s262, %s264
      %p268 = scmp.eq.s32.totalorder %s27, 0
      %p269 = por %p267, %p268
      %p270 = scmp.ne.s32.totalorder %s262, %s264
      %p271 = scmp.eq.s32.totalorder %s32, 3
      %p272 = por %p270, %p271
      %p273 = scmp.ne.s32.totalorder %s264, %s265
      %p274 = scmp.eq.s32.totalorder %s32, 0
      %p275 = por %p273, %p274
      %p276 = scmp.ne.s32.totalorder %s264, %s265
      %p277 = scmp.eq.s32.totalorder %s33, 3
      %p278 = por %p276, %p277
      %p280 = scmp.ne.s32.totalorder %s265, %s279
      %p281 = scmp.eq.s32.totalorder %s33, 0
      %p282 = por %p280, %p281
      %s284 = sadd.s32 %s283, 1
      %p287 = scmp.eq.s32.totalorder %s27, 3
      %p288 = scmp.ne.s32.totalorder %s283, %s285
      %p289 = scmp.eq.s32.totalorder %s27, 0
      %p290 = por %p288, %p289
      %p291 = scmp.ne.s32.totalorder %s283, %s285
      %p292 = scmp.eq.s32.totalorder %s32, 3
      %p293 = por %p291, %p292
      %p294 = scmp.ne.s32.totalorder %s285, %s286
      %p295 = scmp.eq.s32.totalorder %s32, 0
      %p296 = por %p294, %p295
      %p297 = scmp.ne.s32.totalorder %s285, %s286
      %p298 = scmp.eq.s32.totalorder %s33, 3
      %p299 = por %p297, %p298
      %p301 = scmp.ne.s32.totalorder %s286, %s300
      %p302 = scmp.eq.s32.totalorder %s33, 0
      %p303 = por %p301, %p302
      %s305 = sadd.s32 %s304, 1
      %p308 = scmp.eq.s32.totalorder %s27, 3
      %p309 = scmp.ne.s32.totalorder %s304, %s306
      %p310 = scmp.eq.s32.totalorder %s27, 0
      %p311 = por %p309, %p310
      %p312 = scmp.ne.s32.totalorder %s304, %s306
      %p313 = scmp.eq.s32.totalorder %s32, 3
      %p314 = por %p312, %p313
      %p315 = scmp.ne.s32.totalorder %s306, %s307
      %p316 = scmp.eq.s32.totalorder %s32, 0
      %p317 = por %p315, %p316
      %p318 = scmp.ne.s32.totalorder %s306, %s307
      %p319 = scmp.eq.s32.totalorder %s33, 3
      %p320 = por %p318, %p319
      %p322 = scmp.ne.s32.totalorder %s307, %s321
      %p323 = scmp.eq.s32.totalorder %s33, 0
      %p324 = por %p322, %p323
      %s326 = sadd.s32 %s325, 1
      %p329 = scmp.eq.s32.totalorder %s27, 3
      %p330 = scmp.ne.s32.totalorder %s325, %s327
      %p331 = scmp.eq.s32.totalorder %s27, 0
      %p332 = por %p330, %p331
      %p333 = scmp.ne.s32.totalorder %s325, %s327
      %p334 = scmp.eq.s32.totalorder %s32, 3
      %p335 = por %p333, %p334
      %p336 = scmp.ne.s32.totalorder %s327, %s328
      %p337 = scmp.eq.s32.totalorder %s32, 0
      %p338 = por %p336, %p337
      %p339 = scmp.ne.s32.totalorder %s327, %s328
      %p340 = scmp.eq.s32.totalorder %s33, 3
      %p341 = por %p339, %p340
      %p343 = scmp.ne.s32.totalorder %s328, %s342
      %p344 = scmp.eq.s32.totalorder %s33, 0
      %p345 = por %p343, %p344
      %s347 = sadd.s32 %s346, 1
      %p350 = scmp.eq.s32.totalorder %s27, 3
      %p351 = scmp.ne.s32.totalorder %s346, %s348
      %p352 = scmp.eq.s32.totalorder %s27, 0
      %p353 = por %p351, %p352
      %p354 = scmp.ne.s32.totalorder %s346, %s348
      %p355 = scmp.eq.s32.totalorder %s32, 3
      %p356 = por %p354, %p355
      %p357 = scmp.ne.s32.totalorder %s348, %s349
      %p358 = scmp.eq.s32.totalorder %s32, 0
      %p359 = por %p357, %p358
      %p360 = scmp.ne.s32.totalorder %s348, %s349
      %p361 = scmp.eq.s32.totalorder %s33, 3
      %p362 = por %p360, %p361
      %p364 = scmp.ne.s32.totalorder %s349, %s363
      %p365 = scmp.eq.s32.totalorder %s33, 0
      %p366 = por %p364, %p365
      %s368 = sadd.s32 %s367, 1
      %p371 = scmp.eq.s32.totalorder %s27, 3
      %p372 = scmp.ne.s32.totalorder %s367, %s369
      %p373 = scmp.eq.s32.totalorder %s27, 0
      %p374 = por %p372, %p373
      %p375 = scmp.ne.s32.totalorder %s367, %s369
      %p376 = scmp.eq.s32.totalorder %s32, 3
      %p377 = por %p375, %p376
      %p378 = scmp.ne.s32.totalorder %s369, %s370
      %p379 = scmp.eq.s32.totalorder %s32, 0
      %p380 = por %p378, %p379
      %p381 = scmp.ne.s32.totalorder %s369, %s370
      %p382 = scmp.eq.s32.totalorder %s33, 3
      %p383 = por %p381, %p382
      %p385 = scmp.ne.s32.totalorder %s370, %s384
      %p386 = scmp.eq.s32.totalorder %s33, 0
      %p387 = por %p385, %p386
      %s389 = sadd.s32 %s388, 1
      %p392 = scmp.eq.s32.totalorder %s27, 3
      %p393 = scmp.ne.s32.totalorder %s388, %s390
      %p394 = scmp.eq.s32.totalorder %s27, 0
      %p395 = por %p393, %p394
      %p396 = scmp.ne.s32.totalorder %s388, %s390
      %p397 = scmp.eq.s32.totalorder %s32, 3
      %p398 = por %p396, %p397
      %p399 = scmp.ne.s32.totalorder %s390, %s391
      %p400 = scmp.eq.s32.totalorder %s32, 0
      %p401 = por %p399, %p400
      %p402 = scmp.ne.s32.totalorder %s390, %s391
      %p403 = scmp.eq.s32.totalorder %s33, 3
      %p404 = por %p402, %p403
      %p406 = scmp.ne.s32.totalorder %s391, %s405
      %p407 = scmp.eq.s32.totalorder %s33, 0
      %p408 = por %p406, %p407
      %s409 = ssub.s32 %s34, %s46
      %s410 = ssub.s32 %s35, %s42
      %s411 = sor.u32 %s409, %s410
      %p412 = scmp.eq.s32.totalorder %s411, 0
      %s414 = sadd.s32 %s413, 1
      %s415 = scalar_select %p412, %s413, %s414
      %p418 = pneg %p412
      %p419 = scmp.eq.s32.totalorder %s27, 3
      %p420 = por %p418, %p419
      %p421 = scmp.ne.s32.totalorder %s413, %s416
      %p422 = scmp.eq.s32.totalorder %s27, 0
      %p423 = por %p421, %p422
      %p424 = scmp.ne.s32.totalorder %s413, %s416
      %p425 = scmp.eq.s32.totalorder %s32, 3
      %p426 = por %p424, %p425
      %p427 = scmp.ne.s32.totalorder %s416, %s417
      %p428 = scmp.eq.s32.totalorder %s32, 0
      %p429 = por %p427, %p428
      %p430 = scmp.ne.s32.totalorder %s416, %s417
      %p431 = scmp.eq.s32.totalorder %s33, 3
      %p432 = por %p430, %p431
      %p434 = scmp.ne.s32.totalorder %s417, %s433
      %p435 = scmp.eq.s32.totalorder %s33, 0
      %p436 = por %p434, %p435
      %p437 = scmp.le.s32.totalorder 1, %s27
      %p438 = scmp.lt.s32.totalorder %s27, 5
      %p439 = pnand %p437, %p438
      %p440 = pneg %p439
      // Predicated region
      $region9: #{tpu_custom_call.1} parent=5 // pred_check
        _
      $region10: #{tpu_custom_call.1} parent=5 // pred_check_branch
        %442 = sbr.rel (%p439) target = $region12
      $region11: #{tpu_custom_call.1} parent=5 // pred_region
        %s443 = ssub.s32 %s27, 1
        // Predicated region
        $region13: #{tpu_custom_call.1} parent=11 // pred_check
          %p444 = pneg %p86
        $region14: #{tpu_custom_call.1} parent=11 // pred_check_branch
          %446 = sbr.rel (%p444) target = $region16
        $region15: #{tpu_custom_call.1} parent=11 // pred_region
          _
        $region16: #{tpu_custom_call.1} parent=11 // pred_fallthru
          _
        // Predicated region
        $region17: #{tpu_custom_call.1} parent=11 // pred_check
          %p447 = pneg %p107
        $region18: #{tpu_custom_call.1} parent=11 // pred_check_branch
          %449 = sbr.rel (%p447) target = $region20
        $region19: #{tpu_custom_call.1} parent=11 // pred_region
          _
        $region20: #{tpu_custom_call.1} parent=11 // pred_fallthru
          _
        // Predicated region
        $region21: #{tpu_custom_call.1} parent=11 // pred_check
          %p450 = pneg %p128
        $region22: #{tpu_custom_call.1} parent=11 // pred_check_branch
          %452 = sbr.rel (%p450) target = $region24
        $region23: #{tpu_custom_call.1} parent=11 // pred_region
          _
        $region24: #{tpu_custom_call.1} parent=11 // pred_fallthru
          _
        // Predicated region
        $region25: #{tpu_custom_call.1} parent=11 // pred_check
          %p453 = pneg %p149
        $region26: #{tpu_custom_call.1} parent=11 // pred_check_branch
          %455 = sbr.rel (%p453) target = $region28
        $region27: #{tpu_custom_call.1} parent=11 // pred_region
          _
        $region28: #{tpu_custom_call.1} parent=11 // pred_fallthru
          _
        // Predicated region
        $region29: #{tpu_custom_call.1} parent=11 // pred_check
          %p456 = pneg %p170
        $region30: #{tpu_custom_call.1} parent=11 // pred_check_branch
          %458 = sbr.rel (%p456) target = $region32
        $region31: #{tpu_custom_call.1} parent=11 // pred_region
          _
        $region32: #{tpu_custom_call.1} parent=11 // pred_fallthru
          _
        // Predicated region
        $region33: #{tpu_custom_call.1} parent=11 // pred_check
          %p459 = pneg %p191
        $region34: #{tpu_custom_call.1} parent=11 // pred_check_branch
          %461 = sbr.rel (%p459) target = $region36
        $region35: #{tpu_custom_call.1} parent=11 // pred_region
          _
        $region36: #{tpu_custom_call.1} parent=11 // pred_fallthru
          _
        // Predicated region
        $region37: #{tpu_custom_call.1} parent=11 // pred_check
          %p462 = pneg %p212
        $region38: #{tpu_custom_call.1} parent=11 // pred_check_branch
          %464 = sbr.rel (%p462) target = $region40
        $region39: #{tpu_custom_call.1} parent=11 // pred_region
          _
        $region40: #{tpu_custom_call.1} parent=11 // pred_fallthru
          _
        // Predicated region
        $region41: #{tpu_custom_call.1} parent=11 // pred_check
          %p465 = pneg %p233
        $region42: #{tpu_custom_call.1} parent=11 // pred_check_branch
          %467 = sbr.rel (%p465) target = $region44
        $region43: #{tpu_custom_call.1} parent=11 // pred_region
          _
        $region44: #{tpu_custom_call.1} parent=11 // pred_fallthru
          _
        // Predicated region
        $region45: #{tpu_custom_call.1} parent=11 // pred_check
          %p468 = pneg %p254
        $region46: #{tpu_custom_call.1} parent=11 // pred_check_branch
          %470 = sbr.rel (%p468) target = $region48
        $region47: #{tpu_custom_call.1} parent=11 // pred_region
          _
        $region48: #{tpu_custom_call.1} parent=11 // pred_fallthru
          _
        // Predicated region
        $region49: #{tpu_custom_call.1} parent=11 // pred_check
          %p471 = pneg %p275
        $region50: #{tpu_custom_call.1} parent=11 // pred_check_branch
          %473 = sbr.rel (%p471) target = $region52
        $region51: #{tpu_custom_call.1} parent=11 // pred_region
          _
        $region52: #{tpu_custom_call.1} parent=11 // pred_fallthru
          _
        // Predicated region
        $region53: #{tpu_custom_call.1} parent=11 // pred_check
          %p474 = pneg %p296
        $region54: #{tpu_custom_call.1} parent=11 // pred_check_branch
          %476 = sbr.rel (%p474) target = $region56
        $region55: #{tpu_custom_call.1} parent=11 // pred_region
          _
        $region56: #{tpu_custom_call.1} parent=11 // pred_fallthru
          _
        // Predicated region
        $region57: #{tpu_custom_call.1} parent=11 // pred_check
          %p477 = pneg %p317
        $region58: #{tpu_custom_call.1} parent=11 // pred_check_branch
          %479 = sbr.rel (%p477) target = $region60
        $region59: #{tpu_custom_call.1} parent=11 // pred_region
          _
        $region60: #{tpu_custom_call.1} parent=11 // pred_fallthru
          _
        // Predicated region
        $region61: #{tpu_custom_call.1} parent=11 // pred_check
          %p480 = pneg %p338
        $region62: #{tpu_custom_call.1} parent=11 // pred_check_branch
          %482 = sbr.rel (%p480) target = $region64
        $region63: #{tpu_custom_call.1} parent=11 // pred_region
          %s484 = ssub.s32 512, 512
          %485 = vsyncadd [#allocation7], %s484
          %s486 = sshll.u32 [#allocation6], 4
          %s487 = int_to_ptr.vmem [resolvable:$true] %s486
          %492 = dma.hbm_to_vmem [thread:$0]  %s13, 512, %s487, [#allocation7], 128, 128, 8
        $region64: #{tpu_custom_call.1} parent=11 // pred_fallthru
          _
        // Predicated region
        $region65: #{tpu_custom_call.1} parent=11 // pred_check
          %p493 = pneg %p359
        $region66: #{tpu_custom_call.1} parent=11 // pred_check_branch
          %495 = sbr.rel (%p493) target = $region68
        $region67: #{tpu_custom_call.1} parent=11 // pred_region
          _
        $region68: #{tpu_custom_call.1} parent=11 // pred_fallthru
          _
        // Predicated region
        $region69: #{tpu_custom_call.1} parent=11 // pred_check
          %p496 = pneg %p380
        $region70: #{tpu_custom_call.1} parent=11 // pred_check_branch
          %498 = sbr.rel (%p496) target = $region72
        $region71: #{tpu_custom_call.1} parent=11 // pred_region
          _
        $region72: #{tpu_custom_call.1} parent=11 // pred_fallthru
          _
        // Predicated region
        $region73: #{tpu_custom_call.1} parent=11 // pred_check
          %p499 = pneg %p401
        $region74: #{tpu_custom_call.1} parent=11 // pred_check_branch
          %501 = sbr.rel (%p499) target = $region76
        $region75: #{tpu_custom_call.1} parent=11 // pred_region
          _
        $region76: #{tpu_custom_call.1} parent=11 // pred_fallthru
          _
      $region12: #{tpu_custom_call.1} parent=5 // pred_fallthru
        _
      %p502 = scmp.lt.s32.totalorder %s27, 4
      // Predicated region
      $region77: #{tpu_custom_call.1} parent=5 // pred_check
        %p503 = pneg %p502
      $region78: #{tpu_custom_call.1} parent=5 // pred_check_branch
        %505 = sbr.rel (%p503) target = $region80
      $region79: #{tpu_custom_call.1} parent=5 // pred_region
        // Predicated region
        $region81: #{tpu_custom_call.1} parent=79 // pred_check
          %p506 = pneg %p59
        $region82: #{tpu_custom_call.1} parent=79 // pred_check_branch
          %508 = sbr.rel (%p506) target = $region84
        $region83: #{tpu_custom_call.1} parent=79 // pred_region
          %p509 = scmp.lt.s32.totalorder %s34, 1
          %s510 = scalar_select %p509, %s34, 1
          %s511 = smul.addr %s510, 2
          %s512 = smul.addr %s511, 8
          %s513 = scalar_lea.vmem %s0, %s512
        $region84: #{tpu_custom_call.1} parent=79 // pred_fallthru
          _
      $region80: #{tpu_custom_call.1} parent=5 // pred_fallthru
        _
      %p514 = scmp.le.s32.totalorder 1, %s27
      %p515 = scmp.lt.s32.totalorder %s27, 5
      %p516 = pnand %p514, %p515
      %p517 = pneg %p516
      // Predicated region
      $region85: #{tpu_custom_call.1} parent=5 // pred_check
        _
      $region86: #{tpu_custom_call.1} parent=5 // pred_check_branch
        %519 = sbr.rel (%p516) target = $region88
      $region87: #{tpu_custom_call.1} parent=5 // pred_region
        %s520 = ssub.s32 %s27, 1
        // Predicated region
        $region89: #{tpu_custom_call.1} parent=87 // pred_check
          %p521 = pneg %p338
        $region90: #{tpu_custom_call.1} parent=87 // pred_check_branch
          %523 = sbr.rel (%p521) target = $region92
        $region91: #{tpu_custom_call.1} parent=87 // pred_region
          %524 = dma.done [#allocation7], 512
        $region92: #{tpu_custom_call.1} parent=87 // pred_fallthru
          _
        %p525 = scmp.lt.s32.totalorder %s36, 1
        %s526 = scalar_select %p525, %s36, 1
        %s527 = smul.addr %s526, 2
        %s528 = smul.addr %s527, 8
        %s529 = scalar_lea.vmem %s0, %s528
        %p530 = pneg %p65
        %p531 = pneg %p62
        %p532 = pneg %p86
        %p533 = pneg %p83
        %p534 = pneg %p107
        %p535 = pneg %p104
        %p536 = pneg %p128
        %p537 = pneg %p125
        %p538 = pneg %p149
        %p539 = pneg %p146
        %p540 = pneg %p170
        %p541 = pneg %p167
        %p542 = pneg %p191
        %p543 = pneg %p188
        %p544 = pneg %p212
        %p545 = pneg %p209
        %p546 = pneg %p233
        %p547 = pneg %p230
        %p548 = pneg %p254
        %p549 = pneg %p251
        %p550 = pneg %p275
        %p551 = pneg %p272
        %p552 = pneg %p296
        %p553 = pneg %p293
        %p554 = pneg %p317
        %p555 = pneg %p314
        %p556 = pneg %p338
        %p557 = pneg %p335
        %p558 = pneg %p359
        %p559 = pneg %p356
        %p560 = pneg %p380
        %p561 = pneg %p377
        %p562 = pneg %p401
        %p563 = pneg %p398
        %p564 = pneg %p429
        %p565 = pneg %p426
        %s566 = sand.u32 %s416, 1
        %s567 = scalar_lea.sflag [#allocation8], %s566
        %s568 = sand.u32 %s416, 1
        %s569 = smul.addr %s568, 8
        %s570 = scalar_lea.vmem [#allocation9], %s569
        %p571 = scmp.lt.s32.totalorder %s36, 1
        %s572 = scalar_select %p571, %s36, 1
        %s573 = smul.addr %s572, 2
        %s574 = smul.addr %s573, 8
        %s575 = scalar_lea.vmem %s0, %s574
        %s576 = smul.u32 %s37, 8
        %p577 = scmp.eq.s32.totalorder %s37, 0
        // Predicated region
        $region93: #{tpu_custom_call.1} parent=87 // pred_check
          %p578 = pneg %p577
        $region94: #{tpu_custom_call.1} parent=87 // pred_check_branch
          %580 = sbr.rel (%p578) target = $region96
        $region95: #{tpu_custom_call.1} parent=87 // pred_region
          %v581 = vld [vmem:[%s575] sm:$0xff]
          %v582 = vld [vmem:[%s575 + $0x8] sm:$0xff]
          %v583 = vld [vmem:[%s1] sm:$0x1]
          %v584 = vld [vmem:[%s2] sm:$0x1]
          %vm585 = vcmask 261120
          %v586 = vsel %vm585, %v581, 0.0
          %587 = vadd.xlane.f32.xlu0 %v586
          %v588 = vpop.xlane.xlu0 %587
          %v589 = vsel %vm585, %v582, 0.0
          %590 = vadd.xlane.f32.xlu0 %v589
          %v591 = vpop.xlane.xlu0 %590
          %v592 = vrcp.pop 32.0
          %v593 = vmul.f32 %v588, %v592
          %v594 = vmul.f32 %v591, %v592
          %v595 = vsub.f32 %v581, %v593
          %v596 = vsub.f32 %v582, %v594
          %v597 = vmul.f32 %v595, %v595
          %v598 = vmul.f32 %v596, %v596
          %v599 = vsel %vm585, %v597, 0.0
          %600 = vadd.xlane.f32.xlu0 %v599
          %v601 = vpop.xlane.xlu0 %600
          %v602 = vsel %vm585, %v598, 0.0
          %603 = vadd.xlane.f32.xlu0 %v602
          %v604 = vpop.xlane.xlu0 %603
          %v605 = vmul.f32 %v601, %v592
          %v606 = vmul.f32 %v604, %v592
          %v607 = vadd.f32 %v605, 1e-05
          %v608 = vadd.f32 %v606, 1e-05
          %v609 = vrsqrt.pop %v607
          %v610 = vrsqrt.pop %v608
          %v611 = vmul.f32 %v595, %v609
          %v612 = vmul.f32 %v596, %v610
          %v614 = vlaneseq
          %v615 = vshrl.u32 %v614, 7
          %v616 = vsub.s32 0, %v615
          %v617 = vrot.slane %v583, %v616
          %v619 = vmul.f32 %v611, %v617
          %v620 = vmul.f32 %v612, %v617
          %v622 = vlaneseq
          %v623 = vshrl.u32 %v622, 7
          %v624 = vsub.s32 0, %v623
          %v625 = vrot.slane %v584, %v624
          %v627 = vadd.f32 %v619, %v625
          %v628 = vadd.f32 %v620, %v625
          %v629 = vld [vmem:[%s3] sm:$0xff]
          %v630 = vld [vmem:[%s3 + $0x8] sm:$0xff]
          %v631 = vld [vmem:[%s3 + $0x10] sm:$0xff]
          %v632 = vld [vmem:[%s3 + $0x18] sm:$0xff]
          %v633 = vld [vmem:[%s4] sm:$0x1]
          %v635 = vlaneseq
          %v636 = vshrl.u32 %v635, 7
          %v637 = vsub.s32 0, %v636
          %v638 = vrot.slane %v633, %v637
          %v641 = vsel %vm585, %v627, 0
          %v644 = vsel %vm585, %v628, 0
          %646 = vmatprep.subr.mxu0 0.0
          %647 = vmatpush1.msra.mxu0 %v629
          %648 = vmatprep.subr.mxu0 0.0
          %649 = vmatpush1.msra.mxu0 %v630
          %650 = vmatprep.subr.mxu0 0.0
          %651 = vmatpush1.msra.mxu0 %v631
          %652 = vmatprep.subr.mxu0 0.0
          %653 = vmatpush1.msra.mxu0 %v632
          %654 = vmatprep.subr.mxu0 0.0
          %655 = vmatpush1.msra.mxu0 0.0
          %656 = vmatprep.subr.mxu0 0.0
          %657 = vmatpush1.msra.mxu0 0.0
          %658 = vmatprep.subr.mxu0 0.0
          %659 = vmatpush1.msra.mxu0 0.0
          %660 = vmatprep.subr.mxu0 0.0
          %661 = vmatpush1.msra.mxu0 0.0
          %662 = vmatprep.subr.mxu0 0.0
          %663 = vmatpush1.msra.mxu0 0.0
          %664 = vmatprep.subr.mxu0 0.0
          %665 = vmatpush1.msra.mxu0 0.0
          %666 = vmatprep.subr.mxu0 0.0
          %667 = vmatpush1.msra.mxu0 0.0
          %668 = vmatprep.subr.mxu0 0.0
          %669 = vmatpush1.msra.mxu0 0.0
          %670 = vmatprep.subr.mxu0 0.0
          %671 = vmatpush1.msra.mxu0 0.0
          %672 = vmatprep.subr.mxu0 0.0
          %673 = vmatpush1.msra.mxu0 0.0
          %674 = vmatprep.subr.mxu0 0.0
          %675 = vmatpush1.msra.mxu0 0.0
          %676 = vmatprep.subr.mxu0 0.0
          %677 = vmatpush1.msra.mxu0 0.0
          %678 = vmatprep.subr.mxu0 0.0
          %679 = vmatpush1.msra.mxu0 0.0
          %680 = vmatprep.subr.mxu0 0.0
          %681 = vmatpush1.msra.mxu0 0.0
          %682 = vmatprep.subr.mxu0 0.0
          %683 = vmatpush1.msra.mxu0 0.0
          %684 = vmatprep.subr.mxu0 0.0
          %685 = vmatpush1.msra.mxu0 0.0
          %686 = vmatprep.subr.mxu0 0.0
          %687 = vmatpush1.msra.mxu0 0.0
          %688 = vmatprep.subr.mxu0 0.0
          %689 = vmatpush1.msra.mxu0 0.0
          %690 = vmatprep.subr.mxu0 0.0
          %691 = vmatpush1.msra.mxu0 0.0
          %692 = vmatprep.subr.mxu0 0.0
          %693 = vmatpush1.msra.mxu0 0.0
          %694 = vmatprep.subr.mxu0 0.0
          %695 = vmatpush1.msra.mxu0 0.0
          %696 = vmatprep.subr.mxu0 0.0
          %697 = vmatpush1.msra.mxu0 0.0
          %698 = vmatprep.subr.mxu0 0.0
          %699 = vmatpush1.msra.mxu0 0.0
          %700 = vmatprep.subr.mxu0 0.0
          %701 = vmatpush1.msra.mxu0 0.0
          %702 = vmatprep.subr.mxu0 0.0
          %703 = vmatpush1.msra.mxu0 0.0
          %704 = vmatprep.subr.mxu0 0.0
          %705 = vmatpush1.msra.mxu0 0.0
          %706 = vmatprep.subr.mxu0 0.0
          %707 = vmatpush1.msra.mxu0 0.0
          %708 = vmatprep.subr.mxu0 0.0
          %709 = vmatpush1.msra.mxu0 0.0
          %710 = vmatprep.mubr.f32.mxu0 0.0
          %711 = vmatmul.mubr.f32.gmra.mrb[0].mxu0 %v641
          %v712 = vpop.f32.mrb[0].mxu0
          %v713 = vadd.f32 %v638, %v712
          %v714 = vpop.f32.mrb[0].mxu0
          %715 = vmatprep.mubr.f32.mxu0 0.0
          %716 = vmatmul.mubr.f32.gmra.mrb[0].mxu0 %v644
          %v717 = vpop.f32.mrb[0].mxu0
          %v718 = vadd.f32 %v638, %v717
          %v719 = vpop.f32.mrb[0].mxu0
          %720 = vdwg.mxu0
          %721 = vst.msk [vmem:[#allocation2] sm:$0xff] %vm585, %v713
          %722 = vst.msk [vmem:[#allocation2 + $0x8] sm:$0xff] %vm585, %v718
          %v723 = vld [vmem:[%s5] sm:$0xff]
          %v724 = vld [vmem:[%s5 + $0x8] sm:$0xff]
          %v725 = vld [vmem:[%s5 + $0x10] sm:$0xff]
          %v726 = vld [vmem:[%s5 + $0x18] sm:$0xff]
          %v727 = vld [vmem:[%s6] sm:$0x1]
          %v729 = vlaneseq
          %v730 = vshrl.u32 %v729, 7
          %v731 = vsub.s32 0, %v730
          %v732 = vrot.slane %v727, %v731
          %734 = vmatprep.subr.mxu0 0.0
          %735 = vmatpush1.msra.mxu0 %v723
          %736 = vmatprep.subr.mxu0 0.0
          %737 = vmatpush1.msra.mxu0 %v724
          %738 = vmatprep.subr.mxu0 0.0
          %739 = vmatpush1.msra.mxu0 %v725
          %740 = vmatprep.subr.mxu0 0.0
          %741 = vmatpush1.msra.mxu0 %v726
          %742 = vmatprep.subr.mxu0 0.0
          %743 = vmatpush1.msra.mxu0 0.0
          %744 = vmatprep.subr.mxu0 0.0
          %745 = vmatpush1.msra.mxu0 0.0
          %746 = vmatprep.subr.mxu0 0.0
          %747 = vmatpush1.msra.mxu0 0.0
          %748 = vmatprep.subr.mxu0 0.0
          %749 = vmatpush1.msra.mxu0 0.0
          %750 = vmatprep.subr.mxu0 0.0
          %751 = vmatpush1.msra.mxu0 0.0
          %752 = vmatprep.subr.mxu0 0.0
          %753 = vmatpush1.msra.mxu0 0.0
          %754 = vmatprep.subr.mxu0 0.0
          %755 = vmatpush1.msra.mxu0 0.0
          %756 = vmatprep.subr.mxu0 0.0
          %757 = vmatpush1.msra.mxu0 0.0
          %758 = vmatprep.subr.mxu0 0.0
          %759 = vmatpush1.msra.mxu0 0.0
          %760 = vmatprep.subr.mxu0 0.0
          %761 = vmatpush1.msra.mxu0 0.0
          %762 = vmatprep.subr.mxu0 0.0
          %763 = vmatpush1.msra.mxu0 0.0
          %764 = vmatprep.subr.mxu0 0.0
          %765 = vmatpush1.msra.mxu0 0.0
          %766 = vmatprep.subr.mxu0 0.0
          %767 = vmatpush1.msra.mxu0 0.0
          %768 = vmatprep.subr.mxu0 0.0
          %769 = vmatpush1.msra.mxu0 0.0
          %770 = vmatprep.subr.mxu0 0.0
          %771 = vmatpush1.msra.mxu0 0.0
          %772 = vmatprep.subr.mxu0 0.0
          %773 = vmatpush1.msra.mxu0 0.0
          %774 = vmatprep.subr.mxu0 0.0
          %775 = vmatpush1.msra.mxu0 0.0
          %776 = vmatprep.subr.mxu0 0.0
          %777 = vmatpush1.msra.mxu0 0.0
          %778 = vmatprep.subr.mxu0 0.0
          %779 = vmatpush1.msra.mxu0 0.0
          %780 = vmatprep.subr.mxu0 0.0
          %781 = vmatpush1.msra.mxu0 0.0
          %782 = vmatprep.subr.mxu0 0.0
          %783 = vmatpush1.msra.mxu0 0.0
          %784 = vmatprep.subr.mxu0 0.0
          %785 = vmatpush1.msra.mxu0 0.0
          %786 = vmatprep.subr.mxu0 0.0
          %787 = vmatpush1.msra.mxu0 0.0
          %788 = vmatprep.subr.mxu0 0.0
          %789 = vmatpush1.msra.mxu0 0.0
          %790 = vmatprep.subr.mxu0 0.0
          %791 = vmatpush1.msra.mxu0 0.0
          %792 = vmatprep.subr.mxu0 0.0
          %793 = vmatpush1.msra.mxu0 0.0
          %794 = vmatprep.subr.mxu0 0.0
          %795 = vmatpush1.msra.mxu0 0.0
          %796 = vmatprep.subr.mxu0 0.0
          %797 = vmatpush1.msra.mxu0 0.0
          %798 = vmatprep.mubr.f32.mxu0 0.0
          %799 = vmatmul.mubr.f32.gmra.mrb[0].mxu0 %v641
          %v800 = vpop.f32.mrb[0].mxu0
          %v801 = vadd.f32 %v732, %v800
          %v802 = vpop.f32.mrb[0].mxu0
          %803 = vmatprep.mubr.f32.mxu0 0.0
          %804 = vmatmul.mubr.f32.gmra.mrb[0].mxu0 %v644
          %v805 = vpop.f32.mrb[0].mxu0
          %v806 = vadd.f32 %v732, %v805
          %v807 = vpop.f32.mrb[0].mxu0
          %808 = vdwg.mxu0
          %809 = vst.msk [vmem:[#allocation3] sm:$0xff] %vm585, %v801
          %810 = vst.msk [vmem:[#allocation3 + $0x8] sm:$0xff] %vm585, %v806
          %v811 = vld [vmem:[%s7] sm:$0xff]
          %v812 = vld [vmem:[%s7 + $0x8] sm:$0xff]
          %v813 = vld [vmem:[%s7 + $0x10] sm:$0xff]
          %v814 = vld [vmem:[%s7 + $0x18] sm:$0xff]
          %v815 = vld [vmem:[%s8] sm:$0x1]
          %v817 = vlaneseq
          %v818 = vshrl.u32 %v817, 7
          %v819 = vsub.s32 0, %v818
          %v820 = vrot.slane %v815, %v819
          %822 = vmatprep.subr.mxu0 0.0
          %823 = vmatpush1.msra.mxu0 %v811
          %824 = vmatprep.subr.mxu0 0.0
          %825 = vmatpush1.msra.mxu0 %v812
          %826 = vmatprep.subr.mxu0 0.0
          %827 = vmatpush1.msra.mxu0 %v813
          %828 = vmatprep.subr.mxu0 0.0
          %829 = vmatpush1.msra.mxu0 %v814
          %830 = vmatprep.subr.mxu0 0.0
          %831 = vmatpush1.msra.mxu0 0.0
          %832 = vmatprep.subr.mxu0 0.0
          %833 = vmatpush1.msra.mxu0 0.0
          %834 = vmatprep.subr.mxu0 0.0
          %835 = vmatpush1.msra.mxu0 0.0
          %836 = vmatprep.subr.mxu0 0.0
          %837 = vmatpush1.msra.mxu0 0.0
          %838 = vmatprep.subr.mxu0 0.0
          %839 = vmatpush1.msra.mxu0 0.0
          %840 = vmatprep.subr.mxu0 0.0
          %841 = vmatpush1.msra.mxu0 0.0
          %842 = vmatprep.subr.mxu0 0.0
          %843 = vmatpush1.msra.mxu0 0.0
          %844 = vmatprep.subr.mxu0 0.0
          %845 = vmatpush1.msra.mxu0 0.0
          %846 = vmatprep.subr.mxu0 0.0
          %847 = vmatpush1.msra.mxu0 0.0
          %848 = vmatprep.subr.mxu0 0.0
          %849 = vmatpush1.msra.mxu0 0.0
          %850 = vmatprep.subr.mxu0 0.0
          %851 = vmatpush1.msra.mxu0 0.0
          %852 = vmatprep.subr.mxu0 0.0
          %853 = vmatpush1.msra.mxu0 0.0
          %854 = vmatprep.subr.mxu0 0.0
          %855 = vmatpush1.msra.mxu0 0.0
          %856 = vmatprep.subr.mxu0 0.0
          %857 = vmatpush1.msra.mxu0 0.0
          %858 = vmatprep.subr.mxu0 0.0
          %859 = vmatpush1.msra.mxu0 0.0
          %860 = vmatprep.subr.mxu0 0.0
          %861 = vmatpush1.msra.mxu0 0.0
          %862 = vmatprep.subr.mxu0 0.0
          %863 = vmatpush1.msra.mxu0 0.0
          %864 = vmatprep.subr.mxu0 0.0
          %865 = vmatpush1.msra.mxu0 0.0
          %866 = vmatprep.subr.mxu0 0.0
          %867 = vmatpush1.msra.mxu0 0.0
          %868 = vmatprep.subr.mxu0 0.0
          %869 = vmatpush1.msra.mxu0 0.0
          %870 = vmatprep.subr.mxu0 0.0
          %871 = vmatpush1.msra.mxu0 0.0
          %872 = vmatprep.subr.mxu0 0.0
          %873 = vmatpush1.msra.mxu0 0.0
          %874 = vmatprep.subr.mxu0 0.0
          %875 = vmatpush1.msra.mxu0 0.0
          %876 = vmatprep.subr.mxu0 0.0
          %877 = vmatpush1.msra.mxu0 0.0
          %878 = vmatprep.subr.mxu0 0.0
          %879 = vmatpush1.msra.mxu0 0.0
          %880 = vmatprep.subr.mxu0 0.0
          %881 = vmatpush1.msra.mxu0 0.0
          %882 = vmatprep.subr.mxu0 0.0
          %883 = vmatpush1.msra.mxu0 0.0
          %884 = vmatprep.subr.mxu0 0.0
          %885 = vmatpush1.msra.mxu0 0.0
          %886 = vmatprep.mubr.f32.mxu0 0.0
          %887 = vmatmul.mubr.f32.gmra.mrb[0].mxu0 %v641
          %v888 = vpop.f32.mrb[0].mxu0
          %v889 = vadd.f32 %v820, %v888
          %v890 = vpop.f32.mrb[0].mxu0
          %891 = vmatprep.mubr.f32.mxu0 0.0
          %892 = vmatmul.mubr.f32.gmra.mrb[0].mxu0 %v644
          %v893 = vpop.f32.mrb[0].mxu0
          %v894 = vadd.f32 %v820, %v893
          %v895 = vpop.f32.mrb[0].mxu0
          %896 = vdwg.mxu0
          %897 = vst.msk [vmem:[#allocation4] sm:$0xff] %vm585, %v889
          %898 = vst.msk [vmem:[#allocation4 + $0x8] sm:$0xff] %vm585, %v894
        $region96: #{tpu_custom_call.1} parent=87 // pred_fallthru
          _
        %s899 = scalar_lea.vmem [#allocation2], %s576
        %v900 = vld [vmem:[%s899] sm:$0xff]
        %v901 = vld [vmem:[#allocation3] sm:$0xff]
        %v902 = vld [vmem:[#allocation3 + $0x8] sm:$0xff]
        %v903 = vld [vmem:[#allocation4] sm:$0xff]
        %v904 = vld [vmem:[#allocation4 + $0x8] sm:$0xff]
        %vm905 = vcmask 64512
        %v907 = vsel %vm905, %v900, 0
        %v910 = vsel %vm905, %v901, 0
        %v913 = vsel %vm905, %v902, 0
        %915 = vmatprep.subr.mxu0 0.0
        %916 = vmatpush1.xpose.msra.mxu0 %v910
        %917 = vmatprep.subr.mxu0 0.0
        %918 = vmatpush1.xpose.msra.mxu0 %v913
        %919 = vmatprep.subr.mxu0 0.0
        %920 = vmatpush1.xpose.msra.mxu0 0.0
        %921 = vmatprep.subr.mxu0 0.0
        %922 = vmatpush1.xpose.msra.mxu0 0.0
        %923 = vmatprep.subr.mxu0 0.0
        %924 = vmatpush1.xpose.msra.mxu0 0.0
        %925 = vmatprep.subr.mxu0 0.0
        %926 = vmatpush1.xpose.msra.mxu0 0.0
        %927 = vmatprep.subr.mxu0 0.0
        %928 = vmatpush1.xpose.msra.mxu0 0.0
        %929 = vmatprep.subr.mxu0 0.0
        %930 = vmatpush1.xpose.msra.mxu0 0.0
        %931 = vmatprep.subr.mxu0 0.0
        %932 = vmatpush1.xpose.msra.mxu0 0.0
        %933 = vmatprep.subr.mxu0 0.0
        %934 = vmatpush1.xpose.msra.mxu0 0.0
        %935 = vmatprep.subr.mxu0 0.0
        %936 = vmatpush1.xpose.msra.mxu0 0.0
        %937 = vmatprep.subr.mxu0 0.0
        %938 = vmatpush1.xpose.msra.mxu0 0.0
        %939 = vmatprep.subr.mxu0 0.0
        %940 = vmatpush1.xpose.msra.mxu0 0.0
        %941 = vmatprep.subr.mxu0 0.0
        %942 = vmatpush1.xpose.msra.mxu0 0.0
        %943 = vmatprep.subr.mxu0 0.0
        %944 = vmatpush1.xpose.msra.mxu0 0.0
        %945 = vmatprep.subr.mxu0 0.0
        %946 = vmatpush1.xpose.msra.mxu0 0.0
        %947 = vmatprep.subr.mxu0 0.0
        %948 = vmatpush1.xpose.msra.mxu0 0.0
        %949 = vmatprep.subr.mxu0 0.0
        %950 = vmatpush1.xpose.msra.mxu0 0.0
        %951 = vmatprep.subr.mxu0 0.0
        %952 = vmatpush1.xpose.msra.mxu0 0.0
        %953 = vmatprep.subr.mxu0 0.0
        %954 = vmatpush1.xpose.msra.mxu0 0.0
        %955 = vmatprep.subr.mxu0 0.0
        %956 = vmatpush1.xpose.msra.mxu0 0.0
        %957 = vmatprep.subr.mxu0 0.0
        %958 = vmatpush1.xpose.msra.mxu0 0.0
        %959 = vmatprep.subr.mxu0 0.0
        %960 = vmatpush1.xpose.msra.mxu0 0.0
        %961 = vmatprep.subr.mxu0 0.0
        %962 = vmatpush1.xpose.msra.mxu0 0.0
        %963 = vmatprep.subr.mxu0 0.0
        %964 = vmatpush1.xpose.msra.mxu0 0.0
        %965 = vmatprep.subr.mxu0 0.0
        %966 = vmatpush1.xpose.msra.mxu0 0.0
        %967 = vmatprep.subr.mxu0 0.0
        %968 = vmatpush1.xpose.msra.mxu0 0.0
        %969 = vmatprep.subr.mxu0 0.0
        %970 = vmatpush1.xpose.msra.mxu0 0.0
        %971 = vmatprep.subr.mxu0 0.0
        %972 = vmatpush1.xpose.msra.mxu0 0.0
        %973 = vmatprep.subr.mxu0 0.0
        %974 = vmatpush1.xpose.msra.mxu0 0.0
        %975 = vmatprep.subr.mxu0 0.0
        %976 = vmatpush1.xpose.msra.mxu0 0.0
        %977 = vmatprep.subr.mxu0 0.0
        %978 = vmatpush1.xpose.msra.mxu0 0.0
        %979 = vmatprep.mubr.f32.mxu0 0.0
        %980 = vmatmul.mubr.f32.gmra.mrb[0].mxu0 %v907
        %v981 = vpop.f32.mrb[0].mxu0
        %v982 = vadd.f32 0.0, %v981
        %v983 = vpop.f32.mrb[0].mxu0
        %984 = vdwg.mxu0
        %vm985 = vcmask 130048
        %v986 = vsel %vm985, %v982, -inf
        %987 = vmax.xlane.f32.xlu0 %v986
        %v988 = vpop.xlane.xlu0 %987
        %v989 = vsub.f32 %v982, %v988
        %v990 = vmul.f32 %v989, 1.442695
        %v991 = vpow.pop %v990
        %v992 = vsel %vm985, %v991, 0.0
        %993 = vadd.xlane.f32.xlu0 %v992
        %v994 = vpop.xlane.xlu0 %993
        %v995 = vrcp.pop %v994
        %v996 = vmul.f32 %v991, %v995
        %v998 = vsel %vm985, %v996, 0
        %1000 = vmatprep.subr.mxu0 0.0
        %1001 = vmatpush1.msra.mxu0 %v903
        %1002 = vmatprep.subr.mxu0 0.0
        %1003 = vmatpush1.msra.mxu0 %v904
        %1004 = vmatprep.subr.mxu0 0.0
        %1005 = vmatpush1.msra.mxu0 0.0
        %1006 = vmatprep.subr.mxu0 0.0
        %1007 = vmatpush1.msra.mxu0 0.0
        %1008 = vmatprep.subr.mxu0 0.0
        %1009 = vmatpush1.msra.mxu0 0.0
        %1010 = vmatprep.subr.mxu0 0.0
        %1011 = vmatpush1.msra.mxu0 0.0
        %1012 = vmatprep.subr.mxu0 0.0
        %1013 = vmatpush1.msra.mxu0 0.0
        %1014 = vmatprep.subr.mxu0 0.0
        %1015 = vmatpush1.msra.mxu0 0.0
        %1016 = vmatprep.subr.mxu0 0.0
        %1017 = vmatpush1.msra.mxu0 0.0
        %1018 = vmatprep.subr.mxu0 0.0
        %1019 = vmatpush1.msra.mxu0 0.0
        %1020 = vmatprep.subr.mxu0 0.0
        %1021 = vmatpush1.msra.mxu0 0.0
        %1022 = vmatprep.subr.mxu0 0.0
        %1023 = vmatpush1.msra.mxu0 0.0
        %1024 = vmatprep.subr.mxu0 0.0
        %1025 = vmatpush1.msra.mxu0 0.0
        %1026 = vmatprep.subr.mxu0 0.0
        %1027 = vmatpush1.msra.mxu0 0.0
        %1028 = vmatprep.subr.mxu0 0.0
        %1029 = vmatpush1.msra.mxu0 0.0
        %1030 = vmatprep.subr.mxu0 0.0
        %1031 = vmatpush1.msra.mxu0 0.0
        %1032 = vmatprep.subr.mxu0 0.0
        %1033 = vmatpush1.msra.mxu0 0.0
        %1034 = vmatprep.subr.mxu0 0.0
        %1035 = vmatpush1.msra.mxu0 0.0
        %1036 = vmatprep.subr.mxu0 0.0
        %1037 = vmatpush1.msra.mxu0 0.0
        %1038 = vmatprep.subr.mxu0 0.0
        %1039 = vmatpush1.msra.mxu0 0.0
        %1040 = vmatprep.subr.mxu0 0.0
        %1041 = vmatpush1.msra.mxu0 0.0
        %1042 = vmatprep.subr.mxu0 0.0
        %1043 = vmatpush1.msra.mxu0 0.0
        %1044 = vmatprep.subr.mxu0 0.0
        %1045 = vmatpush1.msra.mxu0 0.0
        %1046 = vmatprep.subr.mxu0 0.0
        %1047 = vmatpush1.msra.mxu0 0.0
        %1048 = vmatprep.subr.mxu0 0.0
        %1049 = vmatpush1.msra.mxu0 0.0
        %1050 = vmatprep.subr.mxu0 0.0
        %1051 = vmatpush1.msra.mxu0 0.0
        %1052 = vmatprep.subr.mxu0 0.0
        %1053 = vmatpush1.msra.mxu0 0.0
        %1054 = vmatprep.subr.mxu0 0.0
        %1055 = vmatpush1.msra.mxu0 0.0
        %1056 = vmatprep.subr.mxu0 0.0
        %1057 = vmatpush1.msra.mxu0 0.0
        %1058 = vmatprep.subr.mxu0 0.0
        %1059 = vmatpush1.msra.mxu0 0.0
        %1060 = vmatprep.subr.mxu0 0.0
        %1061 = vmatpush1.msra.mxu0 0.0
        %1062 = vmatprep.subr.mxu0 0.0
        %1063 = vmatpush1.msra.mxu0 0.0
        %1064 = vmatprep.mubr.f32.mxu0 0.0
        %1065 = vmatmul.mubr.f32.gmra.mrb[0].mxu0 %v998
        %v1066 = vpop.f32.mrb[0].mxu0
        %v1067 = vadd.f32 0.0, %v1066
        %v1068 = vpop.f32.mrb[0].mxu0
        %1069 = vdwg.mxu0
        %1070 = vst.msk [vmem:[#allocation5] sm:$0xff] %vm905, %v1067
        %v1071 = vld [vmem:[#allocation3] sm:$0xff]
        %v1072 = vld [vmem:[#allocation3 + $0x8] sm:$0xff]
        %v1073 = vld [vmem:[#allocation4] sm:$0xff]
        %v1074 = vld [vmem:[#allocation4 + $0x8] sm:$0xff]
        %1075 = vrot.lane.b32.xlu0 %v900, 120
        %v1076 = vpop.permute.xlu0 %1075
        %1079 = vrot.lane.b32.xlu0 %v1071, 120
        %v1080 = vpop.permute.xlu0 %1079
        %1081 = vrot.lane.b32.xlu0 %v1072, 120
        %v1082 = vpop.permute.xlu0 %1081
        %v1083 = vsel %vm905, %v1076, 0
        %v1085 = vsel %vm905, %v1080, 0
        %v1087 = vsel %vm905, %v1082, 0
        %1089 = vmatprep.subr.mxu0 0.0
        %1090 = vmatpush1.xpose.msra.mxu0 %v1085
        %1091 = vmatprep.subr.mxu0 0.0
        %1092 = vmatpush1.xpose.msra.mxu0 %v1087
        %1093 = vmatprep.subr.mxu0 0.0
        %1094 = vmatpush1.xpose.msra.mxu0 0.0
        %1095 = vmatprep.subr.mxu0 0.0
        %1096 = vmatpush1.xpose.msra.mxu0 0.0
        %1097 = vmatprep.subr.mxu0 0.0
        %1098 = vmatpush1.xpose.msra.mxu0 0.0
        %1099 = vmatprep.subr.mxu0 0.0
        %1100 = vmatpush1.xpose.msra.mxu0 0.0
        %1101 = vmatprep.subr.mxu0 0.0
        %1102 = vmatpush1.xpose.msra.mxu0 0.0
        %1103 = vmatprep.subr.mxu0 0.0
        %1104 = vmatpush1.xpose.msra.mxu0 0.0
        %1105 = vmatprep.subr.mxu0 0.0
        %1106 = vmatpush1.xpose.msra.mxu0 0.0
        %1107 = vmatprep.subr.mxu0 0.0
        %1108 = vmatpush1.xpose.msra.mxu0 0.0
        %1109 = vmatprep.subr.mxu0 0.0
        %1110 = vmatpush1.xpose.msra.mxu0 0.0
        %1111 = vmatprep.subr.mxu0 0.0
        %1112 = vmatpush1.xpose.msra.mxu0 0.0
        %1113 = vmatprep.subr.mxu0 0.0
        %1114 = vmatpush1.xpose.msra.mxu0 0.0
        %1115 = vmatprep.subr.mxu0 0.0
        %1116 = vmatpush1.xpose.msra.mxu0 0.0
        %1117 = vmatprep.subr.mxu0 0.0
        %1118 = vmatpush1.xpose.msra.mxu0 0.0
        %1119 = vmatprep.subr.mxu0 0.0
        %1120 = vmatpush1.xpose.msra.mxu0 0.0
        %1121 = vmatprep.subr.mxu0 0.0
        %1122 = vmatpush1.xpose.msra.mxu0 0.0
        %1123 = vmatprep.subr.mxu0 0.0
        %1124 = vmatpush1.xpose.msra.mxu0 0.0
        %1125 = vmatprep.subr.mxu0 0.0
        %1126 = vmatpush1.xpose.msra.mxu0 0.0
        %1127 = vmatprep.subr.mxu0 0.0
        %1128 = vmatpush1.xpose.msra.mxu0 0.0
        %1129 = vmatprep.subr.mxu0 0.0
        %1130 = vmatpush1.xpose.msra.mxu0 0.0
        %1131 = vmatprep.subr.mxu0 0.0
        %1132 = vmatpush1.xpose.msra.mxu0 0.0
        %1133 = vmatprep.subr.mxu0 0.0
        %1134 = vmatpush1.xpose.msra.mxu0 0.0
        %1135 = vmatprep.subr.mxu0 0.0
        %1136 = vmatpush1.xpose.msra.mxu0 0.0
        %1137 = vmatprep.subr.mxu0 0.0
        %1138 = vmatpush1.xpose.msra.mxu0 0.0
        %1139 = vmatprep.subr.mxu0 0.0
        %1140 = vmatpush1.xpose.msra.mxu0 0.0
        %1141 = vmatprep.subr.mxu0 0.0
        %1142 = vmatpush1.xpose.msra.mxu0 0.0
        %1143 = vmatprep.subr.mxu0 0.0
        %1144 = vmatpush1.xpose.msra.mxu0 0.0
        %1145 = vmatprep.subr.mxu0 0.0
        %1146 = vmatpush1.xpose.msra.mxu0 0.0
        %1147 = vmatprep.subr.mxu0 0.0
        %1148 = vmatpush1.xpose.msra.mxu0 0.0
        %1149 = vmatprep.subr.mxu0 0.0
        %1150 = vmatpush1.xpose.msra.mxu0 0.0
        %1151 = vmatprep.subr.mxu0 0.0
        %1152 = vmatpush1.xpose.msra.mxu0 0.0
        %1153 = vmatprep.mubr.f32.mxu0 0.0
        %1154 = vmatmul.mubr.f32.gmra.mrb[0].mxu0 %v1083
        %v1155 = vpop.f32.mrb[0].mxu0
        %v1156 = vadd.f32 0.0, %v1155
        %v1157 = vpop.f32.mrb[0].mxu0
        %1158 = vdwg.mxu0
        %v1159 = vsel %vm985, %v1156, -inf
        %1160 = vmax.xlane.f32.xlu0 %v1159
        %v1161 = vpop.xlane.xlu0 %1160
        %v1162 = vsub.f32 %v1156, %v1161
        %v1163 = vmul.f32 %v1162, 1.442695
        %v1164 = vpow.pop %v1163
        %v1165 = vsel %vm985, %v1164, 0.0
        %1166 = vadd.xlane.f32.xlu0 %v1165
        %v1167 = vpop.xlane.xlu0 %1166
        %v1168 = vrcp.pop %v1167
        %v1169 = vmul.f32 %v1164, %v1168
        %1172 = vrot.lane.b32.xlu0 %v1073, 120
        %v1173 = vpop.permute.xlu0 %1172
        %1174 = vrot.lane.b32.xlu0 %v1074, 120
        %v1175 = vpop.permute.xlu0 %1174
        %v1179 = vsel %vm985, %v1169, 0
        %1181 = vmatprep.subr.mxu0 0.0
        %1182 = vmatpush1.msra.mxu0 %v1173
        %1183 = vmatprep.subr.mxu0 0.0
        %1184 = vmatpush1.msra.mxu0 %v1175
        %1185 = vmatprep.subr.mxu0 0.0
        %1186 = vmatpush1.msra.mxu0 0.0
        %1187 = vmatprep.subr.mxu0 0.0
        %1188 = vmatpush1.msra.mxu0 0.0
        %1189 = vmatprep.subr.mxu0 0.0
        %1190 = vmatpush1.msra.mxu0 0.0
        %1191 = vmatprep.subr.mxu0 0.0
        %1192 = vmatpush1.msra.mxu0 0.0
        %1193 = vmatprep.subr.mxu0 0.0
        %1194 = vmatpush1.msra.mxu0 0.0
        %1195 = vmatprep.subr.mxu0 0.0
        %1196 = vmatpush1.msra.mxu0 0.0
        %1197 = vmatprep.subr.mxu0 0.0
        %1198 = vmatpush1.msra.mxu0 0.0
        %1199 = vmatprep.subr.mxu0 0.0
        %1200 = vmatpush1.msra.mxu0 0.0
        %1201 = vmatprep.subr.mxu0 0.0
        %1202 = vmatpush1.msra.mxu0 0.0
        %1203 = vmatprep.subr.mxu0 0.0
        %1204 = vmatpush1.msra.mxu0 0.0
        %1205 = vmatprep.subr.mxu0 0.0
        %1206 = vmatpush1.msra.mxu0 0.0
        %1207 = vmatprep.subr.mxu0 0.0
        %1208 = vmatpush1.msra.mxu0 0.0
        %1209 = vmatprep.subr.mxu0 0.0
        %1210 = vmatpush1.msra.mxu0 0.0
        %1211 = vmatprep.subr.mxu0 0.0
        %1212 = vmatpush1.msra.mxu0 0.0
        %1213 = vmatprep.subr.mxu0 0.0
        %1214 = vmatpush1.msra.mxu0 0.0
        %1215 = vmatprep.subr.mxu0 0.0
        %1216 = vmatpush1.msra.mxu0 0.0
        %1217 = vmatprep.subr.mxu0 0.0
        %1218 = vmatpush1.msra.mxu0 0.0
        %1219 = vmatprep.subr.mxu0 0.0
        %1220 = vmatpush1.msra.mxu0 0.0
        %1221 = vmatprep.subr.mxu0 0.0
        %1222 = vmatpush1.msra.mxu0 0.0
        %1223 = vmatprep.subr.mxu0 0.0
        %1224 = vmatpush1.msra.mxu0 0.0
        %1225 = vmatprep.subr.mxu0 0.0
        %1226 = vmatpush1.msra.mxu0 0.0
        %1227 = vmatprep.subr.mxu0 0.0
        %1228 = vmatpush1.msra.mxu0 0.0
        %1229 = vmatprep.subr.mxu0 0.0
        %1230 = vmatpush1.msra.mxu0 0.0
        %1231 = vmatprep.subr.mxu0 0.0
        %1232 = vmatpush1.msra.mxu0 0.0
        %1233 = vmatprep.subr.mxu0 0.0
        %1234 = vmatpush1.msra.mxu0 0.0
        %1235 = vmatprep.subr.mxu0 0.0
        %1236 = vmatpush1.msra.mxu0 0.0
        %1237 = vmatprep.subr.mxu0 0.0
        %1238 = vmatpush1.msra.mxu0 0.0
        %1239 = vmatprep.subr.mxu0 0.0
        %1240 = vmatpush1.msra.mxu0 0.0
        %1241 = vmatprep.subr.mxu0 0.0
        %1242 = vmatpush1.msra.mxu0 0.0
        %1243 = vmatprep.subr.mxu0 0.0
        %1244 = vmatpush1.msra.mxu0 0.0
        %1245 = vmatprep.mubr.f32.mxu0 0.0
        %1246 = vmatmul.mubr.f32.gmra.mrb[0].mxu0 %v1179
        %v1247 = vpop.f32.mrb[0].mxu0
        %v1248 = vadd.f32 0.0, %v1247
        %v1249 = vpop.f32.mrb[0].mxu0
        %1250 = vdwg.mxu0
        %1252 = vrot.lane.b32.xlu0 %v1248, 8
        %v1253 = vpop.permute.xlu0 %1252
        %vm1255 = vcmask 130112
        %1256 = vst.msk [vmem:[#allocation5] sm:$0xff] %vm1255, %v1253
        %v1257 = vld [vmem:[#allocation3] sm:$0xff]
        %v1258 = vld [vmem:[#allocation3 + $0x8] sm:$0xff]
        %v1259 = vld [vmem:[#allocation4] sm:$0xff]
        %v1260 = vld [vmem:[#allocation4 + $0x8] sm:$0xff]
        %1261 = vrot.lane.b32.xlu0 %v900, 112
        %v1262 = vpop.permute.xlu0 %1261
        %1265 = vrot.lane.b32.xlu0 %v1257, 112
        %v1266 = vpop.permute.xlu0 %1265
        %1267 = vrot.lane.b32.xlu0 %v1258, 112
        %v1268 = vpop.permute.xlu0 %1267
        %v1269 = vsel %vm905, %v1262, 0
        %v1271 = vsel %vm905, %v1266, 0
        %v1273 = vsel %vm905, %v1268, 0
        %1275 = vmatprep.subr.mxu0 0.0
        %1276 = vmatpush1.xpose.msra.mxu0 %v1271
        %1277 = vmatprep.subr.mxu0 0.0
        %1278 = vmatpush1.xpose.msra.mxu0 %v1273
        %1279 = vmatprep.subr.mxu0 0.0
        %1280 = vmatpush1.xpose.msra.mxu0 0.0
        %1281 = vmatprep.subr.mxu0 0.0
        %1282 = vmatpush1.xpose.msra.mxu0 0.0
        %1283 = vmatprep.subr.mxu0 0.0
        %1284 = vmatpush1.xpose.msra.mxu0 0.0
        %1285 = vmatprep.subr.mxu0 0.0
        %1286 = vmatpush1.xpose.msra.mxu0 0.0
        %1287 = vmatprep.subr.mxu0 0.0
        %1288 = vmatpush1.xpose.msra.mxu0 0.0
        %1289 = vmatprep.subr.mxu0 0.0
        %1290 = vmatpush1.xpose.msra.mxu0 0.0
        %1291 = vmatprep.subr.mxu0 0.0
        %1292 = vmatpush1.xpose.msra.mxu0 0.0
        %1293 = vmatprep.subr.mxu0 0.0
        %1294 = vmatpush1.xpose.msra.mxu0 0.0
        %1295 = vmatprep.subr.mxu0 0.0
        %1296 = vmatpush1.xpose.msra.mxu0 0.0
        %1297 = vmatprep.subr.mxu0 0.0
        %1298 = vmatpush1.xpose.msra.mxu0 0.0
        %1299 = vmatprep.subr.mxu0 0.0
        %1300 = vmatpush1.xpose.msra.mxu0 0.0
        %1301 = vmatprep.subr.mxu0 0.0
        %1302 = vmatpush1.xpose.msra.mxu0 0.0
        %1303 = vmatprep.subr.mxu0 0.0
        %1304 = vmatpush1.xpose.msra.mxu0 0.0
        %1305 = vmatprep.subr.mxu0 0.0
        %1306 = vmatpush1.xpose.msra.mxu0 0.0
        %1307 = vmatprep.subr.mxu0 0.0
        %1308 = vmatpush1.xpose.msra.mxu0 0.0
        %1309 = vmatprep.subr.mxu0 0.0
        %1310 = vmatpush1.xpose.msra.mxu0 0.0
        %1311 = vmatprep.subr.mxu0 0.0
        %1312 = vmatpush1.xpose.msra.mxu0 0.0
        %1313 = vmatprep.subr.mxu0 0.0
        %1314 = vmatpush1.xpose.msra.mxu0 0.0
        %1315 = vmatprep.subr.mxu0 0.0
        %1316 = vmatpush1.xpose.msra.mxu0 0.0
        %1317 = vmatprep.subr.mxu0 0.0
        %1318 = vmatpush1.xpose.msra.mxu0 0.0
        %1319 = vmatprep.subr.mxu0 0.0
        %1320 = vmatpush1.xpose.msra.mxu0 0.0
        %1321 = vmatprep.subr.mxu0 0.0
        %1322 = vmatpush1.xpose.msra.mxu0 0.0
        %1323 = vmatprep.subr.mxu0 0.0
        %1324 = vmatpush1.xpose.msra.mxu0 0.0
        %1325 = vmatprep.subr.mxu0 0.0
        %1326 = vmatpush1.xpose.msra.mxu0 0.0
        %1327 = vmatprep.subr.mxu0 0.0
        %1328 = vmatpush1.xpose.msra.mxu0 0.0
        %1329 = vmatprep.subr.mxu0 0.0
        %1330 = vmatpush1.xpose.msra.mxu0 0.0
        %1331 = vmatprep.subr.mxu0 0.0
        %1332 = vmatpush1.xpose.msra.mxu0 0.0
        %1333 = vmatprep.subr.mxu0 0.0
        %1334 = vmatpush1.xpose.msra.mxu0 0.0
        %1335 = vmatprep.subr.mxu0 0.0
        %1336 = vmatpush1.xpose.msra.mxu0 0.0
        %1337 = vmatprep.subr.mxu0 0.0
        %1338 = vmatpush1.xpose.msra.mxu0 0.0
        %1339 = vmatprep.mubr.f32.mxu0 0.0
        %1340 = vmatmul.mubr.f32.gmra.mrb[0].mxu0 %v1269
        %v1341 = vpop.f32.mrb[0].mxu0
        %v1342 = vadd.f32 0.0, %v1341
        %v1343 = vpop.f32.mrb[0].mxu0
        %1344 = vdwg.mxu0
        %v1345 = vsel %vm985, %v1342, -inf
        %1346 = vmax.xlane.f32.xlu0 %v1345
        %v1347 = vpop.xlane.xlu0 %1346
        %v1348 = vsub.f32 %v1342, %v1347
        %v1349 = vmul.f32 %v1348, 1.442695
        %v1350 = vpow.pop %v1349
        %v1351 = vsel %vm985, %v1350, 0.0
        %1352 = vadd.xlane.f32.xlu0 %v1351
        %v1353 = vpop.xlane.xlu0 %1352
        %v1354 = vrcp.pop %v1353
        %v1355 = vmul.f32 %v1350, %v1354
        %1358 = vrot.lane.b32.xlu0 %v1259, 112
        %v1359 = vpop.permute.xlu0 %1358
        %1360 = vrot.lane.b32.xlu0 %v1260, 112
        %v1361 = vpop.permute.xlu0 %1360
        %v1365 = vsel %vm985, %v1355, 0
        %1367 = vmatprep.subr.mxu0 0.0
        %1368 = vmatpush1.msra.mxu0 %v1359
        %1369 = vmatprep.subr.mxu0 0.0
        %1370 = vmatpush1.msra.mxu0 %v1361
        %1371 = vmatprep.subr.mxu0 0.0
        %1372 = vmatpush1.msra.mxu0 0.0
        %1373 = vmatprep.subr.mxu0 0.0
        %1374 = vmatpush1.msra.mxu0 0.0
        %1375 = vmatprep.subr.mxu0 0.0
        %1376 = vmatpush1.msra.mxu0 0.0
        %1377 = vmatprep.subr.mxu0 0.0
        %1378 = vmatpush1.msra.mxu0 0.0
        %1379 = vmatprep.subr.mxu0 0.0
        %1380 = vmatpush1.msra.mxu0 0.0
        %1381 = vmatprep.subr.mxu0 0.0
        %1382 = vmatpush1.msra.mxu0 0.0
        %1383 = vmatprep.subr.mxu0 0.0
        %1384 = vmatpush1.msra.mxu0 0.0
        %1385 = vmatprep.subr.mxu0 0.0
        %1386 = vmatpush1.msra.mxu0 0.0
        %1387 = vmatprep.subr.mxu0 0.0
        %1388 = vmatpush1.msra.mxu0 0.0
        %1389 = vmatprep.subr.mxu0 0.0
        %1390 = vmatpush1.msra.mxu0 0.0
        %1391 = vmatprep.subr.mxu0 0.0
        %1392 = vmatpush1.msra.mxu0 0.0
        %1393 = vmatprep.subr.mxu0 0.0
        %1394 = vmatpush1.msra.mxu0 0.0
        %1395 = vmatprep.subr.mxu0 0.0
        %1396 = vmatpush1.msra.mxu0 0.0
        %1397 = vmatprep.subr.mxu0 0.0
        %1398 = vmatpush1.msra.mxu0 0.0
        %1399 = vmatprep.subr.mxu0 0.0
        %1400 = vmatpush1.msra.mxu0 0.0
        %1401 = vmatprep.subr.mxu0 0.0
        %1402 = vmatpush1.msra.mxu0 0.0
        %1403 = vmatprep.subr.mxu0 0.0
        %1404 = vmatpush1.msra.mxu0 0.0
        %1405 = vmatprep.subr.mxu0 0.0
        %1406 = vmatpush1.msra.mxu0 0.0
        %1407 = vmatprep.subr.mxu0 0.0
        %1408 = vmatpush1.msra.mxu0 0.0
        %1409 = vmatprep.subr.mxu0 0.0
        %1410 = vmatpush1.msra.mxu0 0.0
        %1411 = vmatprep.subr.mxu0 0.0
        %1412 = vmatpush1.msra.mxu0 0.0
        %1413 = vmatprep.subr.mxu0 0.0
        %1414 = vmatpush1.msra.mxu0 0.0
        %1415 = vmatprep.subr.mxu0 0.0
        %1416 = vmatpush1.msra.mxu0 0.0
        %1417 = vmatprep.subr.mxu0 0.0
        %1418 = vmatpush1.msra.mxu0 0.0
        %1419 = vmatprep.subr.mxu0 0.0
        %1420 = vmatpush1.msra.mxu0 0.0
        %1421 = vmatprep.subr.mxu0 0.0
        %1422 = vmatpush1.msra.mxu0 0.0
        %1423 = vmatprep.subr.mxu0 0.0
        %1424 = vmatpush1.msra.mxu0 0.0
        %1425 = vmatprep.subr.mxu0 0.0
        %1426 = vmatpush1.msra.mxu0 0.0
        %1427 = vmatprep.subr.mxu0 0.0
        %1428 = vmatpush1.msra.mxu0 0.0
        %1429 = vmatprep.subr.mxu0 0.0
        %1430 = vmatpush1.msra.mxu0 0.0
        %1431 = vmatprep.mubr.f32.mxu0 0.0
        %1432 = vmatmul.mubr.f32.gmra.mrb[0].mxu0 %v1365
        %v1433 = vpop.f32.mrb[0].mxu0
        %v1434 = vadd.f32 0.0, %v1433
        %v1435 = vpop.f32.mrb[0].mxu0
        %1436 = vdwg.mxu0
        %1438 = vrot.lane.b32.xlu0 %v1434, 16
        %v1439 = vpop.permute.xlu0 %1438
        %vm1441 = vcmask 195712
        %1442 = vst.msk [vmem:[#allocation5] sm:$0xff] %vm1441, %v1439
        %v1443 = vld [vmem:[#allocation3] sm:$0xff]
        %v1444 = vld [vmem:[#allocation3 + $0x8] sm:$0xff]
        %v1445 = vld [vmem:[#allocation4] sm:$0xff]
        %v1446 = vld [vmem:[#allocation4 + $0x8] sm:$0xff]
        %1447 = vrot.lane.b32.xlu0 %v900, 104
        %v1448 = vpop.permute.xlu0 %1447
        %1451 = vrot.lane.b32.xlu0 %v1443, 104
        %v1452 = vpop.permute.xlu0 %1451
        %1453 = vrot.lane.b32.xlu0 %v1444, 104
        %v1454 = vpop.permute.xlu0 %1453
        %v1455 = vsel %vm905, %v1448, 0
        %v1457 = vsel %vm905, %v1452, 0
        %v1459 = vsel %vm905, %v1454, 0
        %1461 = vmatprep.subr.mxu0 0.0
        %1462 = vmatpush1.xpose.msra.mxu0 %v1457
        %1463 = vmatprep.subr.mxu0 0.0
        %1464 = vmatpush1.xpose.msra.mxu0 %v1459
        %1465 = vmatprep.subr.mxu0 0.0
        %1466 = vmatpush1.xpose.msra.mxu0 0.0
        %1467 = vmatprep.subr.mxu0 0.0
        %1468 = vmatpush1.xpose.msra.mxu0 0.0
        %1469 = vmatprep.subr.mxu0 0.0
        %1470 = vmatpush1.xpose.msra.mxu0 0.0
        %1471 = vmatprep.subr.mxu0 0.0
        %1472 = vmatpush1.xpose.msra.mxu0 0.0
        %1473 = vmatprep.subr.mxu0 0.0
        %1474 = vmatpush1.xpose.msra.mxu0 0.0
        %1475 = vmatprep.subr.mxu0 0.0
        %1476 = vmatpush1.xpose.msra.mxu0 0.0
        %1477 = vmatprep.subr.mxu0 0.0
        %1478 = vmatpush1.xpose.msra.mxu0 0.0
        %1479 = vmatprep.subr.mxu0 0.0
        %1480 = vmatpush1.xpose.msra.mxu0 0.0
        %1481 = vmatprep.subr.mxu0 0.0
        %1482 = vmatpush1.xpose.msra.mxu0 0.0
        %1483 = vmatprep.subr.mxu0 0.0
        %1484 = vmatpush1.xpose.msra.mxu0 0.0
        %1485 = vmatprep.subr.mxu0 0.0
        %1486 = vmatpush1.xpose.msra.mxu0 0.0
        %1487 = vmatprep.subr.mxu0 0.0
        %1488 = vmatpush1.xpose.msra.mxu0 0.0
        %1489 = vmatprep.subr.mxu0 0.0
        %1490 = vmatpush1.xpose.msra.mxu0 0.0
        %1491 = vmatprep.subr.mxu0 0.0
        %1492 = vmatpush1.xpose.msra.mxu0 0.0
        %1493 = vmatprep.subr.mxu0 0.0
        %1494 = vmatpush1.xpose.msra.mxu0 0.0
        %1495 = vmatprep.subr.mxu0 0.0
        %1496 = vmatpush1.xpose.msra.mxu0 0.0
        %1497 = vmatprep.subr.mxu0 0.0
        %1498 = vmatpush1.xpose.msra.mxu0 0.0
        %1499 = vmatprep.subr.mxu0 0.0
        %1500 = vmatpush1.xpose.msra.mxu0 0.0
        %1501 = vmatprep.subr.mxu0 0.0
        %1502 = vmatpush1.xpose.msra.mxu0 0.0
        %1503 = vmatprep.subr.mxu0 0.0
        %1504 = vmatpush1.xpose.msra.mxu0 0.0
        %1505 = vmatprep.subr.mxu0 0.0
        %1506 = vmatpush1.xpose.msra.mxu0 0.0
        %1507 = vmatprep.subr.mxu0 0.0
        %1508 = vmatpush1.xpose.msra.mxu0 0.0
        %1509 = vmatprep.subr.mxu0 0.0
        %1510 = vmatpush1.xpose.msra.mxu0 0.0
        %1511 = vmatprep.subr.mxu0 0.0
        %1512 = vmatpush1.xpose.msra.mxu0 0.0
        %1513 = vmatprep.subr.mxu0 0.0
        %1514 = vmatpush1.xpose.msra.mxu0 0.0
        %1515 = vmatprep.subr.mxu0 0.0
        %1516 = vmatpush1.xpose.msra.mxu0 0.0
        %1517 = vmatprep.subr.mxu0 0.0
        %1518 = vmatpush1.xpose.msra.mxu0 0.0
        %1519 = vmatprep.subr.mxu0 0.0
        %1520 = vmatpush1.xpose.msra.mxu0 0.0
        %1521 = vmatprep.subr.mxu0 0.0
        %1522 = vmatpush1.xpose.msra.mxu0 0.0
        %1523 = vmatprep.subr.mxu0 0.0
        %1524 = vmatpush1.xpose.msra.mxu0 0.0
        %1525 = vmatprep.mubr.f32.mxu0 0.0
        %1526 = vmatmul.mubr.f32.gmra.mrb[0].mxu0 %v1455
        %v1527 = vpop.f32.mrb[0].mxu0
        %v1528 = vadd.f32 0.0, %v1527
        %v1529 = vpop.f32.mrb[0].mxu0
        %1530 = vdwg.mxu0
        %v1531 = vsel %vm985, %v1528, -inf
        %1532 = vmax.xlane.f32.xlu0 %v1531
        %v1533 = vpop.xlane.xlu0 %1532
        %v1534 = vsub.f32 %v1528, %v1533
        %v1535 = vmul.f32 %v1534, 1.442695
        %v1536 = vpow.pop %v1535
        %v1537 = vsel %vm985, %v1536, 0.0
        %1538 = vadd.xlane.f32.xlu0 %v1537
        %v1539 = vpop.xlane.xlu0 %1538
        %v1540 = vrcp.pop %v1539
        %v1541 = vmul.f32 %v1536, %v1540
        %1544 = vrot.lane.b32.xlu0 %v1445, 104
        %v1545 = vpop.permute.xlu0 %1544
        %1546 = vrot.lane.b32.xlu0 %v1446, 104
        %v1547 = vpop.permute.xlu0 %1546
        %v1551 = vsel %vm985, %v1541, 0
        %1553 = vmatprep.subr.mxu0 0.0
        %1554 = vmatpush1.msra.mxu0 %v1545
        %1555 = vmatprep.subr.mxu0 0.0
        %1556 = vmatpush1.msra.mxu0 %v1547
        %1557 = vmatprep.subr.mxu0 0.0
        %1558 = vmatpush1.msra.mxu0 0.0
        %1559 = vmatprep.subr.mxu0 0.0
        %1560 = vmatpush1.msra.mxu0 0.0
        %1561 = vmatprep.subr.mxu0 0.0
        %1562 = vmatpush1.msra.mxu0 0.0
        %1563 = vmatprep.subr.mxu0 0.0
        %1564 = vmatpush1.msra.mxu0 0.0
        %1565 = vmatprep.subr.mxu0 0.0
        %1566 = vmatpush1.msra.mxu0 0.0
        %1567 = vmatprep.subr.mxu0 0.0
        %1568 = vmatpush1.msra.mxu0 0.0
        %1569 = vmatprep.subr.mxu0 0.0
        %1570 = vmatpush1.msra.mxu0 0.0
        %1571 = vmatprep.subr.mxu0 0.0
        %1572 = vmatpush1.msra.mxu0 0.0
        %1573 = vmatprep.subr.mxu0 0.0
        %1574 = vmatpush1.msra.mxu0 0.0
        %1575 = vmatprep.subr.mxu0 0.0
        %1576 = vmatpush1.msra.mxu0 0.0
        %1577 = vmatprep.subr.mxu0 0.0
        %1578 = vmatpush1.msra.mxu0 0.0
        %1579 = vmatprep.subr.mxu0 0.0
        %1580 = vmatpush1.msra.mxu0 0.0
        %1581 = vmatprep.subr.mxu0 0.0
        %1582 = vmatpush1.msra.mxu0 0.0
        %1583 = vmatprep.subr.mxu0 0.0
        %1584 = vmatpush1.msra.mxu0 0.0
        %1585 = vmatprep.subr.mxu0 0.0
        %1586 = vmatpush1.msra.mxu0 0.0
        %1587 = vmatprep.subr.mxu0 0.0
        %1588 = vmatpush1.msra.mxu0 0.0
        %1589 = vmatprep.subr.mxu0 0.0
        %1590 = vmatpush1.msra.mxu0 0.0
        %1591 = vmatprep.subr.mxu0 0.0
        %1592 = vmatpush1.msra.mxu0 0.0
        %1593 = vmatprep.subr.mxu0 0.0
        %1594 = vmatpush1.msra.mxu0 0.0
        %1595 = vmatprep.subr.mxu0 0.0
        %1596 = vmatpush1.msra.mxu0 0.0
        %1597 = vmatprep.subr.mxu0 0.0
        %1598 = vmatpush1.msra.mxu0 0.0
        %1599 = vmatprep.subr.mxu0 0.0
        %1600 = vmatpush1.msra.mxu0 0.0
        %1601 = vmatprep.subr.mxu0 0.0
        %1602 = vmatpush1.msra.mxu0 0.0
        %1603 = vmatprep.subr.mxu0 0.0
        %1604 = vmatpush1.msra.mxu0 0.0
        %1605 = vmatprep.subr.mxu0 0.0
        %1606 = vmatpush1.msra.mxu0 0.0
        %1607 = vmatprep.subr.mxu0 0.0
        %1608 = vmatpush1.msra.mxu0 0.0
        %1609 = vmatprep.subr.mxu0 0.0
        %1610 = vmatpush1.msra.mxu0 0.0
        %1611 = vmatprep.subr.mxu0 0.0
        %1612 = vmatpush1.msra.mxu0 0.0
        %1613 = vmatprep.subr.mxu0 0.0
        %1614 = vmatpush1.msra.mxu0 0.0
        %1615 = vmatprep.subr.mxu0 0.0
        %1616 = vmatpush1.msra.mxu0 0.0
        %1617 = vmatprep.mubr.f32.mxu0 0.0
        %1618 = vmatmul.mubr.f32.gmra.mrb[0].mxu0 %v1551
        %v1619 = vpop.f32.mrb[0].mxu0
        %v1620 = vadd.f32 0.0, %v1619
        %v1621 = vpop.f32.mrb[0].mxu0
        %1622 = vdwg.mxu0
        %1624 = vrot.lane.b32.xlu0 %v1620, 24
        %v1625 = vpop.permute.xlu0 %1624
        %vm1627 = vcmask 261312
        %1628 = vst.msk [vmem:[#allocation5] sm:$0xff] %vm1627, %v1625
        %v1629 = vld [vmem:[#allocation5] sm:$0xff]
        %v1630 = vld [vmem:[%s9] sm:$0xff]
        %v1631 = vld [vmem:[%s9 + $0x8] sm:$0xff]
        %v1632 = vld [vmem:[%s9 + $0x10] sm:$0xff]
        %v1633 = vld [vmem:[%s9 + $0x18] sm:$0xff]
        %v1634 = vld [vmem:[%s10] sm:$0x1]
        %v1636 = vlaneseq
        %v1637 = vshrl.u32 %v1636, 7
        %v1638 = vsub.s32 0, %v1637
        %v1639 = vrot.slane %v1634, %v1638
        %vm1641 = vcmask 261120
        %v1643 = vsel %vm1641, %v1629, 0
        %1645 = vmatprep.subr.mxu0 0.0
        %1646 = vmatpush1.msra.mxu0 %v1630
        %1647 = vmatprep.subr.mxu0 0.0
        %1648 = vmatpush1.msra.mxu0 %v1631
        %1649 = vmatprep.subr.mxu0 0.0
        %1650 = vmatpush1.msra.mxu0 %v1632
        %1651 = vmatprep.subr.mxu0 0.0
        %1652 = vmatpush1.msra.mxu0 %v1633
        %1653 = vmatprep.subr.mxu0 0.0
        %1654 = vmatpush1.msra.mxu0 0.0
        %1655 = vmatprep.subr.mxu0 0.0
        %1656 = vmatpush1.msra.mxu0 0.0
        %1657 = vmatprep.subr.mxu0 0.0
        %1658 = vmatpush1.msra.mxu0 0.0
        %1659 = vmatprep.subr.mxu0 0.0
        %1660 = vmatpush1.msra.mxu0 0.0
        %1661 = vmatprep.subr.mxu0 0.0
        %1662 = vmatpush1.msra.mxu0 0.0
        %1663 = vmatprep.subr.mxu0 0.0
        %1664 = vmatpush1.msra.mxu0 0.0
        %1665 = vmatprep.subr.mxu0 0.0
        %1666 = vmatpush1.msra.mxu0 0.0
        %1667 = vmatprep.subr.mxu0 0.0
        %1668 = vmatpush1.msra.mxu0 0.0
        %1669 = vmatprep.subr.mxu0 0.0
        %1670 = vmatpush1.msra.mxu0 0.0
        %1671 = vmatprep.subr.mxu0 0.0
        %1672 = vmatpush1.msra.mxu0 0.0
        %1673 = vmatprep.subr.mxu0 0.0
        %1674 = vmatpush1.msra.mxu0 0.0
        %1675 = vmatprep.subr.mxu0 0.0
        %1676 = vmatpush1.msra.mxu0 0.0
        %1677 = vmatprep.subr.mxu0 0.0
        %1678 = vmatpush1.msra.mxu0 0.0
        %1679 = vmatprep.subr.mxu0 0.0
        %1680 = vmatpush1.msra.mxu0 0.0
        %1681 = vmatprep.subr.mxu0 0.0
        %1682 = vmatpush1.msra.mxu0 0.0
        %1683 = vmatprep.subr.mxu0 0.0
        %1684 = vmatpush1.msra.mxu0 0.0
        %1685 = vmatprep.subr.mxu0 0.0
        %1686 = vmatpush1.msra.mxu0 0.0
        %1687 = vmatprep.subr.mxu0 0.0
        %1688 = vmatpush1.msra.mxu0 0.0
        %1689 = vmatprep.subr.mxu0 0.0
        %1690 = vmatpush1.msra.mxu0 0.0
        %1691 = vmatprep.subr.mxu0 0.0
        %1692 = vmatpush1.msra.mxu0 0.0
        %1693 = vmatprep.subr.mxu0 0.0
        %1694 = vmatpush1.msra.mxu0 0.0
        %1695 = vmatprep.subr.mxu0 0.0
        %1696 = vmatpush1.msra.mxu0 0.0
        %1697 = vmatprep.subr.mxu0 0.0
        %1698 = vmatpush1.msra.mxu0 0.0
        %1699 = vmatprep.subr.mxu0 0.0
        %1700 = vmatpush1.msra.mxu0 0.0
        %1701 = vmatprep.subr.mxu0 0.0
        %1702 = vmatpush1.msra.mxu0 0.0
        %1703 = vmatprep.subr.mxu0 0.0
        %1704 = vmatpush1.msra.mxu0 0.0
        %1705 = vmatprep.subr.mxu0 0.0
        %1706 = vmatpush1.msra.mxu0 0.0
        %1707 = vmatprep.subr.mxu0 0.0
        %1708 = vmatpush1.msra.mxu0 0.0
        %1709 = vmatprep.mubr.f32.mxu0 0.0
        %1710 = vmatmul.mubr.f32.gmra.mrb[0].mxu0 %v1643
        %v1711 = vpop.f32.mrb[0].mxu0
        %v1712 = vadd.f32 %v1639, %v1711
        %v1713 = vpop.f32.mrb[0].mxu0
        %1714 = vdwg.mxu0
        %s1715 = scalar_lea.vmem %s575, %s576
        %v1716 = vld [vmem:[%s1715] sm:$0xff]
        %v1717 = vadd.f32 %v1716, %v1712
        %v1718 = vld [vmem:[%s11] sm:$0x1]
        %v1719 = vld [vmem:[%s12] sm:$0x1]
        %v1720 = vsel %vm1641, %v1717, 0.0
        %1721 = vadd.xlane.f32.xlu0 %v1720
        %v1722 = vpop.xlane.xlu0 %1721
        %v1723 = vrcp.pop 32.0
        %v1724 = vmul.f32 %v1722, %v1723
        %v1725 = vsub.f32 %v1717, %v1724
        %v1726 = vmul.f32 %v1725, %v1725
        %v1727 = vsel %vm1641, %v1726, 0.0
        %1728 = vadd.xlane.f32.xlu0 %v1727
        %v1729 = vpop.xlane.xlu0 %1728
        %v1730 = vmul.f32 %v1729, %v1723
        %v1731 = vadd.f32 %v1730, 1e-05
        %v1732 = vrsqrt.pop %v1731
        %v1733 = vmul.f32 %v1725, %v1732
        %v1735 = vlaneseq
        %v1736 = vshrl.u32 %v1735, 7
        %v1737 = vsub.s32 0, %v1736
        %v1738 = vrot.slane %v1718, %v1737
        %v1740 = vmul.f32 %v1733, %v1738
        %v1742 = vlaneseq
        %v1743 = vshrl.u32 %v1742, 7
        %v1744 = vsub.s32 0, %v1743
        %v1745 = vrot.slane %v1719, %v1744
        %v1747 = vadd.f32 %v1740, %v1745
        %v1748 = vld [vmem:[#allocation6] sm:$0xff]
        %v1749 = vld [vmem:[#allocation6 + $0x8] sm:$0xff]
        %v1750 = vld [vmem:[#allocation6 + $0x10] sm:$0xff]
        %v1751 = vld [vmem:[#allocation6 + $0x18] sm:$0xff]
        %v1752 = vld [vmem:[%s14] sm:$0x1]
        %v1754 = vlaneseq
        %v1755 = vshrl.u32 %v1754, 7
        %v1756 = vsub.s32 0, %v1755
        %v1757 = vrot.slane %v1752, %v1756
        %v1760 = vsel %vm1641, %v1747, 0
        %1762 = vmatprep.subr.mxu0 0.0
        %1763 = vmatpush1.msra.mxu0 %v1748
        %1764 = vmatprep.subr.mxu0 0.0
        %1765 = vmatpush1.msra.mxu0 %v1749
        %1766 = vmatprep.subr.mxu0 0.0
        %1767 = vmatpush1.msra.mxu0 %v1750
        %1768 = vmatprep.subr.mxu0 0.0
        %1769 = vmatpush1.msra.mxu0 %v1751
        %1770 = vmatprep.subr.mxu0 0.0
        %1771 = vmatpush1.msra.mxu0 0.0
        %1772 = vmatprep.subr.mxu0 0.0
        %1773 = vmatpush1.msra.mxu0 0.0
        %1774 = vmatprep.subr.mxu0 0.0
        %1775 = vmatpush1.msra.mxu0 0.0
        %1776 = vmatprep.subr.mxu0 0.0
        %1777 = vmatpush1.msra.mxu0 0.0
        %1778 = vmatprep.subr.mxu0 0.0
        %1779 = vmatpush1.msra.mxu0 0.0
        %1780 = vmatprep.subr.mxu0 0.0
        %1781 = vmatpush1.msra.mxu0 0.0
        %1782 = vmatprep.subr.mxu0 0.0
        %1783 = vmatpush1.msra.mxu0 0.0
        %1784 = vmatprep.subr.mxu0 0.0
        %1785 = vmatpush1.msra.mxu0 0.0
        %1786 = vmatprep.subr.mxu0 0.0
        %1787 = vmatpush1.msra.mxu0 0.0
        %1788 = vmatprep.subr.mxu0 0.0
        %1789 = vmatpush1.msra.mxu0 0.0
        %1790 = vmatprep.subr.mxu0 0.0
        %1791 = vmatpush1.msra.mxu0 0.0
        %1792 = vmatprep.subr.mxu0 0.0
        %1793 = vmatpush1.msra.mxu0 0.0
        %1794 = vmatprep.subr.mxu0 0.0
        %1795 = vmatpush1.msra.mxu0 0.0
        %1796 = vmatprep.subr.mxu0 0.0
        %1797 = vmatpush1.msra.mxu0 0.0
        %1798 = vmatprep.subr.mxu0 0.0
        %1799 = vmatpush1.msra.mxu0 0.0
        %1800 = vmatprep.subr.mxu0 0.0
        %1801 = vmatpush1.msra.mxu0 0.0
        %1802 = vmatprep.subr.mxu0 0.0
        %1803 = vmatpush1.msra.mxu0 0.0
        %1804 = vmatprep.subr.mxu0 0.0
        %1805 = vmatpush1.msra.mxu0 0.0
        %1806 = vmatprep.subr.mxu0 0.0
        %1807 = vmatpush1.msra.mxu0 0.0
        %1808 = vmatprep.subr.mxu0 0.0
        %1809 = vmatpush1.msra.mxu0 0.0
        %1810 = vmatprep.subr.mxu0 0.0
        %1811 = vmatpush1.msra.mxu0 0.0
        %1812 = vmatprep.subr.mxu0 0.0
        %1813 = vmatpush1.msra.mxu0 0.0
        %1814 = vmatprep.subr.mxu0 0.0
        %1815 = vmatpush1.msra.mxu0 0.0
        %1816 = vmatprep.subr.mxu0 0.0
        %1817 = vmatpush1.msra.mxu0 0.0
        %1818 = vmatprep.subr.mxu0 0.0
        %1819 = vmatpush1.msra.mxu0 0.0
        %1820 = vmatprep.subr.mxu0 0.0
        %1821 = vmatpush1.msra.mxu0 0.0
        %1822 = vmatprep.subr.mxu0 0.0
        %1823 = vmatpush1.msra.mxu0 0.0
        %1824 = vmatprep.subr.mxu0 0.0
        %1825 = vmatpush1.msra.mxu0 0.0
        %1826 = vmatprep.mubr.f32.mxu0 0.0
        %1827 = vmatmul.mubr.f32.gmra.mrb[0].mxu0 %v1760
        %v1828 = vpop.f32.mrb[0].mxu0
        %v1829 = vadd.f32 %v1757, %v1828
        %v1830 = vpop.f32.mrb[0].mxu0
        %1831 = vdwg.mxu0
        %v1832 = vmul.f32 %v1829, 0.5
        %v1833 = vmul.f32 %v1829, 0.70710677
        %v1834 = verf.f32.pop %v1833
        %v1835 = vadd.f32 %v1834, 1.0
        %v1836 = vmul.f32 %v1832, %v1835
        %v1837 = vld [vmem:[%s15] sm:$0xff]
        %v1838 = vld [vmem:[%s15 + $0x8] sm:$0xff]
        %v1839 = vld [vmem:[%s15 + $0x10] sm:$0xff]
        %v1840 = vld [vmem:[%s15 + $0x18] sm:$0xff]
        %v1841 = vld [vmem:[%s15 + $0x20] sm:$0xff]
        %v1842 = vld [vmem:[%s15 + $0x28] sm:$0xff]
        %v1843 = vld [vmem:[%s15 + $0x30] sm:$0xff]
        %v1844 = vld [vmem:[%s15 + $0x38] sm:$0xff]
        %v1845 = vld [vmem:[%s15 + $0x40] sm:$0xff]
        %v1846 = vld [vmem:[%s15 + $0x48] sm:$0xff]
        %v1847 = vld [vmem:[%s15 + $0x50] sm:$0xff]
        %v1848 = vld [vmem:[%s15 + $0x58] sm:$0xff]
        %v1849 = vld [vmem:[%s15 + $0x60] sm:$0xff]
        %v1850 = vld [vmem:[%s15 + $0x68] sm:$0xff]
        %v1851 = vld [vmem:[%s15 + $0x70] sm:$0xff]
        %v1852 = vld [vmem:[%s15 + $0x78] sm:$0xff]
        %v1853 = vld [vmem:[%s16] sm:$0x1]
        %v1855 = vlaneseq
        %v1856 = vshrl.u32 %v1855, 7
        %v1857 = vsub.s32 0, %v1856
        %v1858 = vrot.slane %v1853, %v1857
        %1860 = vmatprep.subr.mxu0 0.0
        %1861 = vmatpush1.msra.mxu0 %v1837
        %1862 = vmatprep.subr.mxu0 0.0
        %1863 = vmatpush1.msra.mxu0 %v1838
        %1864 = vmatprep.subr.mxu0 0.0
        %1865 = vmatpush1.msra.mxu0 %v1839
        %1866 = vmatprep.subr.mxu0 0.0
        %1867 = vmatpush1.msra.mxu0 %v1840
        %1868 = vmatprep.subr.mxu0 0.0
        %1869 = vmatpush1.msra.mxu0 %v1841
        %1870 = vmatprep.subr.mxu0 0.0
        %1871 = vmatpush1.msra.mxu0 %v1842
        %1872 = vmatprep.subr.mxu0 0.0
        %1873 = vmatpush1.msra.mxu0 %v1843
        %1874 = vmatprep.subr.mxu0 0.0
        %1875 = vmatpush1.msra.mxu0 %v1844
        %1876 = vmatprep.subr.mxu0 0.0
        %1877 = vmatpush1.msra.mxu0 %v1845
        %1878 = vmatprep.subr.mxu0 0.0
        %1879 = vmatpush1.msra.mxu0 %v1846
        %1880 = vmatprep.subr.mxu0 0.0
        %1881 = vmatpush1.msra.mxu0 %v1847
        %1882 = vmatprep.subr.mxu0 0.0
        %1883 = vmatpush1.msra.mxu0 %v1848
        %1884 = vmatprep.subr.mxu0 0.0
        %1885 = vmatpush1.msra.mxu0 %v1849
        %1886 = vmatprep.subr.mxu0 0.0
        %1887 = vmatpush1.msra.mxu0 %v1850
        %1888 = vmatprep.subr.mxu0 0.0
        %1889 = vmatpush1.msra.mxu0 %v1851
        %1890 = vmatprep.subr.mxu0 0.0
        %1891 = vmatpush1.msra.mxu0 %v1852
        %1892 = vmatprep.subr.mxu0 0.0
        %1893 = vmatpush1.msra.mxu0 0.0
        %1894 = vmatprep.subr.mxu0 0.0
        %1895 = vmatpush1.msra.mxu0 0.0
        %1896 = vmatprep.subr.mxu0 0.0
        %1897 = vmatpush1.msra.mxu0 0.0
        %1898 = vmatprep.subr.mxu0 0.0
        %1899 = vmatpush1.msra.mxu0 0.0
        %1900 = vmatprep.subr.mxu0 0.0
        %1901 = vmatpush1.msra.mxu0 0.0
        %1902 = vmatprep.subr.mxu0 0.0
        %1903 = vmatpush1.msra.mxu0 0.0
        %1904 = vmatprep.subr.mxu0 0.0
        %1905 = vmatpush1.msra.mxu0 0.0
        %1906 = vmatprep.subr.mxu0 0.0
        %1907 = vmatpush1.msra.mxu0 0.0
        %1908 = vmatprep.subr.mxu0 0.0
        %1909 = vmatpush1.msra.mxu0 0.0
        %1910 = vmatprep.subr.mxu0 0.0
        %1911 = vmatpush1.msra.mxu0 0.0
        %1912 = vmatprep.subr.mxu0 0.0
        %1913 = vmatpush1.msra.mxu0 0.0
        %1914 = vmatprep.subr.mxu0 0.0
        %1915 = vmatpush1.msra.mxu0 0.0
        %1916 = vmatprep.subr.mxu0 0.0
        %1917 = vmatpush1.msra.mxu0 0.0
        %1918 = vmatprep.subr.mxu0 0.0
        %1919 = vmatpush1.msra.mxu0 0.0
        %1920 = vmatprep.subr.mxu0 0.0
        %1921 = vmatpush1.msra.mxu0 0.0
        %1922 = vmatprep.subr.mxu0 0.0
        %1923 = vmatpush1.msra.mxu0 0.0
        %1924 = vmatprep.mubr.f32.mxu0 0.0
        %1925 = vmatmul.mubr.f32.gmra.mrb[0].mxu0 %v1836
        %v1926 = vpop.f32.mrb[0].mxu0
        %v1927 = vadd.f32 %v1858, %v1926
        %v1928 = vpop.f32.mrb[0].mxu0
        %1929 = vdwg.mxu0
        %v1930 = vadd.f32 %v1717, %v1927
        %1931 = vst.msk [vmem:[%s570] sm:$0xff] %vm1641, %v1930
        %s1932 = sand.u32 %s416, 1
        %s1933 = scalar_lea.sflag [#allocation8], %s1932
        %s1934 = sand.u32 %s416, 1
        %s1935 = smul.addr %s1934, 8
        %s1936 = scalar_lea.vmem [#allocation9], %s1935
        // Predicated region
        $region97: #{tpu_custom_call.1} parent=87 // pred_check
          %p1937 = pneg %p426
        $region98: #{tpu_custom_call.1} parent=87 // pred_check_branch
          %1939 = sbr.rel (%p1937) target = $region100
        $region99: #{tpu_custom_call.1} parent=87 // pred_region
          %s1941 = ssub.s32 128, 128
          %1942 = vsyncadd %s1933, %s1941
          %s1943 = smul.addr %s36, 2
          %s1944 = sadd.s32 %s37, %s1943
          %s1945 = smul.addr %s1944, 128
          %s1946 = scalar_lea.hbm %s17, %s1945
          %s1948 = sshll.u32 %s1936, 4
          %s1949 = int_to_ptr.vmem [resolvable:$true] %s1948
          %1951 = dma.vmem_to_hbm [thread:$0]  %s1949, 128, %s1946, %s1933
        $region100: #{tpu_custom_call.1} parent=87 // pred_fallthru
          _
      $region88: #{tpu_custom_call.1} parent=5 // pred_fallthru
        _
      %p1952 = scmp.le.s32.totalorder 2, %s27
      // Predicated region
      $region101: #{tpu_custom_call.1} parent=5 // pred_check
        %p1953 = pneg %p1952
      $region102: #{tpu_custom_call.1} parent=5 // pred_check_branch
        %1955 = sbr.rel (%p1953) target = $region104
      $region103: #{tpu_custom_call.1} parent=5 // pred_region
        %s1956 = ssub.s32 %s27, 2
        // Predicated region
        $region105: #{tpu_custom_call.1} parent=103 // pred_check
          %p1957 = pneg %p432
        $region106: #{tpu_custom_call.1} parent=103 // pred_check_branch
          %1959 = sbr.rel (%p1957) target = $region108
        $region107: #{tpu_custom_call.1} parent=103 // pred_region
          %s1960 = sand.u32 %s417, 1
          %s1961 = scalar_lea.sflag [#allocation8], %s1960
          %s1962 = sand.u32 %s417, 1
          %s1963 = smul.addr %s1962, 8
          %s1964 = scalar_lea.vmem [#allocation9], %s1963
          %1965 = dma.done %s1961, 128
        $region108: #{tpu_custom_call.1} parent=103 // pred_fallthru
          _
      $region104: #{tpu_custom_call.1} parent=5 // pred_fallthru
        _
    $region6: #{tpu_custom_call.1} parent=1 // loop_footer
      %s31 = sadd.s32 1, %s27
    $region7: #{tpu_custom_call.1} parent=1 // loop_footer_branch
      %26 = sbr.rel target = $region3
    $region8: #{tpu_custom_call.1} parent=1 // loop_exit
      _
    %1966 = vsyncpa [#allocation7], 1
    %s1967 = scalar_lea.sflag [#allocation7], 1
    %1968 = vsyncpa %s1967, 1
    %1969 = vsyncpa [#allocation8], 1
    %s1970 = scalar_lea.sflag [#allocation8], 1
    %1971 = vsyncpa %s1970, 1

</llo_original>
